<compile_context>
chip_gen: v7x
topology: tpu7x:2x2x1
jax: 0.10.0
libtpu: 0.0.40
codegen_flags: <defaults>
</compile_context>

<pallas_src>
import functools

import jax
import jax.numpy as jnp
from jax.experimental import pallas as pl
from jax.experimental.pallas import tpu as pltpu

# ---------------- model constants (from the PyTorch module) ----------------
K = 8192          # queue length
M_MOM = 0.999     # momentum coefficient
TEMP = 0.05       # temperature
HIDDEN = 768      # queue feature dim
Q_SCALE = 127.0   # int8 queue quantization scale (columns are L2-normalized, |x| <= 1)

# stacked-queue index -> which queue it is (matches CE usage order below)
QUEUE_ORDER = ("nl", "code", "ast", "dfg")


# ---------------- Pallas kernel 1: fused masked mean pool + L2 normalize ----------------
# All 6 encoder views stacked on a leading axis; one grid-less pallas_call, one step.

def _pool_norm_kernel(h_ref, m_ref, v_ref):
    # h_ref: (V, B, S, H) encoder hidden states, m_ref: (V, B, S) float mask
    h = h_ref[...].astype(jnp.float32)
    m = m_ref[...].astype(jnp.float32)
    num = jnp.sum(h * m[..., None], axis=2)                         # (V, B, H)
    den = jnp.maximum(jnp.sum(m, axis=2)[..., None], 1.0)           # guard all-pad rows
    v = num / den
    # rsqrt (EUP) instead of sqrt+divide; clamp reproduces torch F.normalize eps=1e-12
    inv = jax.lax.rsqrt(jnp.maximum(jnp.sum(v * v, axis=-1, keepdims=True), 1e-24))
    v_ref[...] = v * inv


def masked_pool_normalize_batched(hidden_all, mask_all):
    V, B, S, H = hidden_all.shape
    # ~2.3 MiB of f32 input: a single whole-array VMEM block, no grid / no per-step
    # pipeline overhead.
    return pl.pallas_call(
        _pool_norm_kernel,
        out_shape=jax.ShapeDtypeStruct((V, B, H), jnp.float32),
    )(hidden_all, mask_all)


# ---------------- Pallas kernel 2: fused contrastive CE (label = 0) ----------------
# For each queue q: logits = [ (a . pos)/T , (a @ dequant(queue_q))/T ],
# per-example CE against class 0 with an online logsumexp over K tiles.
# Grid = (num_queues [core-parallel on v7x], K//tk [arbitrary reduction]).

def _contrastive_ce_kernel(a_ref, p_ref, q_ref, loss_ref,
                           a_sc, m_sc, l_sc, pos_sc, *, inv_temp, q_scale):
    k = pl.program_id(1)

    @pl.when(k == 0)
    def _():
        a = a_ref[...].astype(jnp.float32)                 # (2B, H): rows 0:B code, B:2B nl
        p = p_ref[0].astype(jnp.float32)                   # (B, H) positives for this queue
        p2 = jnp.concatenate([p, p], axis=0)               # broadcast to both query halves
        pos = jnp.sum(a * p2, axis=-1, keepdims=True) * inv_temp     # (2B, 1), f32
        pos_sc[...] = pos
        m_sc[...] = pos                                    # running max starts at pos logit
        l_sc[...] = jnp.ones_like(l_sc)                    # exp(pos - pos) = 1
        # hoist 1/T and the int8 dequant scale into the query once; bf16 for the MXU
        a_sc[...] = (a * (inv_temp / q_scale)).astype(a_sc.dtype)

    qt = q_ref[0].astype(jnp.bfloat16)                     # int8 -> bf16 (exact), (H, tk)
    s = jnp.dot(a_sc[...], qt, preferred_element_type=jnp.float32)   # (2B, tk)
    m_new = jnp.maximum(m_sc[...], jnp.max(s, axis=-1, keepdims=True))
    l_sc[...] = (l_sc[...] * jnp.exp(m_sc[...] - m_new)
                 + jnp.sum(jnp.exp(s - m_new), axis=-1, keepdims=True))
    m_sc[...] = m_new

    @pl.when(k == pl.num_programs(1) - 1)
    def _():
        # CE(label=0) = logsumexp(logits) - logits[0]
        loss_ref[0] = jnp.log(l_sc[...]) + m_sc[...] - pos_sc[...]


@functools.lru_cache(maxsize=None)
def _queue_axis_semantics():
    # v7x has 2 TensorCores per chip: shard the 4 queues across them (2 per core).
    try:
        kind = jax.devices()[0].device_kind.lower()
    except Exception:
        kind = ""
    if ("v7" in kind) or ("tpu7" in kind) or kind.startswith("7"):
        return pltpu.CORE_PARALLEL
    return pltpu.PARALLEL


def contrastive_ce_per_example(a2, p_all, queues_i8, *, temp=TEMP, tk=4096):
    """a2: (2B, H) f32 query rows (code then nl); p_all: (Q, B, H) f32 positives per
    queue (broadcast to both halves in-kernel); queues_i8: (Q, H, K) int8 (scale
    Q_SCALE). Returns per-example CE (Q, 2B, 1) f32."""
    N, H = a2.shape
    Qp, B, Hp = p_all.shape
    Qq, Hq, Kq = queues_i8.shape
    assert Hp == H and Hq == H and Qp == Qq and N == 2 * B and Kq % tk == 0
    return pl.pallas_call(
        functools.partial(_contrastive_ce_kernel, inv_temp=1.0 / temp, q_scale=Q_SCALE),
        out_shape=jax.ShapeDtypeStruct((Qq, N, 1), jnp.float32),
        grid_spec=pltpu.PrefetchScalarGridSpec(
            num_scalar_prefetch=0,
            grid=(Qq, Kq // tk),
            in_specs=[
                pl.BlockSpec((N, H), lambda q, k: (0, 0)),
                pl.BlockSpec((1, B, H), lambda q, k: (q, 0, 0)),
                pl.BlockSpec((1, H, tk), lambda q, k: (q, 0, k)),
            ],
            out_specs=pl.BlockSpec((1, N, 1), lambda q, k: (q, 0, 0)),
            scratch_shapes=[
                pltpu.VMEM((N, H), jnp.bfloat16),   # a * (1/T) * (1/Q_SCALE), bf16 for MXU
                pltpu.VMEM((N, 1), jnp.float32),    # running max m
                pltpu.VMEM((N, 1), jnp.float32),    # running sum l
                pltpu.VMEM((N, 1), jnp.float32),    # positive logit stash
            ],
        ),
        compiler_params=pltpu.CompilerParams(
            dimension_semantics=(_queue_axis_semantics(), pltpu.ARBITRARY),
            vmem_limit_bytes=40 * 1024 * 1024,      # int8 tile x2 + bf16 upcast + f32 scores
        ),
    )(a2, p_all, queues_i8)


# ---------------- in-place queue enqueue (donated buffer, no full-queue copy) ------------

def quantize_int8(x):
    return jnp.clip(jnp.round(x * Q_SCALE), -127.0, 127.0).astype(jnp.int8)


@functools.partial(jax.jit, donate_argnums=(0,))
def _enqueue_all(queues, ptrs, new_cols):
    """queues: (4, H, K) int8 (donated -> dynamic_update_slice happens in place);
    new_cols: (4, H, B) int8 quantized momentum keys; ptrs: (4,) int32."""
    Bv = new_cols.shape[-1]
    for qi in range(new_cols.shape[0]):
        start = (jnp.int32(qi), jnp.int32(0), ptrs[qi].astype(jnp.int32))
        queues = jax.lax.dynamic_update_slice(queues, new_cols[qi][None], start)
    return queues, (ptrs + Bv) % K


# ---------------- stand-in encoder + glue (plain JAX) ----------------
# TODO(synk): the real `encoder` is an external transformer passed into __init__;
# here it is a deterministic embedding lookup so the Model's own math can be exercised.

def encode(emb_table, ids):
    return emb_table[ids]                                   # (B, S, H)


def l2_normalize_axis(x, axis):
    return x / jnp.maximum(jnp.sqrt(jnp.sum(x * x, axis=axis, keepdims=True)), 1e-12)


def model_forward(state, code_ids, nl_ids, ast_ids, dfg_ids):
    emb, emb_m = state["emb"], state["emb_m"]
    B, S = code_ids.shape
    # dynamic_update_slice clamps instead of wrapping; this keeps the enqueue exact.
    assert K % B == 0, "queue length must be a multiple of the batch size"

    # momentum update of key encoder params (before any key-encoder forward)
    emb_m = emb_m * M_MOM + emb * (1.0 - M_MOM)

    # 6 encoder views, pooled + normalized in ONE pallas_call
    views = [
        (emb,   code_ids),   # 0: code_vec     (query encoder)
        (emb,   nl_ids),     # 1: nl_vec       (query encoder)
        (emb_m, code_ids),   # 2: code_vec_m   (key encoder, no grad in torch)
        (emb_m, nl_ids),     # 3: nl_vec_m
        (emb_m, ast_ids),    # 4: ast_vec_m
        (emb_m, dfg_ids),    # 5: dfg_vec_m
    ]
    hidden_all = jnp.stack([encode(t, i) for t, i in views])                 # (6,B,S,H)
    mask_all = jnp.stack([(i != 1).astype(jnp.float32) for _, i in views])   # (6,B,S)
    vecs = masked_pool_normalize_batched(hidden_all, mask_all)               # (6,B,H)
    code_vec, nl_vec = vecs[0], vecs[1]
    code_vec_m, nl_vec_m, ast_vec_m, dfg_vec_m = vecs[2], vecs[3], vecs[4], vecs[5]

    # fused CE: one call, each queue streamed once. Rows 0:B are code_vec queries,
    # rows B:2B are nl_vec queries; positives are passed once per queue and
    # broadcast to both halves in-kernel (unused combos are simply never reduced).
    a2 = jnp.concatenate([code_vec, nl_vec], axis=0)                         # (2B, H)
    p_all = jnp.stack([nl_vec_m, code_vec_m, ast_vec_m, dfg_vec_m])          # (4, B, H)
    per_ex = contrastive_ce_per_example(a2, p_all, state["queues"])[..., 0]  # (4, 2B)

    loss_code     = jnp.mean(per_ex[0, :B])   # code_vec vs nl_vec_m   / queue_nl
    loss_nl       = jnp.mean(per_ex[1, B:])   # nl_vec   vs code_vec_m / queue_code
    loss_code_ast = jnp.mean(per_ex[2, :B])
    loss_nl_ast   = jnp.mean(per_ex[2, B:])
    loss_code_dfg = jnp.mean(per_ex[3, :B])
    loss_nl_dfg   = jnp.mean(per_ex[3, B:])
    loss = (loss_code + loss_nl
            + (loss_code_ast + loss_nl_ast) * 0.01
            + (loss_nl_dfg + loss_code_dfg) * 0.01)

    # dequeue/enqueue: quantize + transpose the 4 momentum keys, then update the
    # donated queue buffer in place (only the B new columns per queue are written).
    new_cols = quantize_int8(
        jnp.stack([nl_vec_m, code_vec_m, ast_vec_m, dfg_vec_m])).transpose(0, 2, 1)
    queues, ptrs = _enqueue_all(state["queues"], state["ptrs"], new_cols)

    new_state = dict(state, emb_m=emb_m, queues=queues, ptrs=ptrs)
    return (loss, code_vec, nl_vec), new_state


# ---------------- pure-JAX reference for a sanity check ----------------
def _reference_loss(code_vec, nl_vec, code_vec_m, nl_vec_m, ast_vec_m, dfg_vec_m, qf):
    def ce(a, p, q):
        pos = jnp.sum(a * p, axis=-1, keepdims=True)
        neg = a @ q
        logits = jnp.concatenate([pos, neg], axis=1) / TEMP
        lse = jax.scipy.special.logsumexp(logits, axis=1)
        return jnp.mean(lse - logits[:, 0])

    l_code = ce(code_vec, nl_vec_m, qf[0])
    l_nl = ce(nl_vec, code_vec_m, qf[1])
    l_ca = ce(code_vec, ast_vec_m, qf[2])
    l_na = ce(nl_vec, ast_vec_m, qf[2])
    l_cd = ce(code_vec, dfg_vec_m, qf[3])
    l_nd = ce(nl_vec, dfg_vec_m, qf[3])
    return l_code + l_nl + (l_ca + l_na) * 0.01 + (l_nd + l_cd) * 0.01


# ---------------- main ----------------
if __name__ == "__main__":
    B, S, VOCAB = 8, 16, 64
    key = jax.random.PRNGKey(0)
    k_emb, k_q, k_c, k_n, k_a, k_d = jax.random.split(key, 6)

    emb = jax.random.normal(k_emb, (VOCAB, HIDDEN), jnp.float32) * 0.02
    # queues stacked as (4, H, K) in QUEUE_ORDER, L2-normalized along H, stored int8
    queues = quantize_int8(l2_normalize_axis(
        jax.random.normal(k_q, (4, HIDDEN, K), jnp.float32), axis=1))

    state = {
        "emb": emb,
        "emb_m": emb,                               # copied from query encoder at init
        "queues": queues,
        "ptrs": jnp.zeros((4,), jnp.int32),
    }

    def make_ids(k):
        ids = jax.random.randint(k, (B, S), 2, VOCAB, dtype=jnp.int32)
        # pad (token id 1) the last few positions so the mask is non-trivial
        pad_cols = jnp.arange(S) >= (S - 3)
        return jnp.where(pad_cols[None, :], jnp.int32(1), ids)

    code_ids, nl_ids = make_ids(k_c), make_ids(k_n)
    ast_ids, dfg_ids = make_ids(k_a), make_ids(k_d)

    # Snapshot the dequantized queue for the reference BEFORE the forward:
    # state["queues"] is donated (in-place enqueue) inside model_forward.
    queues_ref_f32 = state["queues"].astype(jnp.float32) / Q_SCALE
    jax.block_until_ready(queues_ref_f32)

    (loss, code_vec, nl_vec), new_state = model_forward(
        state, code_ids, nl_ids, ast_ids, dfg_ids)
    jax.block_until_ready((loss, code_vec, nl_vec,
                           new_state["queues"], new_state["ptrs"]))

    assert code_vec.shape == (B, HIDDEN) and nl_vec.shape == (B, HIDDEN)
    assert bool(jnp.isfinite(loss))

    # sanity check vs. plain-JAX reference (generous tol: kernel uses bf16/int8 path)
    emb_m_new = new_state["emb_m"]

    def pool_ref(ids):
        msk = (ids != 1)
        v = (jnp.sum(emb_m_new[ids] * msk[:, :, None], 1)
             / jnp.maximum(msk.sum(-1, keepdims=True), 1))
        return l2_normalize_axis(v, axis=1)

    cv_m, nv_m = pool_ref(code_ids), pool_ref(nl_ids)
    av_m, dv_m = pool_ref(ast_ids), pool_ref(dfg_ids)
    loss_ref = _reference_loss(code_vec, nl_vec, cv_m, nv_m, av_m, dv_m, queues_ref_f32)
    assert abs(float(loss) - float(loss_ref)) < 0.25, (float(loss), float(loss_ref))

    # enqueue happened (in place): pointers advanced, and the first B columns of
    # queue_nl now hold the quantized nl_vec_m keys.
    assert all(int(p) == B for p in jax.device_get(new_state["ptrs"]))
    enq = new_state["queues"][0, :, :B].astype(jnp.float32).T / Q_SCALE       # (B, H)
    assert float(jnp.max(jnp.abs(enq - nv_m))) < 0.05

    print("KERNEL_OK")
</pallas_src>

<mosaic_0001>
module attributes {stable_mosaic.version = 11 : i64} {
  func.func @_pool_norm_kernel(%arg0: memref<6x8x16x768xf32, #tpu.memory_space<vmem>>, %arg1: memref<6x8x16xf32, #tpu.memory_space<vmem>>, %arg2: memref<6x8x768xf32, #tpu.memory_space<vmem>>) attributes {dimension_semantics = [], scalar_prefetch = 0 : i64, scratch_operands = 0 : i64, tpu.core_type = #tpu.core_type<tc>} {
    %c0 = arith.constant 0 : index
    %c0_0 = arith.constant 0 : index
    %c0_1 = arith.constant 0 : index
    %c0_2 = arith.constant 0 : index
    %0 = vector.load %arg0[%c0, %c0_0, %c0_1, %c0_2] : memref<6x8x16x768xf32, #tpu.memory_space<vmem>>, vector<6x8x16x768xf32>
    %c0_3 = arith.constant 0 : index
    %c0_4 = arith.constant 0 : index
    %c0_5 = arith.constant 0 : index
    %1 = vector.load %arg1[%c0_3, %c0_4, %c0_5] : memref<6x8x16xf32, #tpu.memory_space<vmem>>, vector<6x8x16xf32>
    %2 = vector.shape_cast %1 : vector<6x8x16xf32> to vector<6x8x16x1xf32>
    %3 = vector.broadcast %2 : vector<6x8x16x1xf32> to vector<6x8x16x768xf32>
    %4 = arith.mulf %0, %3 : vector<6x8x16x768xf32>
    %cst = arith.constant dense<0.000000e+00> : vector<6x8x768xf32>
    %5 = vector.multi_reduction <add>, %4, %cst [2] : vector<6x8x16x768xf32> to vector<6x8x768xf32>
    %cst_6 = arith.constant dense<0.000000e+00> : vector<6x8xf32>
    %6 = vector.multi_reduction <add>, %1, %cst_6 [2] : vector<6x8x16xf32> to vector<6x8xf32>
    %7 = vector.shape_cast %6 : vector<6x8xf32> to vector<6x8x1xf32>
    %cst_7 = arith.constant 1.000000e+00 : f32
    %8 = vector.broadcast %cst_7 : f32 to vector<6x8x1xf32>
    %9 = arith.maximumf %7, %8 : vector<6x8x1xf32>
    %10 = vector.broadcast %9 : vector<6x8x1xf32> to vector<6x8x768xf32>
    %11 = arith.divf %5, %10 : vector<6x8x768xf32>
    %12 = arith.mulf %11, %11 : vector<6x8x768xf32>
    %cst_8 = arith.constant dense<0.000000e+00> : vector<6x8xf32>
    %13 = vector.multi_reduction <add>, %12, %cst_8 [2] : vector<6x8x768xf32> to vector<6x8xf32>
    %14 = vector.shape_cast %13 : vector<6x8xf32> to vector<6x8x1xf32>
    %cst_9 = arith.constant 1.000000e-24 : f32
    %15 = vector.broadcast %cst_9 : f32 to vector<6x8x1xf32>
    %16 = arith.maximumf %14, %15 : vector<6x8x1xf32>
    %17 = math.rsqrt %16 : vector<6x8x1xf32>
    %18 = vector.broadcast %17 : vector<6x8x1xf32> to vector<6x8x768xf32>
    %19 = arith.mulf %11, %18 : vector<6x8x768xf32>
    %c0_10 = arith.constant 0 : index
    %c0_11 = arith.constant 0 : index
    %c0_12 = arith.constant 0 : index
    %20 = vector.load %arg2[%c0_10, %c0_11, %c0_12] : memref<6x8x768xf32, #tpu.memory_space<vmem>>, vector<6x8x768xf32>
    tpu.vector_store %arg2[%c0_10, %c0_11, %c0_12], %19 {strides = array<i32>} : memref<6x8x768xf32, #tpu.memory_space<vmem>>, vector<6x8x768xf32>,
    return
  }
}

</mosaic_0001>

<llo_original>
// kernel: tpu_custom_call.1
$region0: #{tpu_custom_call.1}
  #allocation0 [shape = 'u32[]', space=smem, size = 0x4, offset = 0x4, fixed_abs, tag = 'smem constant byte address 0x4 - core index']
  #allocation1 [shape = 'u32[144,128]{1,0:T(1,128)}', space=vmem, size = 0x12000, scoped, tag = 'internal scratch']
  %s0 = inlined_call_operand.hbm [shape: f32[6,8,16,768], index: 0, kind: input, shape index: {}]
  %s1 = inlined_call_operand.hbm [shape: f32[6,8,16], index: 1, kind: input, shape index: {}]
  %s2 = inlined_call_operand.hbm [shape: f32[6,8,768], index: 2, kind: output, shape index: {}]
  %s3 = sld [smem:[#allocation0]]
  $region26: #{tpu_custom_call.1} parent=0
    _
  %s5 = ssub.s32 1, %s3
  %s6 = scalar_select 0, %s5, %s3
  $region1: #{tpu_custom_call.1} parent=0
    #allocation2 [shape = 'u8[2359296]{0}', space=vmem, size = 0x240000, scoped, tag = 'input window, operand 0, single buffered']
    #allocation3 [shape = 's32[1]{0}', space=sflag, size = 0x4, scoped, tag = 'scoped memory for tpu_custom_call.1']
    #allocation4 [shape = 's32[1]{0}', space=sflag, size = 0x4, scoped, tag = 'scoped memory for tpu_custom_call.1']
    #allocation5 [shape = 'u8[24576]{0}', space=vmem, size = 0x6000, scoped, tag = 'input window, operand 1, single buffered']
    #allocation6 [shape = 's32[1]{0}', space=sflag, size = 0x4, scoped, tag = 'scoped memory for tpu_custom_call.1']
    #allocation7 [shape = 'u8[147456]{0}', space=vmem, size = 0x24000, scoped, tag = 'output window, operand 0, single buffered']
    %7 = vsyncpa [#allocation3], 0
    %8 = vsyncpa [#allocation6], 0
    %9 = vsyncpa [#allocation4], 0
    // Predicated region
    $region2: #{tpu_custom_call.1} parent=1 // pred_check
      _
    $region3: #{tpu_custom_call.1} parent=1 // pred_check_branch
      %11 = sbr.rel (0) target = $region5
    $region4: #{tpu_custom_call.1} parent=1 // pred_region
      %s13 = ssub.s32 73728, 73728
      %14 = vsyncadd [#allocation3], %s13
      %s15 = sshll.u32 [#allocation2], 4
      %s16 = int_to_ptr.vmem [resolvable:$true] %s15
      %21 = dma.hbm_to_vmem [thread:$0]  %s0, 73728, %s16, [#allocation3], 768, 768, 48
    $region5: #{tpu_custom_call.1} parent=1 // pred_fallthru
      _
    // Predicated region
    $region6: #{tpu_custom_call.1} parent=1 // pred_check
      _
    $region7: #{tpu_custom_call.1} parent=1 // pred_check_branch
      %23 = sbr.rel (0) target = $region9
    $region8: #{tpu_custom_call.1} parent=1 // pred_region
      %s25 = ssub.s32 768, 768
      %26 = vsyncadd [#allocation6], %s25
      %s27 = sshll.u32 [#allocation5], 4
      %s28 = int_to_ptr.vmem [resolvable:$true] %s27
      %33 = dma.hbm_to_vmem [thread:$0]  %s1, 768, %s28, [#allocation6], 128, 128, 8
    $region9: #{tpu_custom_call.1} parent=1 // pred_fallthru
      _
    // Predicated region
    $region10: #{tpu_custom_call.1} parent=1 // pred_check
      _
    $region11: #{tpu_custom_call.1} parent=1 // pred_check_branch
      %35 = sbr.rel (0) target = $region13
    $region12: #{tpu_custom_call.1} parent=1 // pred_region
      %36 = dma.done [#allocation3], 73728
    $region13: #{tpu_custom_call.1} parent=1 // pred_fallthru
      _
    // Predicated region
    $region14: #{tpu_custom_call.1} parent=1 // pred_check
      _
    $region15: #{tpu_custom_call.1} parent=1 // pred_check_branch
      %38 = sbr.rel (0) target = $region17
    $region16: #{tpu_custom_call.1} parent=1 // pred_region
      %39 = dma.done [#allocation6], 768
    $region17: #{tpu_custom_call.1} parent=1 // pred_fallthru
      _
    %v40 = vld [vmem:[#allocation2] sm:$0xff]
    %v41 = vld [vmem:[#allocation2 + $0x8] sm:$0xff]
    %v42 = vld [vmem:[#allocation2 + $0x10] sm:$0xff]
    %v43 = vld [vmem:[#allocation2 + $0x18] sm:$0xff]
    %v44 = vld [vmem:[#allocation2 + $0x20] sm:$0xff]
    %v45 = vld [vmem:[#allocation2 + $0x28] sm:$0xff]
    %v46 = vld [vmem:[#allocation2 + $0x30] sm:$0xff]
    %v47 = vld [vmem:[#allocation2 + $0x38] sm:$0xff]
    %v48 = vld [vmem:[#allocation2 + $0x40] sm:$0xff]
    %v49 = vld [vmem:[#allocation2 + $0x48] sm:$0xff]
    %v50 = vld [vmem:[#allocation2 + $0x50] sm:$0xff]
    %v51 = vld [vmem:[#allocation2 + $0x58] sm:$0xff]
    %v52 = vld [vmem:[#allocation2 + $0x60] sm:$0xff]
    %v53 = vld [vmem:[#allocation2 + $0x68] sm:$0xff]
    %v54 = vld [vmem:[#allocation2 + $0x70] sm:$0xff]
    %v55 = vld [vmem:[#allocation2 + $0x78] sm:$0xff]
    %v56 = vld [vmem:[#allocation2 + $0x80] sm:$0xff]
    %v57 = vld [vmem:[#allocation2 + $0x88] sm:$0xff]
    %v58 = vld [vmem:[#allocation2 + $0x90] sm:$0xff]
    %v59 = vld [vmem:[#allocation2 + $0x98] sm:$0xff]
    %v60 = vld [vmem:[#allocation2 + $0xa0] sm:$0xff]
    %v61 = vld [vmem:[#allocation2 + $0xa8] sm:$0xff]
    %v62 = vld [vmem:[#allocation2 + $0xb0] sm:$0xff]
    %v63 = vld [vmem:[#allocation2 + $0xb8] sm:$0xff]
    %v64 = vld [vmem:[#allocation2 + $0xc0] sm:$0xff]
    %v65 = vld [vmem:[#allocation2 + $0xc8] sm:$0xff]
    %v66 = vld [vmem:[#allocation2 + $0xd0] sm:$0xff]
    %v67 = vld [vmem:[#allocation2 + $0xd8] sm:$0xff]
    %v68 = vld [vmem:[#allocation2 + $0xe0] sm:$0xff]
    %v69 = vld [vmem:[#allocation2 + $0xe8] sm:$0xff]
    %v70 = vld [vmem:[#allocation2 + $0xf0] sm:$0xff]
    %v71 = vld [vmem:[#allocation2 + $0xf8] sm:$0xff]
    %v72 = vld [vmem:[#allocation2 + $0x100] sm:$0xff]
    %v73 = vld [vmem:[#allocation2 + $0x108] sm:$0xff]
    %v74 = vld [vmem:[#allocation2 + $0x110] sm:$0xff]
    %v75 = vld [vmem:[#allocation2 + $0x118] sm:$0xff]
    %v76 = vld [vmem:[#allocation2 + $0x120] sm:$0xff]
    %v77 = vld [vmem:[#allocation2 + $0x128] sm:$0xff]
    %v78 = vld [vmem:[#allocation2 + $0x130] sm:$0xff]
    %v79 = vld [vmem:[#allocation2 + $0x138] sm:$0xff]
    %v80 = vld [vmem:[#allocation2 + $0x140] sm:$0xff]
    %v81 = vld [vmem:[#allocation2 + $0x148] sm:$0xff]
    %v82 = vld [vmem:[#allocation2 + $0x150] sm:$0xff]
    %v83 = vld [vmem:[#allocation2 + $0x158] sm:$0xff]
    %v84 = vld [vmem:[#allocation2 + $0x160] sm:$0xff]
    %v85 = vld [vmem:[#allocation2 + $0x168] sm:$0xff]
    %v86 = vld [vmem:[#allocation2 + $0x170] sm:$0xff]
    %v87 = vld [vmem:[#allocation2 + $0x178] sm:$0xff]
    %v88 = vld [vmem:[#allocation2 + $0x180] sm:$0xff]
    %v89 = vld [vmem:[#allocation2 + $0x188] sm:$0xff]
    %v90 = vld [vmem:[#allocation2 + $0x190] sm:$0xff]
    %v91 = vld [vmem:[#allocation2 + $0x198] sm:$0xff]
    %v92 = vld [vmem:[#allocation2 + $0x1a0] sm:$0xff]
    %v93 = vld [vmem:[#allocation2 + $0x1a8] sm:$0xff]
    %v94 = vld [vmem:[#allocation2 + $0x1b0] sm:$0xff]
    %v95 = vld [vmem:[#allocation2 + $0x1b8] sm:$0xff]
    %v96 = vld [vmem:[#allocation2 + $0x1c0] sm:$0xff]
    %v97 = vld [vmem:[#allocation2 + $0x1c8] sm:$0xff]
    %v98 = vld [vmem:[#allocation2 + $0x1d0] sm:$0xff]
    %v99 = vld [vmem:[#allocation2 + $0x1d8] sm:$0xff]
    %v100 = vld [vmem:[#allocation2 + $0x1e0] sm:$0xff]
    %v101 = vld [vmem:[#allocation2 + $0x1e8] sm:$0xff]
    %v102 = vld [vmem:[#allocation2 + $0x1f0] sm:$0xff]
    %v103 = vld [vmem:[#allocation2 + $0x1f8] sm:$0xff]
    %v104 = vld [vmem:[#allocation2 + $0x200] sm:$0xff]
    %v105 = vld [vmem:[#allocation2 + $0x208] sm:$0xff]
    %v106 = vld [vmem:[#allocation2 + $0x210] sm:$0xff]
    %v107 = vld [vmem:[#allocation2 + $0x218] sm:$0xff]
    %v108 = vld [vmem:[#allocation2 + $0x220] sm:$0xff]
    %v109 = vld [vmem:[#allocation2 + $0x228] sm:$0xff]
    %v110 = vld [vmem:[#allocation2 + $0x230] sm:$0xff]
    %v111 = vld [vmem:[#allocation2 + $0x238] sm:$0xff]
    %v112 = vld [vmem:[#allocation2 + $0x240] sm:$0xff]
    %v113 = vld [vmem:[#allocation2 + $0x248] sm:$0xff]
    %v114 = vld [vmem:[#allocation2 + $0x250] sm:$0xff]
    %v115 = vld [vmem:[#allocation2 + $0x258] sm:$0xff]
    %v116 = vld [vmem:[#allocation2 + $0x260] sm:$0xff]
    %v117 = vld [vmem:[#allocation2 + $0x268] sm:$0xff]
    %v118 = vld [vmem:[#allocation2 + $0x270] sm:$0xff]
    %v119 = vld [vmem:[#allocation2 + $0x278] sm:$0xff]
    %v120 = vld [vmem:[#allocation2 + $0x280] sm:$0xff]
    %v121 = vld [vmem:[#allocation2 + $0x288] sm:$0xff]
    %v122 = vld [vmem:[#allocation2 + $0x290] sm:$0xff]
    %v123 = vld [vmem:[#allocation2 + $0x298] sm:$0xff]
    %v124 = vld [vmem:[#allocation2 + $0x2a0] sm:$0xff]
    %v125 = vld [vmem:[#allocation2 + $0x2a8] sm:$0xff]
    %v126 = vld [vmem:[#allocation2 + $0x2b0] sm:$0xff]
    %v127 = vld [vmem:[#allocation2 + $0x2b8] sm:$0xff]
    %v128 = vld [vmem:[#allocation2 + $0x2c0] sm:$0xff]
    %v129 = vld [vmem:[#allocation2 + $0x2c8] sm:$0xff]
    %v130 = vld [vmem:[#allocation2 + $0x2d0] sm:$0xff]
    %v131 = vld [vmem:[#allocation2 + $0x2d8] sm:$0xff]
    %v132 = vld [vmem:[#allocation2 + $0x2e0] sm:$0xff]
    %v133 = vld [vmem:[#allocation2 + $0x2e8] sm:$0xff]
    %v134 = vld [vmem:[#allocation2 + $0x2f0] sm:$0xff]
    %v135 = vld [vmem:[#allocation2 + $0x2f8] sm:$0xff]
    %v136 = vld [vmem:[#allocation2 + $0x300] sm:$0xff]
    %v137 = vld [vmem:[#allocation2 + $0x308] sm:$0xff]
    %v138 = vld [vmem:[#allocation2 + $0x310] sm:$0xff]
    %v139 = vld [vmem:[#allocation2 + $0x318] sm:$0xff]
    %v140 = vld [vmem:[#allocation2 + $0x320] sm:$0xff]
    %v141 = vld [vmem:[#allocation2 + $0x328] sm:$0xff]
    %v142 = vld [vmem:[#allocation2 + $0x330] sm:$0xff]
    %v143 = vld [vmem:[#allocation2 + $0x338] sm:$0xff]
    %v144 = vld [vmem:[#allocation2 + $0x340] sm:$0xff]
    %v145 = vld [vmem:[#allocation2 + $0x348] sm:$0xff]
    %v146 = vld [vmem:[#allocation2 + $0x350] sm:$0xff]
    %v147 = vld [vmem:[#allocation2 + $0x358] sm:$0xff]
    %v148 = vld [vmem:[#allocation2 + $0x360] sm:$0xff]
    %v149 = vld [vmem:[#allocation2 + $0x368] sm:$0xff]
    %v150 = vld [vmem:[#allocation2 + $0x370] sm:$0xff]
    %v151 = vld [vmem:[#allocation2 + $0x378] sm:$0xff]
    %v152 = vld [vmem:[#allocation2 + $0x380] sm:$0xff]
    %v153 = vld [vmem:[#allocation2 + $0x388] sm:$0xff]
    %v154 = vld [vmem:[#allocation2 + $0x390] sm:$0xff]
    %v155 = vld [vmem:[#allocation2 + $0x398] sm:$0xff]
    %v156 = vld [vmem:[#allocation2 + $0x3a0] sm:$0xff]
    %v157 = vld [vmem:[#allocation2 + $0x3a8] sm:$0xff]
    %v158 = vld [vmem:[#allocation2 + $0x3b0] sm:$0xff]
    %v159 = vld [vmem:[#allocation2 + $0x3b8] sm:$0xff]
    %v160 = vld [vmem:[#allocation2 + $0x3c0] sm:$0xff]
    %v161 = vld [vmem:[#allocation2 + $0x3c8] sm:$0xff]
    %v162 = vld [vmem:[#allocation2 + $0x3d0] sm:$0xff]
    %v163 = vld [vmem:[#allocation2 + $0x3d8] sm:$0xff]
    %v164 = vld [vmem:[#allocation2 + $0x3e0] sm:$0xff]
    %v165 = vld [vmem:[#allocation2 + $0x3e8] sm:$0xff]
    %v166 = vld [vmem:[#allocation2 + $0x3f0] sm:$0xff]
    %v167 = vld [vmem:[#allocation2 + $0x3f8] sm:$0xff]
    %v168 = vld [vmem:[#allocation2 + $0x400] sm:$0xff]
    %v169 = vld [vmem:[#allocation2 + $0x408] sm:$0xff]
    %v170 = vld [vmem:[#allocation2 + $0x410] sm:$0xff]
    %v171 = vld [vmem:[#allocation2 + $0x418] sm:$0xff]
    %v172 = vld [vmem:[#allocation2 + $0x420] sm:$0xff]
    %v173 = vld [vmem:[#allocation2 + $0x428] sm:$0xff]
    %v174 = vld [vmem:[#allocation2 + $0x430] sm:$0xff]
    %v175 = vld [vmem:[#allocation2 + $0x438] sm:$0xff]
    %v176 = vld [vmem:[#allocation2 + $0x440] sm:$0xff]
    %v177 = vld [vmem:[#allocation2 + $0x448] sm:$0xff]
    %v178 = vld [vmem:[#allocation2 + $0x450] sm:$0xff]
    %v179 = vld [vmem:[#allocation2 + $0x458] sm:$0xff]
    %v180 = vld [vmem:[#allocation2 + $0x460] sm:$0xff]
    %v181 = vld [vmem:[#allocation2 + $0x468] sm:$0xff]
    %v182 = vld [vmem:[#allocation2 + $0x470] sm:$0xff]
    %v183 = vld [vmem:[#allocation2 + $0x478] sm:$0xff]
    %v184 = vld [vmem:[#allocation2 + $0x480] sm:$0xff]
    %v185 = vld [vmem:[#allocation2 + $0x488] sm:$0xff]
    %v186 = vld [vmem:[#allocation2 + $0x490] sm:$0xff]
    %v187 = vld [vmem:[#allocation2 + $0x498] sm:$0xff]
    %v188 = vld [vmem:[#allocation2 + $0x4a0] sm:$0xff]
    %v189 = vld [vmem:[#allocation2 + $0x4a8] sm:$0xff]
    %v190 = vld [vmem:[#allocation2 + $0x4b0] sm:$0xff]
    %v191 = vld [vmem:[#allocation2 + $0x4b8] sm:$0xff]
    %v192 = vld [vmem:[#allocation2 + $0x4c0] sm:$0xff]
    %v193 = vld [vmem:[#allocation2 + $0x4c8] sm:$0xff]
    %v194 = vld [vmem:[#allocation2 + $0x4d0] sm:$0xff]
    %v195 = vld [vmem:[#allocation2 + $0x4d8] sm:$0xff]
    %v196 = vld [vmem:[#allocation2 + $0x4e0] sm:$0xff]
    %v197 = vld [vmem:[#allocation2 + $0x4e8] sm:$0xff]
    %v198 = vld [vmem:[#allocation2 + $0x4f0] sm:$0xff]
    %v199 = vld [vmem:[#allocation2 + $0x4f8] sm:$0xff]
    %v200 = vld [vmem:[#allocation2 + $0x500] sm:$0xff]
    %v201 = vld [vmem:[#allocation2 + $0x508] sm:$0xff]
    %v202 = vld [vmem:[#allocation2 + $0x510] sm:$0xff]
    %v203 = vld [vmem:[#allocation2 + $0x518] sm:$0xff]
    %v204 = vld [vmem:[#allocation2 + $0x520] sm:$0xff]
    %v205 = vld [vmem:[#allocation2 + $0x528] sm:$0xff]
    %v206 = vld [vmem:[#allocation2 + $0x530] sm:$0xff]
    %v207 = vld [vmem:[#allocation2 + $0x538] sm:$0xff]
    %v208 = vld [vmem:[#allocation2 + $0x540] sm:$0xff]
    %v209 = vld [vmem:[#allocation2 + $0x548] sm:$0xff]
    %v210 = vld [vmem:[#allocation2 + $0x550] sm:$0xff]
    %v211 = vld [vmem:[#allocation2 + $0x558] sm:$0xff]
    %v212 = vld [vmem:[#allocation2 + $0x560] sm:$0xff]
    %v213 = vld [vmem:[#allocation2 + $0x568] sm:$0xff]
    %v214 = vld [vmem:[#allocation2 + $0x570] sm:$0xff]
    %v215 = vld [vmem:[#allocation2 + $0x578] sm:$0xff]
    %v216 = vld [vmem:[#allocation2 + $0x580] sm:$0xff]
    %v217 = vld [vmem:[#allocation2 + $0x588] sm:$0xff]
    %v218 = vld [vmem:[#allocation2 + $0x590] sm:$0xff]
    %v219 = vld [vmem:[#allocation2 + $0x598] sm:$0xff]
    %v220 = vld [vmem:[#allocation2 + $0x5a0] sm:$0xff]
    %v221 = vld [vmem:[#allocation2 + $0x5a8] sm:$0xff]
    %v222 = vld [vmem:[#allocation2 + $0x5b0] sm:$0xff]
    %v223 = vld [vmem:[#allocation2 + $0x5b8] sm:$0xff]
    %v224 = vld [vmem:[#allocation2 + $0x5c0] sm:$0xff]
    %v225 = vld [vmem:[#allocation2 + $0x5c8] sm:$0xff]
    %v226 = vld [vmem:[#allocation2 + $0x5d0] sm:$0xff]
    %v227 = vld [vmem:[#allocation2 + $0x5d8] sm:$0xff]
    %v228 = vld [vmem:[#allocation2 + $0x5e0] sm:$0xff]
    %v229 = vld [vmem:[#allocation2 + $0x5e8] sm:$0xff]
    %v230 = vld [vmem:[#allocation2 + $0x5f0] sm:$0xff]
    %v231 = vld [vmem:[#allocation2 + $0x5f8] sm:$0xff]
    %v232 = vld [vmem:[#allocation2 + $0x600] sm:$0xff]
    %v233 = vld [vmem:[#allocation2 + $0x608] sm:$0xff]
    %v234 = vld [vmem:[#allocation2 + $0x610] sm:$0xff]
    %v235 = vld [vmem:[#allocation2 + $0x618] sm:$0xff]
    %v236 = vld [vmem:[#allocation2 + $0x620] sm:$0xff]
    %v237 = vld [vmem:[#allocation2 + $0x628] sm:$0xff]
    %v238 = vld [vmem:[#allocation2 + $0x630] sm:$0xff]
    %v239 = vld [vmem:[#allocation2 + $0x638] sm:$0xff]
    %v240 = vld [vmem:[#allocation2 + $0x640] sm:$0xff]
    %v241 = vld [vmem:[#allocation2 + $0x648] sm:$0xff]
    %v242 = vld [vmem:[#allocation2 + $0x650] sm:$0xff]
    %v243 = vld [vmem:[#allocation2 + $0x658] sm:$0xff]
    %v244 = vld [vmem:[#allocation2 + $0x660] sm:$0xff]
    %v245 = vld [vmem:[#allocation2 + $0x668] sm:$0xff]
    %v246 = vld [vmem:[#allocation2 + $0x670] sm:$0xff]
    %v247 = vld [vmem:[#allocation2 + $0x678] sm:$0xff]
    %v248 = vld [vmem:[#allocation2 + $0x680] sm:$0xff]
    %v249 = vld [vmem:[#allocation2 + $0x688] sm:$0xff]
    %v250 = vld [vmem:[#allocation2 + $0x690] sm:$0xff]
    %v251 = vld [vmem:[#allocation2 + $0x698] sm:$0xff]
    %v252 = vld [vmem:[#allocation2 + $0x6a0] sm:$0xff]
    %v253 = vld [vmem:[#allocation2 + $0x6a8] sm:$0xff]
    %v254 = vld [vmem:[#allocation2 + $0x6b0] sm:$0xff]
    %v255 = vld [vmem:[#allocation2 + $0x6b8] sm:$0xff]
    %v256 = vld [vmem:[#allocation2 + $0x6c0] sm:$0xff]
    %v257 = vld [vmem:[#allocation2 + $0x6c8] sm:$0xff]
    %v258 = vld [vmem:[#allocation2 + $0x6d0] sm:$0xff]
    %v259 = vld [vmem:[#allocation2 + $0x6d8] sm:$0xff]
    %v260 = vld [vmem:[#allocation2 + $0x6e0] sm:$0xff]
    %v261 = vld [vmem:[#allocation2 + $0x6e8] sm:$0xff]
    %v262 = vld [vmem:[#allocation2 + $0x6f0] sm:$0xff]
    %v263 = vld [vmem:[#allocation2 + $0x6f8] sm:$0xff]
    %v264 = vld [vmem:[#allocation2 + $0x700] sm:$0xff]
    %v265 = vld [vmem:[#allocation2 + $0x708] sm:$0xff]
    %v266 = vld [vmem:[#allocation2 + $0x710] sm:$0xff]
    %v267 = vld [vmem:[#allocation2 + $0x718] sm:$0xff]
    %v268 = vld [vmem:[#allocation2 + $0x720] sm:$0xff]
    %v269 = vld [vmem:[#allocation2 + $0x728] sm:$0xff]
    %v270 = vld [vmem:[#allocation2 + $0x730] sm:$0xff]
    %v271 = vld [vmem:[#allocation2 + $0x738] sm:$0xff]
    %v272 = vld [vmem:[#allocation2 + $0x740] sm:$0xff]
    %v273 = vld [vmem:[#allocation2 + $0x748] sm:$0xff]
    %v274 = vld [vmem:[#allocation2 + $0x750] sm:$0xff]
    %v275 = vld [vmem:[#allocation2 + $0x758] sm:$0xff]
    %v276 = vld [vmem:[#allocation2 + $0x760] sm:$0xff]
    %v277 = vld [vmem:[#allocation2 + $0x768] sm:$0xff]
    %v278 = vld [vmem:[#allocation2 + $0x770] sm:$0xff]
    %v279 = vld [vmem:[#allocation2 + $0x778] sm:$0xff]
    %v280 = vld [vmem:[#allocation2 + $0x780] sm:$0xff]
    %v281 = vld [vmem:[#allocation2 + $0x788] sm:$0xff]
    %v282 = vld [vmem:[#allocation2 + $0x790] sm:$0xff]
    %v283 = vld [vmem:[#allocation2 + $0x798] sm:$0xff]
    %v284 = vld [vmem:[#allocation2 + $0x7a0] sm:$0xff]
    %v285 = vld [vmem:[#allocation2 + $0x7a8] sm:$0xff]
    %v286 = vld [vmem:[#allocation2 + $0x7b0] sm:$0xff]
    %v287 = vld [vmem:[#allocation2 + $0x7b8] sm:$0xff]
    %v288 = vld [vmem:[#allocation2 + $0x7c0] sm:$0xff]
    %v289 = vld [vmem:[#allocation2 + $0x7c8] sm:$0xff]
    %v290 = vld [vmem:[#allocation2 + $0x7d0] sm:$0xff]
    %v291 = vld [vmem:[#allocation2 + $0x7d8] sm:$0xff]
    %v292 = vld [vmem:[#allocation2 + $0x7e0] sm:$0xff]
    %v293 = vld [vmem:[#allocation2 + $0x7e8] sm:$0xff]
    %v294 = vld [vmem:[#allocation2 + $0x7f0] sm:$0xff]
    %v295 = vld [vmem:[#allocation2 + $0x7f8] sm:$0xff]
    %v296 = vld [vmem:[#allocation2 + $0x800] sm:$0xff]
    %v297 = vld [vmem:[#allocation2 + $0x808] sm:$0xff]
    %v298 = vld [vmem:[#allocation2 + $0x810] sm:$0xff]
    %v299 = vld [vmem:[#allocation2 + $0x818] sm:$0xff]
    %v300 = vld [vmem:[#allocation2 + $0x820] sm:$0xff]
    %v301 = vld [vmem:[#allocation2 + $0x828] sm:$0xff]
    %v302 = vld [vmem:[#allocation2 + $0x830] sm:$0xff]
    %v303 = vld [vmem:[#allocation2 + $0x838] sm:$0xff]
    %v304 = vld [vmem:[#allocation2 + $0x840] sm:$0xff]
    %v305 = vld [vmem:[#allocation2 + $0x848] sm:$0xff]
    %v306 = vld [vmem:[#allocation2 + $0x850] sm:$0xff]
    %v307 = vld [vmem:[#allocation2 + $0x858] sm:$0xff]
    %v308 = vld [vmem:[#allocation2 + $0x860] sm:$0xff]
    %v309 = vld [vmem:[#allocation2 + $0x868] sm:$0xff]
    %v310 = vld [vmem:[#allocation2 + $0x870] sm:$0xff]
    %v311 = vld [vmem:[#allocation2 + $0x878] sm:$0xff]
    %v312 = vld [vmem:[#allocation2 + $0x880] sm:$0xff]
    %v313 = vld [vmem:[#allocation2 + $0x888] sm:$0xff]
    %v314 = vld [vmem:[#allocation2 + $0x890] sm:$0xff]
    %v315 = vld [vmem:[#allocation2 + $0x898] sm:$0xff]
    %v316 = vld [vmem:[#allocation2 + $0x8a0] sm:$0xff]
    %v317 = vld [vmem:[#allocation2 + $0x8a8] sm:$0xff]
    %v318 = vld [vmem:[#allocation2 + $0x8b0] sm:$0xff]
    %v319 = vld [vmem:[#allocation2 + $0x8b8] sm:$0xff]
    %v320 = vld [vmem:[#allocation2 + $0x8c0] sm:$0xff]
    %v321 = vld [vmem:[#allocation2 + $0x8c8] sm:$0xff]
    %v322 = vld [vmem:[#allocation2 + $0x8d0] sm:$0xff]
    %v323 = vld [vmem:[#allocation2 + $0x8d8] sm:$0xff]
    %v324 = vld [vmem:[#allocation2 + $0x8e0] sm:$0xff]
    %v325 = vld [vmem:[#allocation2 + $0x8e8] sm:$0xff]
    %v326 = vld [vmem:[#allocation2 + $0x8f0] sm:$0xff]
    %v327 = vld [vmem:[#allocation2 + $0x8f8] sm:$0xff]
    %v328 = vld [vmem:[#allocation2 + $0x900] sm:$0xff]
    %v329 = vld [vmem:[#allocation2 + $0x908] sm:$0xff]
    %v330 = vld [vmem:[#allocation2 + $0x910] sm:$0xff]
    %v331 = vld [vmem:[#allocation2 + $0x918] sm:$0xff]
    %v332 = vld [vmem:[#allocation2 + $0x920] sm:$0xff]
    %v333 = vld [vmem:[#allocation2 + $0x928] sm:$0xff]
    %v334 = vld [vmem:[#allocation2 + $0x930] sm:$0xff]
    %v335 = vld [vmem:[#allocation2 + $0x938] sm:$0xff]
    %v336 = vld [vmem:[#allocation2 + $0x940] sm:$0xff]
    %v337 = vld [vmem:[#allocation2 + $0x948] sm:$0xff]
    %v338 = vld [vmem:[#allocation2 + $0x950] sm:$0xff]
    %v339 = vld [vmem:[#allocation2 + $0x958] sm:$0xff]
    %v340 = vld [vmem:[#allocation2 + $0x960] sm:$0xff]
    %v341 = vld [vmem:[#allocation2 + $0x968] sm:$0xff]
    %v342 = vld [vmem:[#allocation2 + $0x970] sm:$0xff]
    %v343 = vld [vmem:[#allocation2 + $0x978] sm:$0xff]
    %v344 = vld [vmem:[#allocation2 + $0x980] sm:$0xff]
    %v345 = vld [vmem:[#allocation2 + $0x988] sm:$0xff]
    %v346 = vld [vmem:[#allocation2 + $0x990] sm:$0xff]
    %v347 = vld [vmem:[#allocation2 + $0x998] sm:$0xff]
    %v348 = vld [vmem:[#allocation2 + $0x9a0] sm:$0xff]
    %v349 = vld [vmem:[#allocation2 + $0x9a8] sm:$0xff]
    %v350 = vld [vmem:[#allocation2 + $0x9b0] sm:$0xff]
    %v351 = vld [vmem:[#allocation2 + $0x9b8] sm:$0xff]
    %v352 = vld [vmem:[#allocation2 + $0x9c0] sm:$0xff]
    %v353 = vld [vmem:[#allocation2 + $0x9c8] sm:$0xff]
    %v354 = vld [vmem:[#allocation2 + $0x9d0] sm:$0xff]
    %v355 = vld [vmem:[#allocation2 + $0x9d8] sm:$0xff]
    %v356 = vld [vmem:[#allocation2 + $0x9e0] sm:$0xff]
    %v357 = vld [vmem:[#allocation2 + $0x9e8] sm:$0xff]
    %v358 = vld [vmem:[#allocation2 + $0x9f0] sm:$0xff]
    %v359 = vld [vmem:[#allocation2 + $0x9f8] sm:$0xff]
    %v360 = vld [vmem:[#allocation2 + $0xa00] sm:$0xff]
    %v361 = vld [vmem:[#allocation2 + $0xa08] sm:$0xff]
    %v362 = vld [vmem:[#allocation2 + $0xa10] sm:$0xff]
    %v363 = vld [vmem:[#allocation2 + $0xa18] sm:$0xff]
    %v364 = vld [vmem:[#allocation2 + $0xa20] sm:$0xff]
    %v365 = vld [vmem:[#allocation2 + $0xa28] sm:$0xff]
    %v366 = vld [vmem:[#allocation2 + $0xa30] sm:$0xff]
    %v367 = vld [vmem:[#allocation2 + $0xa38] sm:$0xff]
    %v368 = vld [vmem:[#allocation2 + $0xa40] sm:$0xff]
    %v369 = vld [vmem:[#allocation2 + $0xa48] sm:$0xff]
    %v370 = vld [vmem:[#allocation2 + $0xa50] sm:$0xff]
    %v371 = vld [vmem:[#allocation2 + $0xa58] sm:$0xff]
    %v372 = vld [vmem:[#allocation2 + $0xa60] sm:$0xff]
    %v373 = vld [vmem:[#allocation2 + $0xa68] sm:$0xff]
    %v374 = vld [vmem:[#allocation2 + $0xa70] sm:$0xff]
    %v375 = vld [vmem:[#allocation2 + $0xa78] sm:$0xff]
    %v376 = vld [vmem:[#allocation2 + $0xa80] sm:$0xff]
    %v377 = vld [vmem:[#allocation2 + $0xa88] sm:$0xff]
    %v378 = vld [vmem:[#allocation2 + $0xa90] sm:$0xff]
    %v379 = vld [vmem:[#allocation2 + $0xa98] sm:$0xff]
    %v380 = vld [vmem:[#allocation2 + $0xaa0] sm:$0xff]
    %v381 = vld [vmem:[#allocation2 + $0xaa8] sm:$0xff]
    %v382 = vld [vmem:[#allocation2 + $0xab0] sm:$0xff]
    %v383 = vld [vmem:[#allocation2 + $0xab8] sm:$0xff]
    %v384 = vld [vmem:[#allocation2 + $0xac0] sm:$0xff]
    %v385 = vld [vmem:[#allocation2 + $0xac8] sm:$0xff]
    %v386 = vld [vmem:[#allocation2 + $0xad0] sm:$0xff]
    %v387 = vld [vmem:[#allocation2 + $0xad8] sm:$0xff]
    %v388 = vld [vmem:[#allocation2 + $0xae0] sm:$0xff]
    %v389 = vld [vmem:[#allocation2 + $0xae8] sm:$0xff]
    %v390 = vld [vmem:[#allocation2 + $0xaf0] sm:$0xff]
    %v391 = vld [vmem:[#allocation2 + $0xaf8] sm:$0xff]
    %v392 = vld [vmem:[#allocation2 + $0xb00] sm:$0xff]
    %v393 = vld [vmem:[#allocation2 + $0xb08] sm:$0xff]
    %v394 = vld [vmem:[#allocation2 + $0xb10] sm:$0xff]
    %v395 = vld [vmem:[#allocation2 + $0xb18] sm:$0xff]
    %v396 = vld [vmem:[#allocation2 + $0xb20] sm:$0xff]
    %v397 = vld [vmem:[#allocation2 + $0xb28] sm:$0xff]
    %v398 = vld [vmem:[#allocation2 + $0xb30] sm:$0xff]
    %v399 = vld [vmem:[#allocation2 + $0xb38] sm:$0xff]
    %v400 = vld [vmem:[#allocation2 + $0xb40] sm:$0xff]
    %v401 = vld [vmem:[#allocation2 + $0xb48] sm:$0xff]
    %v402 = vld [vmem:[#allocation2 + $0xb50] sm:$0xff]
    %v403 = vld [vmem:[#allocation2 + $0xb58] sm:$0xff]
    %v404 = vld [vmem:[#allocation2 + $0xb60] sm:$0xff]
    %v405 = vld [vmem:[#allocation2 + $0xb68] sm:$0xff]
    %v406 = vld [vmem:[#allocation2 + $0xb70] sm:$0xff]
    %v407 = vld [vmem:[#allocation2 + $0xb78] sm:$0xff]
    %v408 = vld [vmem:[#allocation2 + $0xb80] sm:$0xff]
    %v409 = vld [vmem:[#allocation2 + $0xb88] sm:$0xff]
    %v410 = vld [vmem:[#allocation2 + $0xb90] sm:$0xff]
    %v411 = vld [vmem:[#allocation2 + $0xb98] sm:$0xff]
    %v412 = vld [vmem:[#allocation2 + $0xba0] sm:$0xff]
    %v413 = vld [vmem:[#allocation2 + $0xba8] sm:$0xff]
    %v414 = vld [vmem:[#allocation2 + $0xbb0] sm:$0xff]
    %v415 = vld [vmem:[#allocation2 + $0xbb8] sm:$0xff]
    %v416 = vld [vmem:[#allocation2 + $0xbc0] sm:$0xff]
    %v417 = vld [vmem:[#allocation2 + $0xbc8] sm:$0xff]
    %v418 = vld [vmem:[#allocation2 + $0xbd0] sm:$0xff]
    %v419 = vld [vmem:[#allocation2 + $0xbd8] sm:$0xff]
    %v420 = vld [vmem:[#allocation2 + $0xbe0] sm:$0xff]
    %v421 = vld [vmem:[#allocation2 + $0xbe8] sm:$0xff]
    %v422 = vld [vmem:[#allocation2 + $0xbf0] sm:$0xff]
    %v423 = vld [vmem:[#allocation2 + $0xbf8] sm:$0xff]
    %v424 = vld [vmem:[#allocation2 + $0xc00] sm:$0xff]
    %v425 = vld [vmem:[#allocation2 + $0xc08] sm:$0xff]
    %v426 = vld [vmem:[#allocation2 + $0xc10] sm:$0xff]
    %v427 = vld [vmem:[#allocation2 + $0xc18] sm:$0xff]
    %v428 = vld [vmem:[#allocation2 + $0xc20] sm:$0xff]
    %v429 = vld [vmem:[#allocation2 + $0xc28] sm:$0xff]
    %v430 = vld [vmem:[#allocation2 + $0xc30] sm:$0xff]
    %v431 = vld [vmem:[#allocation2 + $0xc38] sm:$0xff]
    %v432 = vld [vmem:[#allocation2 + $0xc40] sm:$0xff]
    %v433 = vld [vmem:[#allocation2 + $0xc48] sm:$0xff]
    %v434 = vld [vmem:[#allocation2 + $0xc50] sm:$0xff]
    %v435 = vld [vmem:[#allocation2 + $0xc58] sm:$0xff]
    %v436 = vld [vmem:[#allocation2 + $0xc60] sm:$0xff]
    %v437 = vld [vmem:[#allocation2 + $0xc68] sm:$0xff]
    %v438 = vld [vmem:[#allocation2 + $0xc70] sm:$0xff]
    %v439 = vld [vmem:[#allocation2 + $0xc78] sm:$0xff]
    %v440 = vld [vmem:[#allocation2 + $0xc80] sm:$0xff]
    %v441 = vld [vmem:[#allocation2 + $0xc88] sm:$0xff]
    %v442 = vld [vmem:[#allocation2 + $0xc90] sm:$0xff]
    %v443 = vld [vmem:[#allocation2 + $0xc98] sm:$0xff]
    %v444 = vld [vmem:[#allocation2 + $0xca0] sm:$0xff]
    %v445 = vld [vmem:[#allocation2 + $0xca8] sm:$0xff]
    %v446 = vld [vmem:[#allocation2 + $0xcb0] sm:$0xff]
    %v447 = vld [vmem:[#allocation2 + $0xcb8] sm:$0xff]
    %v448 = vld [vmem:[#allocation2 + $0xcc0] sm:$0xff]
    %v449 = vld [vmem:[#allocation2 + $0xcc8] sm:$0xff]
    %v450 = vld [vmem:[#allocation2 + $0xcd0] sm:$0xff]
    %v451 = vld [vmem:[#allocation2 + $0xcd8] sm:$0xff]
    %v452 = vld [vmem:[#allocation2 + $0xce0] sm:$0xff]
    %v453 = vld [vmem:[#allocation2 + $0xce8] sm:$0xff]
    %v454 = vld [vmem:[#allocation2 + $0xcf0] sm:$0xff]
    %v455 = vld [vmem:[#allocation2 + $0xcf8] sm:$0xff]
    %v456 = vld [vmem:[#allocation2 + $0xd00] sm:$0xff]
    %v457 = vld [vmem:[#allocation2 + $0xd08] sm:$0xff]
    %v458 = vld [vmem:[#allocation2 + $0xd10] sm:$0xff]
    %v459 = vld [vmem:[#allocation2 + $0xd18] sm:$0xff]
    %v460 = vld [vmem:[#allocation2 + $0xd20] sm:$0xff]
    %v461 = vld [vmem:[#allocation2 + $0xd28] sm:$0xff]
    %v462 = vld [vmem:[#allocation2 + $0xd30] sm:$0xff]
    %v463 = vld [vmem:[#allocation2 + $0xd38] sm:$0xff]
    %v464 = vld [vmem:[#allocation2 + $0xd40] sm:$0xff]
    %v465 = vld [vmem:[#allocation2 + $0xd48] sm:$0xff]
    %v466 = vld [vmem:[#allocation2 + $0xd50] sm:$0xff]
    %v467 = vld [vmem:[#allocation2 + $0xd58] sm:$0xff]
    %v468 = vld [vmem:[#allocation2 + $0xd60] sm:$0xff]
    %v469 = vld [vmem:[#allocation2 + $0xd68] sm:$0xff]
    %v470 = vld [vmem:[#allocation2 + $0xd70] sm:$0xff]
    %v471 = vld [vmem:[#allocation2 + $0xd78] sm:$0xff]
    %v472 = vld [vmem:[#allocation2 + $0xd80] sm:$0xff]
    %v473 = vld [vmem:[#allocation2 + $0xd88] sm:$0xff]
    %v474 = vld [vmem:[#allocation2 + $0xd90] sm:$0xff]
    %v475 = vld [vmem:[#allocation2 + $0xd98] sm:$0xff]
    %v476 = vld [vmem:[#allocation2 + $0xda0] sm:$0xff]
    %v477 = vld [vmem:[#allocation2 + $0xda8] sm:$0xff]
    %v478 = vld [vmem:[#allocation2 + $0xdb0] sm:$0xff]
    %v479 = vld [vmem:[#allocation2 + $0xdb8] sm:$0xff]
    %v480 = vld [vmem:[#allocation2 + $0xdc0] sm:$0xff]
    %v481 = vld [vmem:[#allocation2 + $0xdc8] sm:$0xff]
    %v482 = vld [vmem:[#allocation2 + $0xdd0] sm:$0xff]
    %v483 = vld [vmem:[#allocation2 + $0xdd8] sm:$0xff]
    %v484 = vld [vmem:[#allocation2 + $0xde0] sm:$0xff]
    %v485 = vld [vmem:[#allocation2 + $0xde8] sm:$0xff]
    %v486 = vld [vmem:[#allocation2 + $0xdf0] sm:$0xff]
    %v487 = vld [vmem:[#allocation2 + $0xdf8] sm:$0xff]
    %v488 = vld [vmem:[#allocation2 + $0xe00] sm:$0xff]
    %v489 = vld [vmem:[#allocation2 + $0xe08] sm:$0xff]
    %v490 = vld [vmem:[#allocation2 + $0xe10] sm:$0xff]
    %v491 = vld [vmem:[#allocation2 + $0xe18] sm:$0xff]
    %v492 = vld [vmem:[#allocation2 + $0xe20] sm:$0xff]
    %v493 = vld [vmem:[#allocation2 + $0xe28] sm:$0xff]
    %v494 = vld [vmem:[#allocation2 + $0xe30] sm:$0xff]
    %v495 = vld [vmem:[#allocation2 + $0xe38] sm:$0xff]
    %v496 = vld [vmem:[#allocation2 + $0xe40] sm:$0xff]
    %v497 = vld [vmem:[#allocation2 + $0xe48] sm:$0xff]
    %v498 = vld [vmem:[#allocation2 + $0xe50] sm:$0xff]
    %v499 = vld [vmem:[#allocation2 + $0xe58] sm:$0xff]
    %v500 = vld [vmem:[#allocation2 + $0xe60] sm:$0xff]
    %v501 = vld [vmem:[#allocation2 + $0xe68] sm:$0xff]
    %v502 = vld [vmem:[#allocation2 + $0xe70] sm:$0xff]
    %v503 = vld [vmem:[#allocation2 + $0xe78] sm:$0xff]
    %v504 = vld [vmem:[#allocation2 + $0xe80] sm:$0xff]
    %v505 = vld [vmem:[#allocation2 + $0xe88] sm:$0xff]
    %v506 = vld [vmem:[#allocation2 + $0xe90] sm:$0xff]
    %v507 = vld [vmem:[#allocation2 + $0xe98] sm:$0xff]
    %v508 = vld [vmem:[#allocation2 + $0xea0] sm:$0xff]
    %v509 = vld [vmem:[#allocation2 + $0xea8] sm:$0xff]
    %v510 = vld [vmem:[#allocation2 + $0xeb0] sm:$0xff]
    %v511 = vld [vmem:[#allocation2 + $0xeb8] sm:$0xff]
    %v512 = vld [vmem:[#allocation2 + $0xec0] sm:$0xff]
    %v513 = vld [vmem:[#allocation2 + $0xec8] sm:$0xff]
    %v514 = vld [vmem:[#allocation2 + $0xed0] sm:$0xff]
    %v515 = vld [vmem:[#allocation2 + $0xed8] sm:$0xff]
    %v516 = vld [vmem:[#allocation2 + $0xee0] sm:$0xff]
    %v517 = vld [vmem:[#allocation2 + $0xee8] sm:$0xff]
    %v518 = vld [vmem:[#allocation2 + $0xef0] sm:$0xff]
    %v519 = vld [vmem:[#allocation2 + $0xef8] sm:$0xff]
    %v520 = vld [vmem:[#allocation2 + $0xf00] sm:$0xff]
    %v521 = vld [vmem:[#allocation2 + $0xf08] sm:$0xff]
    %v522 = vld [vmem:[#allocation2 + $0xf10] sm:$0xff]
    %v523 = vld [vmem:[#allocation2 + $0xf18] sm:$0xff]
    %v524 = vld [vmem:[#allocation2 + $0xf20] sm:$0xff]
    %v525 = vld [vmem:[#allocation2 + $0xf28] sm:$0xff]
    %v526 = vld [vmem:[#allocation2 + $0xf30] sm:$0xff]
    %v527 = vld [vmem:[#allocation2 + $0xf38] sm:$0xff]
    %v528 = vld [vmem:[#allocation2 + $0xf40] sm:$0xff]
    %v529 = vld [vmem:[#allocation2 + $0xf48] sm:$0xff]
    %v530 = vld [vmem:[#allocation2 + $0xf50] sm:$0xff]
    %v531 = vld [vmem:[#allocation2 + $0xf58] sm:$0xff]
    %v532 = vld [vmem:[#allocation2 + $0xf60] sm:$0xff]
    %v533 = vld [vmem:[#allocation2 + $0xf68] sm:$0xff]
    %v534 = vld [vmem:[#allocation2 + $0xf70] sm:$0xff]
    %v535 = vld [vmem:[#allocation2 + $0xf78] sm:$0xff]
    %v536 = vld [vmem:[#allocation2 + $0xf80] sm:$0xff]
    %v537 = vld [vmem:[#allocation2 + $0xf88] sm:$0xff]
    %v538 = vld [vmem:[#allocation2 + $0xf90] sm:$0xff]
    %v539 = vld [vmem:[#allocation2 + $0xf98] sm:$0xff]
    %v540 = vld [vmem:[#allocation2 + $0xfa0] sm:$0xff]
    %v541 = vld [vmem:[#allocation2 + $0xfa8] sm:$0xff]
    %v542 = vld [vmem:[#allocation2 + $0xfb0] sm:$0xff]
    %v543 = vld [vmem:[#allocation2 + $0xfb8] sm:$0xff]
    %v544 = vld [vmem:[#allocation2 + $0xfc0] sm:$0xff]
    %v545 = vld [vmem:[#allocation2 + $0xfc8] sm:$0xff]
    %v546 = vld [vmem:[#allocation2 + $0xfd0] sm:$0xff]
    %v547 = vld [vmem:[#allocation2 + $0xfd8] sm:$0xff]
    %v548 = vld [vmem:[#allocation2 + $0xfe0] sm:$0xff]
    %v549 = vld [vmem:[#allocation2 + $0xfe8] sm:$0xff]
    %v550 = vld [vmem:[#allocation2 + $0xff0] sm:$0xff]
    %v551 = vld [vmem:[#allocation2 + $0xff8] sm:$0xff]
    %v552 = vld [vmem:[#allocation2 + $0x1000] sm:$0xff]
    %v553 = vld [vmem:[#allocation2 + $0x1008] sm:$0xff]
    %v554 = vld [vmem:[#allocation2 + $0x1010] sm:$0xff]
    %v555 = vld [vmem:[#allocation2 + $0x1018] sm:$0xff]
    %v556 = vld [vmem:[#allocation2 + $0x1020] sm:$0xff]
    %v557 = vld [vmem:[#allocation2 + $0x1028] sm:$0xff]
    %v558 = vld [vmem:[#allocation2 + $0x1030] sm:$0xff]
    %v559 = vld [vmem:[#allocation2 + $0x1038] sm:$0xff]
    %v560 = vld [vmem:[#allocation2 + $0x1040] sm:$0xff]
    %v561 = vld [vmem:[#allocation2 + $0x1048] sm:$0xff]
    %v562 = vld [vmem:[#allocation2 + $0x1050] sm:$0xff]
    %v563 = vld [vmem:[#allocation2 + $0x1058] sm:$0xff]
    %v564 = vld [vmem:[#allocation2 + $0x1060] sm:$0xff]
    %v565 = vld [vmem:[#allocation2 + $0x1068] sm:$0xff]
    %v566 = vld [vmem:[#allocation2 + $0x1070] sm:$0xff]
    %v567 = vld [vmem:[#allocation2 + $0x1078] sm:$0xff]
    %v568 = vld [vmem:[#allocation2 + $0x1080] sm:$0xff]
    %v569 = vld [vmem:[#allocation2 + $0x1088] sm:$0xff]
    %v570 = vld [vmem:[#allocation2 + $0x1090] sm:$0xff]
    %v571 = vld [vmem:[#allocation2 + $0x1098] sm:$0xff]
    %v572 = vld [vmem:[#allocation2 + $0x10a0] sm:$0xff]
    %v573 = vld [vmem:[#allocation2 + $0x10a8] sm:$0xff]
    %v574 = vld [vmem:[#allocation2 + $0x10b0] sm:$0xff]
    %v575 = vld [vmem:[#allocation2 + $0x10b8] sm:$0xff]
    %v576 = vld [vmem:[#allocation2 + $0x10c0] sm:$0xff]
    %v577 = vld [vmem:[#allocation2 + $0x10c8] sm:$0xff]
    %v578 = vld [vmem:[#allocation2 + $0x10d0] sm:$0xff]
    %v579 = vld [vmem:[#allocation2 + $0x10d8] sm:$0xff]
    %v580 = vld [vmem:[#allocation2 + $0x10e0] sm:$0xff]
    %v581 = vld [vmem:[#allocation2 + $0x10e8] sm:$0xff]
    %v582 = vld [vmem:[#allocation2 + $0x10f0] sm:$0xff]
    %v583 = vld [vmem:[#allocation2 + $0x10f8] sm:$0xff]
    %v584 = vld [vmem:[#allocation2 + $0x1100] sm:$0xff]
    %v585 = vld [vmem:[#allocation2 + $0x1108] sm:$0xff]
    %v586 = vld [vmem:[#allocation2 + $0x1110] sm:$0xff]
    %v587 = vld [vmem:[#allocation2 + $0x1118] sm:$0xff]
    %v588 = vld [vmem:[#allocation2 + $0x1120] sm:$0xff]
    %v589 = vld [vmem:[#allocation2 + $0x1128] sm:$0xff]
    %v590 = vld [vmem:[#allocation2 + $0x1130] sm:$0xff]
    %v591 = vld [vmem:[#allocation2 + $0x1138] sm:$0xff]
    %v592 = vld [vmem:[#allocation2 + $0x1140] sm:$0xff]
    %v593 = vld [vmem:[#allocation2 + $0x1148] sm:$0xff]
    %v594 = vld [vmem:[#allocation2 + $0x1150] sm:$0xff]
    %v595 = vld [vmem:[#allocation2 + $0x1158] sm:$0xff]
    %v596 = vld [vmem:[#allocation2 + $0x1160] sm:$0xff]
    %v597 = vld [vmem:[#allocation2 + $0x1168] sm:$0xff]
    %v598 = vld [vmem:[#allocation2 + $0x1170] sm:$0xff]
    %v599 = vld [vmem:[#allocation2 + $0x1178] sm:$0xff]
    %v600 = vld [vmem:[#allocation2 + $0x1180] sm:$0xff]
    %v601 = vld [vmem:[#allocation2 + $0x1188] sm:$0xff]
    %v602 = vld [vmem:[#allocation2 + $0x1190] sm:$0xff]
    %v603 = vld [vmem:[#allocation2 + $0x1198] sm:$0xff]
    %v604 = vld [vmem:[#allocation2 + $0x11a0] sm:$0xff]
    %v605 = vld [vmem:[#allocation2 + $0x11a8] sm:$0xff]
    %v606 = vld [vmem:[#allocation2 + $0x11b0] sm:$0xff]
    %v607 = vld [vmem:[#allocation2 + $0x11b8] sm:$0xff]
    %v608 = vld [vmem:[#allocation2 + $0x11c0] sm:$0xff]
    %v609 = vld [vmem:[#allocation2 + $0x11c8] sm:$0xff]
    %v610 = vld [vmem:[#allocation2 + $0x11d0] sm:$0xff]
    %v611 = vld [vmem:[#allocation2 + $0x11d8] sm:$0xff]
    %v612 = vld [vmem:[#allocation2 + $0x11e0] sm:$0xff]
    %v613 = vld [vmem:[#allocation2 + $0x11e8] sm:$0xff]
    %v614 = vld [vmem:[#allocation2 + $0x11f0] sm:$0xff]
    %v615 = vld [vmem:[#allocation2 + $0x11f8] sm:$0xff]
    %v616 = vld [vmem:[#allocation5] sm:$0xff]
    %v617 = vld [vmem:[#allocation5 + $0x8] sm:$0xff]
    %v618 = vld [vmem:[#allocation5 + $0x10] sm:$0xff]
    %v619 = vld [vmem:[#allocation5 + $0x18] sm:$0xff]
    %v620 = vld [vmem:[#allocation5 + $0x20] sm:$0xff]
    %v621 = vld [vmem:[#allocation5 + $0x28] sm:$0xff]
    %v622 = vlaneseq
    %v623 = vshrl.u32 %v622, 7
    %v624 = vsub.s32 0, %v623
    %v625 = vrot.slane %v616, %v624
    %627 = vbcast.lane.b32.xlu0 %v625, 256
    %v628 = vpop.permute.xlu0 %627
    %s630 = sor.u32 256, 8
    %631 = vbcast.lane.b32.xlu0 %v625, %s630
    %v632 = vpop.permute.xlu0 %631
    %v633 = vlaneseq
    %v634 = vshrl.u32 %v633, 7
    %v635 = vsub.s32 1, %v634
    %v636 = vrot.slane %v616, %v635
    %638 = vbcast.lane.b32.xlu0 %v636, 256
    %v639 = vpop.permute.xlu0 %638
    %s641 = sor.u32 256, 8
    %642 = vbcast.lane.b32.xlu0 %v636, %s641
    %v643 = vpop.permute.xlu0 %642
    %v644 = vlaneseq
    %v645 = vshrl.u32 %v644, 7
    %v646 = vsub.s32 2, %v645
    %v647 = vrot.slane %v616, %v646
    %649 = vbcast.lane.b32.xlu0 %v647, 256
    %v650 = vpop.permute.xlu0 %649
    %s652 = sor.u32 256, 8
    %653 = vbcast.lane.b32.xlu0 %v647, %s652
    %v654 = vpop.permute.xlu0 %653
    %v655 = vlaneseq
    %v656 = vshrl.u32 %v655, 7
    %v657 = vsub.s32 3, %v656
    %v658 = vrot.slane %v616, %v657
    %660 = vbcast.lane.b32.xlu0 %v658, 256
    %v661 = vpop.permute.xlu0 %660
    %s663 = sor.u32 256, 8
    %664 = vbcast.lane.b32.xlu0 %v658, %s663
    %v665 = vpop.permute.xlu0 %664
    %v666 = vlaneseq
    %v667 = vshrl.u32 %v666, 7
    %v668 = vsub.s32 4, %v667
    %v669 = vrot.slane %v616, %v668
    %671 = vbcast.lane.b32.xlu0 %v669, 256
    %v672 = vpop.permute.xlu0 %671
    %s674 = sor.u32 256, 8
    %675 = vbcast.lane.b32.xlu0 %v669, %s674
    %v676 = vpop.permute.xlu0 %675
    %v677 = vlaneseq
    %v678 = vshrl.u32 %v677, 7
    %v679 = vsub.s32 5, %v678
    %v680 = vrot.slane %v616, %v679
    %682 = vbcast.lane.b32.xlu0 %v680, 256
    %v683 = vpop.permute.xlu0 %682
    %s685 = sor.u32 256, 8
    %686 = vbcast.lane.b32.xlu0 %v680, %s685
    %v687 = vpop.permute.xlu0 %686
    %v688 = vlaneseq
    %v689 = vshrl.u32 %v688, 7
    %v690 = vsub.s32 6, %v689
    %v691 = vrot.slane %v616, %v690
    %693 = vbcast.lane.b32.xlu0 %v691, 256
    %v694 = vpop.permute.xlu0 %693
    %s696 = sor.u32 256, 8
    %697 = vbcast.lane.b32.xlu0 %v691, %s696
    %v698 = vpop.permute.xlu0 %697
    %v699 = vlaneseq
    %v700 = vshrl.u32 %v699, 7
    %v701 = vsub.s32 7, %v700
    %v702 = vrot.slane %v616, %v701
    %704 = vbcast.lane.b32.xlu0 %v702, 256
    %v705 = vpop.permute.xlu0 %704
    %s707 = sor.u32 256, 8
    %708 = vbcast.lane.b32.xlu0 %v702, %s707
    %v709 = vpop.permute.xlu0 %708
    %v710 = vlaneseq
    %v711 = vshrl.u32 %v710, 7
    %v712 = vsub.s32 0, %v711
    %v713 = vrot.slane %v617, %v712
    %715 = vbcast.lane.b32.xlu0 %v713, 256
    %v716 = vpop.permute.xlu0 %715
    %s718 = sor.u32 256, 8
    %719 = vbcast.lane.b32.xlu0 %v713, %s718
    %v720 = vpop.permute.xlu0 %719
    %v721 = vlaneseq
    %v722 = vshrl.u32 %v721, 7
    %v723 = vsub.s32 1, %v722
    %v724 = vrot.slane %v617, %v723
    %726 = vbcast.lane.b32.xlu0 %v724, 256
    %v727 = vpop.permute.xlu0 %726
    %s729 = sor.u32 256, 8
    %730 = vbcast.lane.b32.xlu0 %v724, %s729
    %v731 = vpop.permute.xlu0 %730
    %v732 = vlaneseq
    %v733 = vshrl.u32 %v732, 7
    %v734 = vsub.s32 2, %v733
    %v735 = vrot.slane %v617, %v734
    %737 = vbcast.lane.b32.xlu0 %v735, 256
    %v738 = vpop.permute.xlu0 %737
    %s740 = sor.u32 256, 8
    %741 = vbcast.lane.b32.xlu0 %v735, %s740
    %v742 = vpop.permute.xlu0 %741
    %v743 = vlaneseq
    %v744 = vshrl.u32 %v743, 7
    %v745 = vsub.s32 3, %v744
    %v746 = vrot.slane %v617, %v745
    %748 = vbcast.lane.b32.xlu0 %v746, 256
    %v749 = vpop.permute.xlu0 %748
    %s751 = sor.u32 256, 8
    %752 = vbcast.lane.b32.xlu0 %v746, %s751
    %v753 = vpop.permute.xlu0 %752
    %v754 = vlaneseq
    %v755 = vshrl.u32 %v754, 7
    %v756 = vsub.s32 4, %v755
    %v757 = vrot.slane %v617, %v756
    %759 = vbcast.lane.b32.xlu0 %v757, 256
    %v760 = vpop.permute.xlu0 %759
    %s762 = sor.u32 256, 8
    %763 = vbcast.lane.b32.xlu0 %v757, %s762
    %v764 = vpop.permute.xlu0 %763
    %v765 = vlaneseq
    %v766 = vshrl.u32 %v765, 7
    %v767 = vsub.s32 5, %v766
    %v768 = vrot.slane %v617, %v767
    %770 = vbcast.lane.b32.xlu0 %v768, 256
    %v771 = vpop.permute.xlu0 %770
    %s773 = sor.u32 256, 8
    %774 = vbcast.lane.b32.xlu0 %v768, %s773
    %v775 = vpop.permute.xlu0 %774
    %v776 = vlaneseq
    %v777 = vshrl.u32 %v776, 7
    %v778 = vsub.s32 6, %v777
    %v779 = vrot.slane %v617, %v778
    %781 = vbcast.lane.b32.xlu0 %v779, 256
    %v782 = vpop.permute.xlu0 %781
    %s784 = sor.u32 256, 8
    %785 = vbcast.lane.b32.xlu0 %v779, %s784
    %v786 = vpop.permute.xlu0 %785
    %v787 = vlaneseq
    %v788 = vshrl.u32 %v787, 7
    %v789 = vsub.s32 7, %v788
    %v790 = vrot.slane %v617, %v789
    %792 = vbcast.lane.b32.xlu0 %v790, 256
    %v793 = vpop.permute.xlu0 %792
    %s795 = sor.u32 256, 8
    %796 = vbcast.lane.b32.xlu0 %v790, %s795
    %v797 = vpop.permute.xlu0 %796
    %v798 = vlaneseq
    %v799 = vshrl.u32 %v798, 7
    %v800 = vsub.s32 0, %v799
    %v801 = vrot.slane %v618, %v800
    %803 = vbcast.lane.b32.xlu0 %v801, 256
    %v804 = vpop.permute.xlu0 %803
    %s806 = sor.u32 256, 8
    %807 = vbcast.lane.b32.xlu0 %v801, %s806
    %v808 = vpop.permute.xlu0 %807
    %v809 = vlaneseq
    %v810 = vshrl.u32 %v809, 7
    %v811 = vsub.s32 1, %v810
    %v812 = vrot.slane %v618, %v811
    %814 = vbcast.lane.b32.xlu0 %v812, 256
    %v815 = vpop.permute.xlu0 %814
    %s817 = sor.u32 256, 8
    %818 = vbcast.lane.b32.xlu0 %v812, %s817
    %v819 = vpop.permute.xlu0 %818
    %v820 = vlaneseq
    %v821 = vshrl.u32 %v820, 7
    %v822 = vsub.s32 2, %v821
    %v823 = vrot.slane %v618, %v822
    %825 = vbcast.lane.b32.xlu0 %v823, 256
    %v826 = vpop.permute.xlu0 %825
    %s828 = sor.u32 256, 8
    %829 = vbcast.lane.b32.xlu0 %v823, %s828
    %v830 = vpop.permute.xlu0 %829
    %v831 = vlaneseq
    %v832 = vshrl.u32 %v831, 7
    %v833 = vsub.s32 3, %v832
    %v834 = vrot.slane %v618, %v833
    %836 = vbcast.lane.b32.xlu0 %v834, 256
    %v837 = vpop.permute.xlu0 %836
    %s839 = sor.u32 256, 8
    %840 = vbcast.lane.b32.xlu0 %v834, %s839
    %v841 = vpop.permute.xlu0 %840
    %v842 = vlaneseq
    %v843 = vshrl.u32 %v842, 7
    %v844 = vsub.s32 4, %v843
    %v845 = vrot.slane %v618, %v844
    %847 = vbcast.lane.b32.xlu0 %v845, 256
    %v848 = vpop.permute.xlu0 %847
    %s850 = sor.u32 256, 8
    %851 = vbcast.lane.b32.xlu0 %v845, %s850
    %v852 = vpop.permute.xlu0 %851
    %v853 = vlaneseq
    %v854 = vshrl.u32 %v853, 7
    %v855 = vsub.s32 5, %v854
    %v856 = vrot.slane %v618, %v855
    %858 = vbcast.lane.b32.xlu0 %v856, 256
    %v859 = vpop.permute.xlu0 %858
    %s861 = sor.u32 256, 8
    %862 = vbcast.lane.b32.xlu0 %v856, %s861
    %v863 = vpop.permute.xlu0 %862
    %v864 = vlaneseq
    %v865 = vshrl.u32 %v864, 7
    %v866 = vsub.s32 6, %v865
    %v867 = vrot.slane %v618, %v866
    %869 = vbcast.lane.b32.xlu0 %v867, 256
    %v870 = vpop.permute.xlu0 %869
    %s872 = sor.u32 256, 8
    %873 = vbcast.lane.b32.xlu0 %v867, %s872
    %v874 = vpop.permute.xlu0 %873
    %v875 = vlaneseq
    %v876 = vshrl.u32 %v875, 7
    %v877 = vsub.s32 7, %v876
    %v878 = vrot.slane %v618, %v877
    %880 = vbcast.lane.b32.xlu0 %v878, 256
    %v881 = vpop.permute.xlu0 %880
    %s883 = sor.u32 256, 8
    %884 = vbcast.lane.b32.xlu0 %v878, %s883
    %v885 = vpop.permute.xlu0 %884
    %v886 = vlaneseq
    %v887 = vshrl.u32 %v886, 7
    %v888 = vsub.s32 0, %v887
    %v889 = vrot.slane %v619, %v888
    %891 = vbcast.lane.b32.xlu0 %v889, 256
    %v892 = vpop.permute.xlu0 %891
    %s894 = sor.u32 256, 8
    %895 = vbcast.lane.b32.xlu0 %v889, %s894
    %v896 = vpop.permute.xlu0 %895
    %v897 = vlaneseq
    %v898 = vshrl.u32 %v897, 7
    %v899 = vsub.s32 1, %v898
    %v900 = vrot.slane %v619, %v899
    %902 = vbcast.lane.b32.xlu0 %v900, 256
    %v903 = vpop.permute.xlu0 %902
    %s905 = sor.u32 256, 8
    %906 = vbcast.lane.b32.xlu0 %v900, %s905
    %v907 = vpop.permute.xlu0 %906
    %v908 = vlaneseq
    %v909 = vshrl.u32 %v908, 7
    %v910 = vsub.s32 2, %v909
    %v911 = vrot.slane %v619, %v910
    %913 = vbcast.lane.b32.xlu0 %v911, 256
    %v914 = vpop.permute.xlu0 %913
    %s916 = sor.u32 256, 8
    %917 = vbcast.lane.b32.xlu0 %v911, %s916
    %v918 = vpop.permute.xlu0 %917
    %v919 = vlaneseq
    %v920 = vshrl.u32 %v919, 7
    %v921 = vsub.s32 3, %v920
    %v922 = vrot.slane %v619, %v921
    %924 = vbcast.lane.b32.xlu0 %v922, 256
    %v925 = vpop.permute.xlu0 %924
    %s927 = sor.u32 256, 8
    %928 = vbcast.lane.b32.xlu0 %v922, %s927
    %v929 = vpop.permute.xlu0 %928
    %v930 = vlaneseq
    %v931 = vshrl.u32 %v930, 7
    %v932 = vsub.s32 4, %v931
    %v933 = vrot.slane %v619, %v932
    %935 = vbcast.lane.b32.xlu0 %v933, 256
    %v936 = vpop.permute.xlu0 %935
    %s938 = sor.u32 256, 8
    %939 = vbcast.lane.b32.xlu0 %v933, %s938
    %v940 = vpop.permute.xlu0 %939
    %v941 = vlaneseq
    %v942 = vshrl.u32 %v941, 7
    %v943 = vsub.s32 5, %v942
    %v944 = vrot.slane %v619, %v943
    %946 = vbcast.lane.b32.xlu0 %v944, 256
    %v947 = vpop.permute.xlu0 %946
    %s949 = sor.u32 256, 8
    %950 = vbcast.lane.b32.xlu0 %v944, %s949
    %v951 = vpop.permute.xlu0 %950
    %v952 = vlaneseq
    %v953 = vshrl.u32 %v952, 7
    %v954 = vsub.s32 6, %v953
    %v955 = vrot.slane %v619, %v954
    %957 = vbcast.lane.b32.xlu0 %v955, 256
    %v958 = vpop.permute.xlu0 %957
    %s960 = sor.u32 256, 8
    %961 = vbcast.lane.b32.xlu0 %v955, %s960
    %v962 = vpop.permute.xlu0 %961
    %v963 = vlaneseq
    %v964 = vshrl.u32 %v963, 7
    %v965 = vsub.s32 7, %v964
    %v966 = vrot.slane %v619, %v965
    %968 = vbcast.lane.b32.xlu0 %v966, 256
    %v969 = vpop.permute.xlu0 %968
    %s971 = sor.u32 256, 8
    %972 = vbcast.lane.b32.xlu0 %v966, %s971
    %v973 = vpop.permute.xlu0 %972
    %v974 = vlaneseq
    %v975 = vshrl.u32 %v974, 7
    %v976 = vsub.s32 0, %v975
    %v977 = vrot.slane %v620, %v976
    %979 = vbcast.lane.b32.xlu0 %v977, 256
    %v980 = vpop.permute.xlu0 %979
    %s982 = sor.u32 256, 8
    %983 = vbcast.lane.b32.xlu0 %v977, %s982
    %v984 = vpop.permute.xlu0 %983
    %v985 = vlaneseq
    %v986 = vshrl.u32 %v985, 7
    %v987 = vsub.s32 1, %v986
    %v988 = vrot.slane %v620, %v987
    %990 = vbcast.lane.b32.xlu0 %v988, 256
    %v991 = vpop.permute.xlu0 %990
    %s993 = sor.u32 256, 8
    %994 = vbcast.lane.b32.xlu0 %v988, %s993
    %v995 = vpop.permute.xlu0 %994
    %v996 = vlaneseq
    %v997 = vshrl.u32 %v996, 7
    %v998 = vsub.s32 2, %v997
    %v999 = vrot.slane %v620, %v998
    %1001 = vbcast.lane.b32.xlu0 %v999, 256
    %v1002 = vpop.permute.xlu0 %1001
    %s1004 = sor.u32 256, 8
    %1005 = vbcast.lane.b32.xlu0 %v999, %s1004
    %v1006 = vpop.permute.xlu0 %1005
    %v1007 = vlaneseq
    %v1008 = vshrl.u32 %v1007, 7
    %v1009 = vsub.s32 3, %v1008
    %v1010 = vrot.slane %v620, %v1009
    %1012 = vbcast.lane.b32.xlu0 %v1010, 256
    %v1013 = vpop.permute.xlu0 %1012
    %s1015 = sor.u32 256, 8
    %1016 = vbcast.lane.b32.xlu0 %v1010, %s1015
    %v1017 = vpop.permute.xlu0 %1016
    %v1018 = vlaneseq
    %v1019 = vshrl.u32 %v1018, 7
    %v1020 = vsub.s32 4, %v1019
    %v1021 = vrot.slane %v620, %v1020
    %1023 = vbcast.lane.b32.xlu0 %v1021, 256
    %v1024 = vpop.permute.xlu0 %1023
    %s1026 = sor.u32 256, 8
    %1027 = vbcast.lane.b32.xlu0 %v1021, %s1026
    %v1028 = vpop.permute.xlu0 %1027
    %v1029 = vlaneseq
    %v1030 = vshrl.u32 %v1029, 7
    %v1031 = vsub.s32 5, %v1030
    %v1032 = vrot.slane %v620, %v1031
    %1034 = vbcast.lane.b32.xlu0 %v1032, 256
    %v1035 = vpop.permute.xlu0 %1034
    %s1037 = sor.u32 256, 8
    %1038 = vbcast.lane.b32.xlu0 %v1032, %s1037
    %v1039 = vpop.permute.xlu0 %1038
    %v1040 = vlaneseq
    %v1041 = vshrl.u32 %v1040, 7
    %v1042 = vsub.s32 6, %v1041
    %v1043 = vrot.slane %v620, %v1042
    %1045 = vbcast.lane.b32.xlu0 %v1043, 256
    %v1046 = vpop.permute.xlu0 %1045
    %s1048 = sor.u32 256, 8
    %1049 = vbcast.lane.b32.xlu0 %v1043, %s1048
    %v1050 = vpop.permute.xlu0 %1049
    %v1051 = vlaneseq
    %v1052 = vshrl.u32 %v1051, 7
    %v1053 = vsub.s32 7, %v1052
    %v1054 = vrot.slane %v620, %v1053
    %1056 = vbcast.lane.b32.xlu0 %v1054, 256
    %v1057 = vpop.permute.xlu0 %1056
    %s1059 = sor.u32 256, 8
    %1060 = vbcast.lane.b32.xlu0 %v1054, %s1059
    %v1061 = vpop.permute.xlu0 %1060
    %v1062 = vlaneseq
    %v1063 = vshrl.u32 %v1062, 7
    %v1064 = vsub.s32 0, %v1063
    %v1065 = vrot.slane %v621, %v1064
    %1067 = vbcast.lane.b32.xlu0 %v1065, 256
    %v1068 = vpop.permute.xlu0 %1067
    %s1070 = sor.u32 256, 8
    %1071 = vbcast.lane.b32.xlu0 %v1065, %s1070
    %v1072 = vpop.permute.xlu0 %1071
    %v1073 = vlaneseq
    %v1074 = vshrl.u32 %v1073, 7
    %v1075 = vsub.s32 1, %v1074
    %v1076 = vrot.slane %v621, %v1075
    %1078 = vbcast.lane.b32.xlu0 %v1076, 256
    %v1079 = vpop.permute.xlu0 %1078
    %s1081 = sor.u32 256, 8
    %1082 = vbcast.lane.b32.xlu0 %v1076, %s1081
    %v1083 = vpop.permute.xlu0 %1082
    %v1084 = vlaneseq
    %v1085 = vshrl.u32 %v1084, 7
    %v1086 = vsub.s32 2, %v1085
    %v1087 = vrot.slane %v621, %v1086
    %1089 = vbcast.lane.b32.xlu0 %v1087, 256
    %v1090 = vpop.permute.xlu0 %1089
    %s1092 = sor.u32 256, 8
    %1093 = vbcast.lane.b32.xlu0 %v1087, %s1092
    %v1094 = vpop.permute.xlu0 %1093
    %v1095 = vlaneseq
    %v1096 = vshrl.u32 %v1095, 7
    %v1097 = vsub.s32 3, %v1096
    %v1098 = vrot.slane %v621, %v1097
    %1100 = vbcast.lane.b32.xlu0 %v1098, 256
    %v1101 = vpop.permute.xlu0 %1100
    %s1103 = sor.u32 256, 8
    %1104 = vbcast.lane.b32.xlu0 %v1098, %s1103
    %v1105 = vpop.permute.xlu0 %1104
    %v1106 = vlaneseq
    %v1107 = vshrl.u32 %v1106, 7
    %v1108 = vsub.s32 4, %v1107
    %v1109 = vrot.slane %v621, %v1108
    %1111 = vbcast.lane.b32.xlu0 %v1109, 256
    %v1112 = vpop.permute.xlu0 %1111
    %s1114 = sor.u32 256, 8
    %1115 = vbcast.lane.b32.xlu0 %v1109, %s1114
    %v1116 = vpop.permute.xlu0 %1115
    %v1117 = vlaneseq
    %v1118 = vshrl.u32 %v1117, 7
    %v1119 = vsub.s32 5, %v1118
    %v1120 = vrot.slane %v621, %v1119
    %1122 = vbcast.lane.b32.xlu0 %v1120, 256
    %v1123 = vpop.permute.xlu0 %1122
    %s1125 = sor.u32 256, 8
    %1126 = vbcast.lane.b32.xlu0 %v1120, %s1125
    %v1127 = vpop.permute.xlu0 %1126
    %v1128 = vlaneseq
    %v1129 = vshrl.u32 %v1128, 7
    %v1130 = vsub.s32 6, %v1129
    %v1131 = vrot.slane %v621, %v1130
    %1133 = vbcast.lane.b32.xlu0 %v1131, 256
    %v1134 = vpop.permute.xlu0 %1133
    %s1136 = sor.u32 256, 8
    %1137 = vbcast.lane.b32.xlu0 %v1131, %s1136
    %v1138 = vpop.permute.xlu0 %1137
    %v1139 = vlaneseq
    %v1140 = vshrl.u32 %v1139, 7
    %v1141 = vsub.s32 7, %v1140
    %v1142 = vrot.slane %v621, %v1141
    %1144 = vbcast.lane.b32.xlu0 %v1142, 256
    %v1145 = vpop.permute.xlu0 %1144
    %s1147 = sor.u32 256, 8
    %1148 = vbcast.lane.b32.xlu0 %v1142, %s1147
    %v1149 = vpop.permute.xlu0 %1148
    %v1150 = vmul.f32 %v40, %v628
    %v1151 = vmul.f32 %v41, %v628
    %v1152 = vmul.f32 %v42, %v628
    %v1153 = vmul.f32 %v43, %v628
    %v1154 = vmul.f32 %v44, %v628
    %v1155 = vmul.f32 %v45, %v628
    %v1156 = vmul.f32 %v46, %v632
    %v1157 = vmul.f32 %v47, %v632
    %v1158 = vmul.f32 %v48, %v632
    %v1159 = vmul.f32 %v49, %v632
    %v1160 = vmul.f32 %v50, %v632
    %v1161 = vmul.f32 %v51, %v632
    %v1162 = vmul.f32 %v52, %v639
    %v1163 = vmul.f32 %v53, %v639
    %v1164 = vmul.f32 %v54, %v639
    %v1165 = vmul.f32 %v55, %v639
    %v1166 = vmul.f32 %v56, %v639
    %v1167 = vmul.f32 %v57, %v639
    %v1168 = vmul.f32 %v58, %v643
    %v1169 = vmul.f32 %v59, %v643
    %v1170 = vmul.f32 %v60, %v643
    %v1171 = vmul.f32 %v61, %v643
    %v1172 = vmul.f32 %v62, %v643
    %v1173 = vmul.f32 %v63, %v643
    %v1174 = vmul.f32 %v64, %v650
    %v1175 = vmul.f32 %v65, %v650
    %v1176 = vmul.f32 %v66, %v650
    %v1177 = vmul.f32 %v67, %v650
    %v1178 = vmul.f32 %v68, %v650
    %v1179 = vmul.f32 %v69, %v650
    %v1180 = vmul.f32 %v70, %v654
    %v1181 = vmul.f32 %v71, %v654
    %v1182 = vmul.f32 %v72, %v654
    %v1183 = vmul.f32 %v73, %v654
    %v1184 = vmul.f32 %v74, %v654
    %v1185 = vmul.f32 %v75, %v654
    %v1186 = vmul.f32 %v76, %v661
    %v1187 = vmul.f32 %v77, %v661
    %v1188 = vmul.f32 %v78, %v661
    %v1189 = vmul.f32 %v79, %v661
    %v1190 = vmul.f32 %v80, %v661
    %v1191 = vmul.f32 %v81, %v661
    %v1192 = vmul.f32 %v82, %v665
    %v1193 = vmul.f32 %v83, %v665
    %v1194 = vmul.f32 %v84, %v665
    %v1195 = vmul.f32 %v85, %v665
    %v1196 = vmul.f32 %v86, %v665
    %v1197 = vmul.f32 %v87, %v665
    %v1198 = vmul.f32 %v88, %v672
    %v1199 = vmul.f32 %v89, %v672
    %v1200 = vmul.f32 %v90, %v672
    %v1201 = vmul.f32 %v91, %v672
    %v1202 = vmul.f32 %v92, %v672
    %v1203 = vmul.f32 %v93, %v672
    %v1204 = vmul.f32 %v94, %v676
    %v1205 = vmul.f32 %v95, %v676
    %v1206 = vmul.f32 %v96, %v676
    %v1207 = vmul.f32 %v97, %v676
    %v1208 = vmul.f32 %v98, %v676
    %v1209 = vmul.f32 %v99, %v676
    %v1210 = vmul.f32 %v100, %v683
    %v1211 = vmul.f32 %v101, %v683
    %v1212 = vmul.f32 %v102, %v683
    %v1213 = vmul.f32 %v103, %v683
    %v1214 = vmul.f32 %v104, %v683
    %v1215 = vmul.f32 %v105, %v683
    %v1216 = vmul.f32 %v106, %v687
    %v1217 = vmul.f32 %v107, %v687
    %v1218 = vmul.f32 %v108, %v687
    %v1219 = vmul.f32 %v109, %v687
    %v1220 = vmul.f32 %v110, %v687
    %v1221 = vmul.f32 %v111, %v687
    %v1222 = vmul.f32 %v112, %v694
    %v1223 = vmul.f32 %v113, %v694
    %v1224 = vmul.f32 %v114, %v694
    %v1225 = vmul.f32 %v115, %v694
    %v1226 = vmul.f32 %v116, %v694
    %v1227 = vmul.f32 %v117, %v694
    %v1228 = vmul.f32 %v118, %v698
    %v1229 = vmul.f32 %v119, %v698
    %v1230 = vmul.f32 %v120, %v698
    %v1231 = vmul.f32 %v121, %v698
    %v1232 = vmul.f32 %v122, %v698
    %v1233 = vmul.f32 %v123, %v698
    %v1234 = vmul.f32 %v124, %v705
    %v1235 = vmul.f32 %v125, %v705
    %v1236 = vmul.f32 %v126, %v705
    %v1237 = vmul.f32 %v127, %v705
    %v1238 = vmul.f32 %v128, %v705
    %v1239 = vmul.f32 %v129, %v705
    %v1240 = vmul.f32 %v130, %v709
    %v1241 = vmul.f32 %v131, %v709
    %v1242 = vmul.f32 %v132, %v709
    %v1243 = vmul.f32 %v133, %v709
    %v1244 = vmul.f32 %v134, %v709
    %v1245 = vmul.f32 %v135, %v709
    %v1246 = vmul.f32 %v136, %v716
    %v1247 = vmul.f32 %v137, %v716
    %v1248 = vmul.f32 %v138, %v716
    %v1249 = vmul.f32 %v139, %v716
    %v1250 = vmul.f32 %v140, %v716
    %v1251 = vmul.f32 %v141, %v716
    %v1252 = vmul.f32 %v142, %v720
    %v1253 = vmul.f32 %v143, %v720
    %v1254 = vmul.f32 %v144, %v720
    %v1255 = vmul.f32 %v145, %v720
    %v1256 = vmul.f32 %v146, %v720
    %v1257 = vmul.f32 %v147, %v720
    %v1258 = vmul.f32 %v148, %v727
    %v1259 = vmul.f32 %v149, %v727
    %v1260 = vmul.f32 %v150, %v727
    %v1261 = vmul.f32 %v151, %v727
    %v1262 = vmul.f32 %v152, %v727
    %v1263 = vmul.f32 %v153, %v727
    %v1264 = vmul.f32 %v154, %v731
    %v1265 = vmul.f32 %v155, %v731
    %v1266 = vmul.f32 %v156, %v731
    %v1267 = vmul.f32 %v157, %v731
    %v1268 = vmul.f32 %v158, %v731
    %v1269 = vmul.f32 %v159, %v731
    %v1270 = vmul.f32 %v160, %v738
    %v1271 = vmul.f32 %v161, %v738
    %v1272 = vmul.f32 %v162, %v738
    %v1273 = vmul.f32 %v163, %v738
    %v1274 = vmul.f32 %v164, %v738
    %v1275 = vmul.f32 %v165, %v738
    %v1276 = vmul.f32 %v166, %v742
    %v1277 = vmul.f32 %v167, %v742
    %v1278 = vmul.f32 %v168, %v742
    %v1279 = vmul.f32 %v169, %v742
    %v1280 = vmul.f32 %v170, %v742
    %v1281 = vmul.f32 %v171, %v742
    %v1282 = vmul.f32 %v172, %v749
    %v1283 = vmul.f32 %v173, %v749
    %v1284 = vmul.f32 %v174, %v749
    %v1285 = vmul.f32 %v175, %v749
    %v1286 = vmul.f32 %v176, %v749
    %v1287 = vmul.f32 %v177, %v749
    %v1288 = vmul.f32 %v178, %v753
    %v1289 = vmul.f32 %v179, %v753
    %v1290 = vmul.f32 %v180, %v753
    %v1291 = vmul.f32 %v181, %v753
    %v1292 = vmul.f32 %v182, %v753
    %v1293 = vmul.f32 %v183, %v753
    %v1294 = vmul.f32 %v184, %v760
    %v1295 = vmul.f32 %v185, %v760
    %v1296 = vmul.f32 %v186, %v760
    %v1297 = vmul.f32 %v187, %v760
    %v1298 = vmul.f32 %v188, %v760
    %v1299 = vmul.f32 %v189, %v760
    %v1300 = vmul.f32 %v190, %v764
    %v1301 = vmul.f32 %v191, %v764
    %v1302 = vmul.f32 %v192, %v764
    %v1303 = vmul.f32 %v193, %v764
    %v1304 = vmul.f32 %v194, %v764
    %v1305 = vmul.f32 %v195, %v764
    %v1306 = vmul.f32 %v196, %v771
    %v1307 = vmul.f32 %v197, %v771
    %v1308 = vmul.f32 %v198, %v771
    %v1309 = vmul.f32 %v199, %v771
    %v1310 = vmul.f32 %v200, %v771
    %v1311 = vmul.f32 %v201, %v771
    %v1312 = vmul.f32 %v202, %v775
    %v1313 = vmul.f32 %v203, %v775
    %v1314 = vmul.f32 %v204, %v775
    %v1315 = vmul.f32 %v205, %v775
    %v1316 = vmul.f32 %v206, %v775
    %v1317 = vmul.f32 %v207, %v775
    %v1318 = vmul.f32 %v208, %v782
    %v1319 = vmul.f32 %v209, %v782
    %v1320 = vmul.f32 %v210, %v782
    %v1321 = vmul.f32 %v211, %v782
    %v1322 = vmul.f32 %v212, %v782
    %v1323 = vmul.f32 %v213, %v782
    %v1324 = vmul.f32 %v214, %v786
    %v1325 = vmul.f32 %v215, %v786
    %v1326 = vmul.f32 %v216, %v786
    %v1327 = vmul.f32 %v217, %v786
    %v1328 = vmul.f32 %v218, %v786
    %v1329 = vmul.f32 %v219, %v786
    %v1330 = vmul.f32 %v220, %v793
    %v1331 = vmul.f32 %v221, %v793
    %v1332 = vmul.f32 %v222, %v793
    %v1333 = vmul.f32 %v223, %v793
    %v1334 = vmul.f32 %v224, %v793
    %v1335 = vmul.f32 %v225, %v793
    %v1336 = vmul.f32 %v226, %v797
    %v1337 = vmul.f32 %v227, %v797
    %v1338 = vmul.f32 %v228, %v797
    %v1339 = vmul.f32 %v229, %v797
    %v1340 = vmul.f32 %v230, %v797
    %v1341 = vmul.f32 %v231, %v797
    %v1342 = vmul.f32 %v232, %v804
    %v1343 = vmul.f32 %v233, %v804
    %v1344 = vmul.f32 %v234, %v804
    %v1345 = vmul.f32 %v235, %v804
    %v1346 = vmul.f32 %v236, %v804
    %v1347 = vmul.f32 %v237, %v804
    %v1348 = vmul.f32 %v238, %v808
    %v1349 = vmul.f32 %v239, %v808
    %v1350 = vmul.f32 %v240, %v808
    %v1351 = vmul.f32 %v241, %v808
    %v1352 = vmul.f32 %v242, %v808
    %v1353 = vmul.f32 %v243, %v808
    %v1354 = vmul.f32 %v244, %v815
    %v1355 = vmul.f32 %v245, %v815
    %v1356 = vmul.f32 %v246, %v815
    %v1357 = vmul.f32 %v247, %v815
    %v1358 = vmul.f32 %v248, %v815
    %v1359 = vmul.f32 %v249, %v815
    %v1360 = vmul.f32 %v250, %v819
    %v1361 = vmul.f32 %v251, %v819
    %v1362 = vmul.f32 %v252, %v819
    %v1363 = vmul.f32 %v253, %v819
    %v1364 = vmul.f32 %v254, %v819
    %v1365 = vmul.f32 %v255, %v819
    %v1366 = vmul.f32 %v256, %v826
    %v1367 = vmul.f32 %v257, %v826
    %v1368 = vmul.f32 %v258, %v826
    %v1369 = vmul.f32 %v259, %v826
    %v1370 = vmul.f32 %v260, %v826
    %v1371 = vmul.f32 %v261, %v826
    %v1372 = vmul.f32 %v262, %v830
    %v1373 = vmul.f32 %v263, %v830
    %v1374 = vmul.f32 %v264, %v830
    %v1375 = vmul.f32 %v265, %v830
    %v1376 = vmul.f32 %v266, %v830
    %v1377 = vmul.f32 %v267, %v830
    %v1378 = vmul.f32 %v268, %v837
    %v1379 = vmul.f32 %v269, %v837
    %v1380 = vmul.f32 %v270, %v837
    %v1381 = vmul.f32 %v271, %v837
    %v1382 = vmul.f32 %v272, %v837
    %v1383 = vmul.f32 %v273, %v837
    %v1384 = vmul.f32 %v274, %v841
    %v1385 = vmul.f32 %v275, %v841
    %v1386 = vmul.f32 %v276, %v841
    %v1387 = vmul.f32 %v277, %v841
    %v1388 = vmul.f32 %v278, %v841
    %v1389 = vmul.f32 %v279, %v841
    %v1390 = vmul.f32 %v280, %v848
    %v1391 = vmul.f32 %v281, %v848
    %v1392 = vmul.f32 %v282, %v848
    %v1393 = vmul.f32 %v283, %v848
    %v1394 = vmul.f32 %v284, %v848
    %v1395 = vmul.f32 %v285, %v848
    %v1396 = vmul.f32 %v286, %v852
    %v1397 = vmul.f32 %v287, %v852
    %v1398 = vmul.f32 %v288, %v852
    %v1399 = vmul.f32 %v289, %v852
    %v1400 = vmul.f32 %v290, %v852
    %v1401 = vmul.f32 %v291, %v852
    %v1402 = vmul.f32 %v292, %v859
    %v1403 = vmul.f32 %v293, %v859
    %v1404 = vmul.f32 %v294, %v859
    %v1405 = vmul.f32 %v295, %v859
    %v1406 = vmul.f32 %v296, %v859
    %v1407 = vmul.f32 %v297, %v859
    %v1408 = vmul.f32 %v298, %v863
    %v1409 = vmul.f32 %v299, %v863
    %v1410 = vmul.f32 %v300, %v863
    %v1411 = vmul.f32 %v301, %v863
    %v1412 = vmul.f32 %v302, %v863
    %v1413 = vmul.f32 %v303, %v863
    %v1414 = vmul.f32 %v304, %v870
    %v1415 = vmul.f32 %v305, %v870
    %v1416 = vmul.f32 %v306, %v870
    %v1417 = vmul.f32 %v307, %v870
    %v1418 = vmul.f32 %v308, %v870
    %v1419 = vmul.f32 %v309, %v870
    %v1420 = vmul.f32 %v310, %v874
    %v1421 = vmul.f32 %v311, %v874
    %v1422 = vmul.f32 %v312, %v874
    %v1423 = vmul.f32 %v313, %v874
    %v1424 = vmul.f32 %v314, %v874
    %v1425 = vmul.f32 %v315, %v874
    %v1426 = vmul.f32 %v316, %v881
    %v1427 = vmul.f32 %v317, %v881
    %v1428 = vmul.f32 %v318, %v881
    %v1429 = vmul.f32 %v319, %v881
    %v1430 = vmul.f32 %v320, %v881
    %v1431 = vmul.f32 %v321, %v881
    %v1432 = vmul.f32 %v322, %v885
    %v1433 = vmul.f32 %v323, %v885
    %v1434 = vmul.f32 %v324, %v885
    %v1435 = vmul.f32 %v325, %v885
    %v1436 = vmul.f32 %v326, %v885
    %v1437 = vmul.f32 %v327, %v885
    %v1438 = vmul.f32 %v328, %v892
    %v1439 = vmul.f32 %v329, %v892
    %v1440 = vmul.f32 %v330, %v892
    %v1441 = vmul.f32 %v331, %v892
    %v1442 = vmul.f32 %v332, %v892
    %v1443 = vmul.f32 %v333, %v892
    %v1444 = vmul.f32 %v334, %v896
    %v1445 = vmul.f32 %v335, %v896
    %v1446 = vmul.f32 %v336, %v896
    %v1447 = vmul.f32 %v337, %v896
    %v1448 = vmul.f32 %v338, %v896
    %v1449 = vmul.f32 %v339, %v896
    %v1450 = vmul.f32 %v340, %v903
    %v1451 = vmul.f32 %v341, %v903
    %v1452 = vmul.f32 %v342, %v903
    %v1453 = vmul.f32 %v343, %v903
    %v1454 = vmul.f32 %v344, %v903
    %v1455 = vmul.f32 %v345, %v903
    %v1456 = vmul.f32 %v346, %v907
    %v1457 = vmul.f32 %v347, %v907
    %v1458 = vmul.f32 %v348, %v907
    %v1459 = vmul.f32 %v349, %v907
    %v1460 = vmul.f32 %v350, %v907
    %v1461 = vmul.f32 %v351, %v907
    %v1462 = vmul.f32 %v352, %v914
    %v1463 = vmul.f32 %v353, %v914
    %v1464 = vmul.f32 %v354, %v914
    %v1465 = vmul.f32 %v355, %v914
    %v1466 = vmul.f32 %v356, %v914
    %v1467 = vmul.f32 %v357, %v914
    %v1468 = vmul.f32 %v358, %v918
    %v1469 = vmul.f32 %v359, %v918
    %v1470 = vmul.f32 %v360, %v918
    %v1471 = vmul.f32 %v361, %v918
    %v1472 = vmul.f32 %v362, %v918
    %v1473 = vmul.f32 %v363, %v918
    %v1474 = vmul.f32 %v364, %v925
    %v1475 = vmul.f32 %v365, %v925
    %v1476 = vmul.f32 %v366, %v925
    %v1477 = vmul.f32 %v367, %v925
    %v1478 = vmul.f32 %v368, %v925
    %v1479 = vmul.f32 %v369, %v925
    %v1480 = vmul.f32 %v370, %v929
    %v1481 = vmul.f32 %v371, %v929
    %v1482 = vmul.f32 %v372, %v929
    %v1483 = vmul.f32 %v373, %v929
    %v1484 = vmul.f32 %v374, %v929
    %v1485 = vmul.f32 %v375, %v929
    %v1486 = vmul.f32 %v376, %v936
    %v1487 = vmul.f32 %v377, %v936
    %v1488 = vmul.f32 %v378, %v936
    %v1489 = vmul.f32 %v379, %v936
    %v1490 = vmul.f32 %v380, %v936
    %v1491 = vmul.f32 %v381, %v936
    %v1492 = vmul.f32 %v382, %v940
    %v1493 = vmul.f32 %v383, %v940
    %v1494 = vmul.f32 %v384, %v940
    %v1495 = vmul.f32 %v385, %v940
    %v1496 = vmul.f32 %v386, %v940
    %v1497 = vmul.f32 %v387, %v940
    %v1498 = vmul.f32 %v388, %v947
    %v1499 = vmul.f32 %v389, %v947
    %v1500 = vmul.f32 %v390, %v947
    %v1501 = vmul.f32 %v391, %v947
    %v1502 = vmul.f32 %v392, %v947
    %v1503 = vmul.f32 %v393, %v947
    %v1504 = vmul.f32 %v394, %v951
    %v1505 = vmul.f32 %v395, %v951
    %v1506 = vmul.f32 %v396, %v951
    %v1507 = vmul.f32 %v397, %v951
    %v1508 = vmul.f32 %v398, %v951
    %v1509 = vmul.f32 %v399, %v951
    %v1510 = vmul.f32 %v400, %v958
    %v1511 = vmul.f32 %v401, %v958
    %v1512 = vmul.f32 %v402, %v958
    %v1513 = vmul.f32 %v403, %v958
    %v1514 = vmul.f32 %v404, %v958
    %v1515 = vmul.f32 %v405, %v958
    %v1516 = vmul.f32 %v406, %v962
    %v1517 = vmul.f32 %v407, %v962
    %v1518 = vmul.f32 %v408, %v962
    %v1519 = vmul.f32 %v409, %v962
    %v1520 = vmul.f32 %v410, %v962
    %v1521 = vmul.f32 %v411, %v962
    %v1522 = vmul.f32 %v412, %v969
    %v1523 = vmul.f32 %v413, %v969
    %v1524 = vmul.f32 %v414, %v969
    %v1525 = vmul.f32 %v415, %v969
    %v1526 = vmul.f32 %v416, %v969
    %v1527 = vmul.f32 %v417, %v969
    %v1528 = vmul.f32 %v418, %v973
    %v1529 = vmul.f32 %v419, %v973
    %v1530 = vmul.f32 %v420, %v973
    %v1531 = vmul.f32 %v421, %v973
    %v1532 = vmul.f32 %v422, %v973
    %v1533 = vmul.f32 %v423, %v973
    %v1534 = vmul.f32 %v424, %v980
    %v1535 = vmul.f32 %v425, %v980
    %v1536 = vmul.f32 %v426, %v980
    %v1537 = vmul.f32 %v427, %v980
    %v1538 = vmul.f32 %v428, %v980
    %v1539 = vmul.f32 %v429, %v980
    %v1540 = vmul.f32 %v430, %v984
    %v1541 = vmul.f32 %v431, %v984
    %v1542 = vmul.f32 %v432, %v984
    %v1543 = vmul.f32 %v433, %v984
    %v1544 = vmul.f32 %v434, %v984
    %v1545 = vmul.f32 %v435, %v984
    %v1546 = vmul.f32 %v436, %v991
    %v1547 = vmul.f32 %v437, %v991
    %v1548 = vmul.f32 %v438, %v991
    %v1549 = vmul.f32 %v439, %v991
    %v1550 = vmul.f32 %v440, %v991
    %v1551 = vmul.f32 %v441, %v991
    %v1552 = vmul.f32 %v442, %v995
    %v1553 = vmul.f32 %v443, %v995
    %v1554 = vmul.f32 %v444, %v995
    %v1555 = vmul.f32 %v445, %v995
    %v1556 = vmul.f32 %v446, %v995
    %v1557 = vmul.f32 %v447, %v995
    %v1558 = vmul.f32 %v448, %v1002
    %v1559 = vmul.f32 %v449, %v1002
    %v1560 = vmul.f32 %v450, %v1002
    %v1561 = vmul.f32 %v451, %v1002
    %v1562 = vmul.f32 %v452, %v1002
    %v1563 = vmul.f32 %v453, %v1002
    %v1564 = vmul.f32 %v454, %v1006
    %v1565 = vmul.f32 %v455, %v1006
    %v1566 = vmul.f32 %v456, %v1006
    %v1567 = vmul.f32 %v457, %v1006
    %v1568 = vmul.f32 %v458, %v1006
    %v1569 = vmul.f32 %v459, %v1006
    %v1570 = vmul.f32 %v460, %v1013
    %v1571 = vmul.f32 %v461, %v1013
    %v1572 = vmul.f32 %v462, %v1013
    %v1573 = vmul.f32 %v463, %v1013
    %v1574 = vmul.f32 %v464, %v1013
    %v1575 = vmul.f32 %v465, %v1013
    %v1576 = vmul.f32 %v466, %v1017
    %v1577 = vmul.f32 %v467, %v1017
    %v1578 = vmul.f32 %v468, %v1017
    %v1579 = vmul.f32 %v469, %v1017
    %v1580 = vmul.f32 %v470, %v1017
    %v1581 = vmul.f32 %v471, %v1017
    %v1582 = vmul.f32 %v472, %v1024
    %v1583 = vmul.f32 %v473, %v1024
    %v1584 = vmul.f32 %v474, %v1024
    %v1585 = vmul.f32 %v475, %v1024
    %v1586 = vmul.f32 %v476, %v1024
    %v1587 = vmul.f32 %v477, %v1024
    %v1588 = vmul.f32 %v478, %v1028
    %v1589 = vmul.f32 %v479, %v1028
    %v1590 = vmul.f32 %v480, %v1028
    %v1591 = vmul.f32 %v481, %v1028
    %v1592 = vmul.f32 %v482, %v1028
    %v1593 = vmul.f32 %v483, %v1028
    %v1594 = vmul.f32 %v484, %v1035
    %v1595 = vmul.f32 %v485, %v1035
    %v1596 = vmul.f32 %v486, %v1035
    %v1597 = vmul.f32 %v487, %v1035
    %v1598 = vmul.f32 %v488, %v1035
    %v1599 = vmul.f32 %v489, %v1035
    %v1600 = vmul.f32 %v490, %v1039
    %v1601 = vmul.f32 %v491, %v1039
    %v1602 = vmul.f32 %v492, %v1039
    %v1603 = vmul.f32 %v493, %v1039
    %v1604 = vmul.f32 %v494, %v1039
    %v1605 = vmul.f32 %v495, %v1039
    %v1606 = vmul.f32 %v496, %v1046
    %v1607 = vmul.f32 %v497, %v1046
    %v1608 = vmul.f32 %v498, %v1046
    %v1609 = vmul.f32 %v499, %v1046
    %v1610 = vmul.f32 %v500, %v1046
    %v1611 = vmul.f32 %v501, %v1046
    %v1612 = vmul.f32 %v502, %v1050
    %v1613 = vmul.f32 %v503, %v1050
    %v1614 = vmul.f32 %v504, %v1050
    %v1615 = vmul.f32 %v505, %v1050
    %v1616 = vmul.f32 %v506, %v1050
    %v1617 = vmul.f32 %v507, %v1050
    %v1618 = vmul.f32 %v508, %v1057
    %v1619 = vmul.f32 %v509, %v1057
    %v1620 = vmul.f32 %v510, %v1057
    %v1621 = vmul.f32 %v511, %v1057
    %v1622 = vmul.f32 %v512, %v1057
    %v1623 = vmul.f32 %v513, %v1057
    %v1624 = vmul.f32 %v514, %v1061
    %v1625 = vmul.f32 %v515, %v1061
    %v1626 = vmul.f32 %v516, %v1061
    %v1627 = vmul.f32 %v517, %v1061
    %v1628 = vmul.f32 %v518, %v1061
    %v1629 = vmul.f32 %v519, %v1061
    %v1630 = vmul.f32 %v520, %v1068
    %v1631 = vmul.f32 %v521, %v1068
    %v1632 = vmul.f32 %v522, %v1068
    %v1633 = vmul.f32 %v523, %v1068
    %v1634 = vmul.f32 %v524, %v1068
    %v1635 = vmul.f32 %v525, %v1068
    %v1636 = vmul.f32 %v526, %v1072
    %v1637 = vmul.f32 %v527, %v1072
    %v1638 = vmul.f32 %v528, %v1072
    %v1639 = vmul.f32 %v529, %v1072
    %v1640 = vmul.f32 %v530, %v1072
    %v1641 = vmul.f32 %v531, %v1072
    %v1642 = vmul.f32 %v532, %v1079
    %v1643 = vmul.f32 %v533, %v1079
    %v1644 = vmul.f32 %v534, %v1079
    %v1645 = vmul.f32 %v535, %v1079
    %v1646 = vmul.f32 %v536, %v1079
    %v1647 = vmul.f32 %v537, %v1079
    %v1648 = vmul.f32 %v538, %v1083
    %v1649 = vmul.f32 %v539, %v1083
    %v1650 = vmul.f32 %v540, %v1083
    %v1651 = vmul.f32 %v541, %v1083
    %v1652 = vmul.f32 %v542, %v1083
    %v1653 = vmul.f32 %v543, %v1083
    %v1654 = vmul.f32 %v544, %v1090
    %v1655 = vmul.f32 %v545, %v1090
    %v1656 = vmul.f32 %v546, %v1090
    %v1657 = vmul.f32 %v547, %v1090
    %v1658 = vmul.f32 %v548, %v1090
    %v1659 = vmul.f32 %v549, %v1090
    %v1660 = vmul.f32 %v550, %v1094
    %v1661 = vmul.f32 %v551, %v1094
    %v1662 = vmul.f32 %v552, %v1094
    %v1663 = vmul.f32 %v553, %v1094
    %v1664 = vmul.f32 %v554, %v1094
    %v1665 = vmul.f32 %v555, %v1094
    %v1666 = vmul.f32 %v556, %v1101
    %v1667 = vmul.f32 %v557, %v1101
    %v1668 = vmul.f32 %v558, %v1101
    %v1669 = vmul.f32 %v559, %v1101
    %v1670 = vmul.f32 %v560, %v1101
    %v1671 = vmul.f32 %v561, %v1101
    %v1672 = vmul.f32 %v562, %v1105
    %v1673 = vmul.f32 %v563, %v1105
    %v1674 = vmul.f32 %v564, %v1105
    %v1675 = vmul.f32 %v565, %v1105
    %v1676 = vmul.f32 %v566, %v1105
    %v1677 = vmul.f32 %v567, %v1105
    %v1678 = vmul.f32 %v568, %v1112
    %v1679 = vmul.f32 %v569, %v1112
    %v1680 = vmul.f32 %v570, %v1112
    %v1681 = vmul.f32 %v571, %v1112
    %v1682 = vmul.f32 %v572, %v1112
    %v1683 = vmul.f32 %v573, %v1112
    %v1684 = vmul.f32 %v574, %v1116
    %v1685 = vmul.f32 %v575, %v1116
    %v1686 = vmul.f32 %v576, %v1116
    %v1687 = vmul.f32 %v577, %v1116
    %v1688 = vmul.f32 %v578, %v1116
    %v1689 = vmul.f32 %v579, %v1116
    %v1690 = vmul.f32 %v580, %v1123
    %v1691 = vmul.f32 %v581, %v1123
    %v1692 = vmul.f32 %v582, %v1123
    %v1693 = vmul.f32 %v583, %v1123
    %v1694 = vmul.f32 %v584, %v1123
    %v1695 = vmul.f32 %v585, %v1123
    %v1696 = vmul.f32 %v586, %v1127
    %v1697 = vmul.f32 %v587, %v1127
    %v1698 = vmul.f32 %v588, %v1127
    %v1699 = vmul.f32 %v589, %v1127
    %v1700 = vmul.f32 %v590, %v1127
    %v1701 = vmul.f32 %v591, %v1127
    %v1702 = vmul.f32 %v592, %v1134
    %v1703 = vmul.f32 %v593, %v1134
    %v1704 = vmul.f32 %v594, %v1134
    %v1705 = vmul.f32 %v595, %v1134
    %v1706 = vmul.f32 %v596, %v1134
    %v1707 = vmul.f32 %v597, %v1134
    %v1708 = vmul.f32 %v598, %v1138
    %v1709 = vmul.f32 %v599, %v1138
    %v1710 = vmul.f32 %v600, %v1138
    %v1711 = vmul.f32 %v601, %v1138
    %v1712 = vmul.f32 %v602, %v1138
    %v1713 = vmul.f32 %v603, %v1138
    %v1714 = vmul.f32 %v604, %v1145
    %v1715 = vmul.f32 %v605, %v1145
    %v1716 = vmul.f32 %v606, %v1145
    %v1717 = vmul.f32 %v607, %v1145
    %v1718 = vmul.f32 %v608, %v1145
    %v1719 = vmul.f32 %v609, %v1145
    %v1720 = vmul.f32 %v610, %v1149
    %v1721 = vmul.f32 %v611, %v1149
    %v1722 = vmul.f32 %v612, %v1149
    %v1723 = vmul.f32 %v613, %v1149
    %v1724 = vmul.f32 %v614, %v1149
    %v1725 = vmul.f32 %v615, %v1149
    %v1726 = vadd.f32 %v1150, %v1156
    %v1727 = vrot.slane %v1726, 4
    %v1728 = vadd.f32 %v1726, %v1727
    %v1729 = vrot.slane %v1728, 2
    %v1730 = vadd.f32 %v1728, %v1729
    %v1731 = vrot.slane %v1730, 1
    %v1732 = vadd.f32 %v1730, %v1731
    %v1733 = vadd.f32 %v1151, %v1157
    %v1734 = vrot.slane %v1733, 4
    %v1735 = vadd.f32 %v1733, %v1734
    %v1736 = vrot.slane %v1735, 2
    %v1737 = vadd.f32 %v1735, %v1736
    %v1738 = vrot.slane %v1737, 1
    %v1739 = vadd.f32 %v1737, %v1738
    %v1740 = vadd.f32 %v1152, %v1158
    %v1741 = vrot.slane %v1740, 4
    %v1742 = vadd.f32 %v1740, %v1741
    %v1743 = vrot.slane %v1742, 2
    %v1744 = vadd.f32 %v1742, %v1743
    %v1745 = vrot.slane %v1744, 1
    %v1746 = vadd.f32 %v1744, %v1745
    %v1747 = vadd.f32 %v1153, %v1159
    %v1748 = vrot.slane %v1747, 4
    %v1749 = vadd.f32 %v1747, %v1748
    %v1750 = vrot.slane %v1749, 2
    %v1751 = vadd.f32 %v1749, %v1750
    %v1752 = vrot.slane %v1751, 1
    %v1753 = vadd.f32 %v1751, %v1752
    %v1754 = vadd.f32 %v1154, %v1160
    %v1755 = vrot.slane %v1754, 4
    %v1756 = vadd.f32 %v1754, %v1755
    %v1757 = vrot.slane %v1756, 2
    %v1758 = vadd.f32 %v1756, %v1757
    %v1759 = vrot.slane %v1758, 1
    %v1760 = vadd.f32 %v1758, %v1759
    %v1761 = vadd.f32 %v1155, %v1161
    %v1762 = vrot.slane %v1761, 4
    %v1763 = vadd.f32 %v1761, %v1762
    %v1764 = vrot.slane %v1763, 2
    %v1765 = vadd.f32 %v1763, %v1764
    %v1766 = vrot.slane %v1765, 1
    %v1767 = vadd.f32 %v1765, %v1766
    %v1768 = vadd.f32 %v1162, %v1168
    %v1769 = vrot.slane %v1768, 4
    %v1770 = vadd.f32 %v1768, %v1769
    %v1771 = vrot.slane %v1770, 2
    %v1772 = vadd.f32 %v1770, %v1771
    %v1773 = vrot.slane %v1772, 1
    %v1774 = vadd.f32 %v1772, %v1773
    %v1775 = vadd.f32 %v1163, %v1169
    %v1776 = vrot.slane %v1775, 4
    %v1777 = vadd.f32 %v1775, %v1776
    %v1778 = vrot.slane %v1777, 2
    %v1779 = vadd.f32 %v1777, %v1778
    %v1780 = vrot.slane %v1779, 1
    %v1781 = vadd.f32 %v1779, %v1780
    %v1782 = vadd.f32 %v1164, %v1170
    %v1783 = vrot.slane %v1782, 4
    %v1784 = vadd.f32 %v1782, %v1783
    %v1785 = vrot.slane %v1784, 2
    %v1786 = vadd.f32 %v1784, %v1785
    %v1787 = vrot.slane %v1786, 1
    %v1788 = vadd.f32 %v1786, %v1787
    %v1789 = vadd.f32 %v1165, %v1171
    %v1790 = vrot.slane %v1789, 4
    %v1791 = vadd.f32 %v1789, %v1790
    %v1792 = vrot.slane %v1791, 2
    %v1793 = vadd.f32 %v1791, %v1792
    %v1794 = vrot.slane %v1793, 1
    %v1795 = vadd.f32 %v1793, %v1794
    %v1796 = vadd.f32 %v1166, %v1172
    %v1797 = vrot.slane %v1796, 4
    %v1798 = vadd.f32 %v1796, %v1797
    %v1799 = vrot.slane %v1798, 2
    %v1800 = vadd.f32 %v1798, %v1799
    %v1801 = vrot.slane %v1800, 1
    %v1802 = vadd.f32 %v1800, %v1801
    %v1803 = vadd.f32 %v1167, %v1173
    %v1804 = vrot.slane %v1803, 4
    %v1805 = vadd.f32 %v1803, %v1804
    %v1806 = vrot.slane %v1805, 2
    %v1807 = vadd.f32 %v1805, %v1806
    %v1808 = vrot.slane %v1807, 1
    %v1809 = vadd.f32 %v1807, %v1808
    %v1810 = vadd.f32 %v1174, %v1180
    %v1811 = vrot.slane %v1810, 4
    %v1812 = vadd.f32 %v1810, %v1811
    %v1813 = vrot.slane %v1812, 2
    %v1814 = vadd.f32 %v1812, %v1813
    %v1815 = vrot.slane %v1814, 1
    %v1816 = vadd.f32 %v1814, %v1815
    %v1817 = vadd.f32 %v1175, %v1181
    %v1818 = vrot.slane %v1817, 4
    %v1819 = vadd.f32 %v1817, %v1818
    %v1820 = vrot.slane %v1819, 2
    %v1821 = vadd.f32 %v1819, %v1820
    %v1822 = vrot.slane %v1821, 1
    %v1823 = vadd.f32 %v1821, %v1822
    %v1824 = vadd.f32 %v1176, %v1182
    %v1825 = vrot.slane %v1824, 4
    %v1826 = vadd.f32 %v1824, %v1825
    %v1827 = vrot.slane %v1826, 2
    %v1828 = vadd.f32 %v1826, %v1827
    %v1829 = vrot.slane %v1828, 1
    %v1830 = vadd.f32 %v1828, %v1829
    %v1831 = vadd.f32 %v1177, %v1183
    %v1832 = vrot.slane %v1831, 4
    %v1833 = vadd.f32 %v1831, %v1832
    %v1834 = vrot.slane %v1833, 2
    %v1835 = vadd.f32 %v1833, %v1834
    %v1836 = vrot.slane %v1835, 1
    %v1837 = vadd.f32 %v1835, %v1836
    %v1838 = vadd.f32 %v1178, %v1184
    %v1839 = vrot.slane %v1838, 4
    %v1840 = vadd.f32 %v1838, %v1839
    %v1841 = vrot.slane %v1840, 2
    %v1842 = vadd.f32 %v1840, %v1841
    %v1843 = vrot.slane %v1842, 1
    %v1844 = vadd.f32 %v1842, %v1843
    %v1845 = vadd.f32 %v1179, %v1185
    %v1846 = vrot.slane %v1845, 4
    %v1847 = vadd.f32 %v1845, %v1846
    %v1848 = vrot.slane %v1847, 2
    %v1849 = vadd.f32 %v1847, %v1848
    %v1850 = vrot.slane %v1849, 1
    %v1851 = vadd.f32 %v1849, %v1850
    %v1852 = vadd.f32 %v1186, %v1192
    %v1853 = vrot.slane %v1852, 4
    %v1854 = vadd.f32 %v1852, %v1853
    %v1855 = vrot.slane %v1854, 2
    %v1856 = vadd.f32 %v1854, %v1855
    %v1857 = vrot.slane %v1856, 1
    %v1858 = vadd.f32 %v1856, %v1857
    %v1859 = vadd.f32 %v1187, %v1193
    %v1860 = vrot.slane %v1859, 4
    %v1861 = vadd.f32 %v1859, %v1860
    %v1862 = vrot.slane %v1861, 2
    %v1863 = vadd.f32 %v1861, %v1862
    %v1864 = vrot.slane %v1863, 1
    %v1865 = vadd.f32 %v1863, %v1864
    %v1866 = vadd.f32 %v1188, %v1194
    %v1867 = vrot.slane %v1866, 4
    %v1868 = vadd.f32 %v1866, %v1867
    %v1869 = vrot.slane %v1868, 2
    %v1870 = vadd.f32 %v1868, %v1869
    %v1871 = vrot.slane %v1870, 1
    %v1872 = vadd.f32 %v1870, %v1871
    %v1873 = vadd.f32 %v1189, %v1195
    %v1874 = vrot.slane %v1873, 4
    %v1875 = vadd.f32 %v1873, %v1874
    %v1876 = vrot.slane %v1875, 2
    %v1877 = vadd.f32 %v1875, %v1876
    %v1878 = vrot.slane %v1877, 1
    %v1879 = vadd.f32 %v1877, %v1878
    %v1880 = vadd.f32 %v1190, %v1196
    %v1881 = vrot.slane %v1880, 4
    %v1882 = vadd.f32 %v1880, %v1881
    %v1883 = vrot.slane %v1882, 2
    %v1884 = vadd.f32 %v1882, %v1883
    %v1885 = vrot.slane %v1884, 1
    %v1886 = vadd.f32 %v1884, %v1885
    %v1887 = vadd.f32 %v1191, %v1197
    %v1888 = vrot.slane %v1887, 4
    %v1889 = vadd.f32 %v1887, %v1888
    %v1890 = vrot.slane %v1889, 2
    %v1891 = vadd.f32 %v1889, %v1890
    %v1892 = vrot.slane %v1891, 1
    %v1893 = vadd.f32 %v1891, %v1892
    %v1894 = vadd.f32 %v1198, %v1204
    %v1895 = vrot.slane %v1894, 4
    %v1896 = vadd.f32 %v1894, %v1895
    %v1897 = vrot.slane %v1896, 2
    %v1898 = vadd.f32 %v1896, %v1897
    %v1899 = vrot.slane %v1898, 1
    %v1900 = vadd.f32 %v1898, %v1899
    %v1901 = vadd.f32 %v1199, %v1205
    %v1902 = vrot.slane %v1901, 4
    %v1903 = vadd.f32 %v1901, %v1902
    %v1904 = vrot.slane %v1903, 2
    %v1905 = vadd.f32 %v1903, %v1904
    %v1906 = vrot.slane %v1905, 1
    %v1907 = vadd.f32 %v1905, %v1906
    %v1908 = vadd.f32 %v1200, %v1206
    %v1909 = vrot.slane %v1908, 4
    %v1910 = vadd.f32 %v1908, %v1909
    %v1911 = vrot.slane %v1910, 2
    %v1912 = vadd.f32 %v1910, %v1911
    %v1913 = vrot.slane %v1912, 1
    %v1914 = vadd.f32 %v1912, %v1913
    %v1915 = vadd.f32 %v1201, %v1207
    %v1916 = vrot.slane %v1915, 4
    %v1917 = vadd.f32 %v1915, %v1916
    %v1918 = vrot.slane %v1917, 2
    %v1919 = vadd.f32 %v1917, %v1918
    %v1920 = vrot.slane %v1919, 1
    %v1921 = vadd.f32 %v1919, %v1920
    %v1922 = vadd.f32 %v1202, %v1208
    %v1923 = vrot.slane %v1922, 4
    %v1924 = vadd.f32 %v1922, %v1923
    %v1925 = vrot.slane %v1924, 2
    %v1926 = vadd.f32 %v1924, %v1925
    %v1927 = vrot.slane %v1926, 1
    %v1928 = vadd.f32 %v1926, %v1927
    %v1929 = vadd.f32 %v1203, %v1209
    %v1930 = vrot.slane %v1929, 4
    %v1931 = vadd.f32 %v1929, %v1930
    %v1932 = vrot.slane %v1931, 2
    %v1933 = vadd.f32 %v1931, %v1932
    %v1934 = vrot.slane %v1933, 1
    %v1935 = vadd.f32 %v1933, %v1934
    %v1936 = vadd.f32 %v1210, %v1216
    %v1937 = vrot.slane %v1936, 4
    %v1938 = vadd.f32 %v1936, %v1937
    %v1939 = vrot.slane %v1938, 2
    %v1940 = vadd.f32 %v1938, %v1939
    %v1941 = vrot.slane %v1940, 1
    %v1942 = vadd.f32 %v1940, %v1941
    %v1943 = vadd.f32 %v1211, %v1217
    %v1944 = vrot.slane %v1943, 4
    %v1945 = vadd.f32 %v1943, %v1944
    %v1946 = vrot.slane %v1945, 2
    %v1947 = vadd.f32 %v1945, %v1946
    %v1948 = vrot.slane %v1947, 1
    %v1949 = vadd.f32 %v1947, %v1948
    %v1950 = vadd.f32 %v1212, %v1218
    %v1951 = vrot.slane %v1950, 4
    %v1952 = vadd.f32 %v1950, %v1951
    %v1953 = vrot.slane %v1952, 2
    %v1954 = vadd.f32 %v1952, %v1953
    %v1955 = vrot.slane %v1954, 1
    %v1956 = vadd.f32 %v1954, %v1955
    %v1957 = vadd.f32 %v1213, %v1219
    %v1958 = vrot.slane %v1957, 4
    %v1959 = vadd.f32 %v1957, %v1958
    %v1960 = vrot.slane %v1959, 2
    %v1961 = vadd.f32 %v1959, %v1960
    %v1962 = vrot.slane %v1961, 1
    %v1963 = vadd.f32 %v1961, %v1962
    %v1964 = vadd.f32 %v1214, %v1220
    %v1965 = vrot.slane %v1964, 4
    %v1966 = vadd.f32 %v1964, %v1965
    %v1967 = vrot.slane %v1966, 2
    %v1968 = vadd.f32 %v1966, %v1967
    %v1969 = vrot.slane %v1968, 1
    %v1970 = vadd.f32 %v1968, %v1969
    %v1971 = vadd.f32 %v1215, %v1221
    %v1972 = vrot.slane %v1971, 4
    %v1973 = vadd.f32 %v1971, %v1972
    %v1974 = vrot.slane %v1973, 2
    %v1975 = vadd.f32 %v1973, %v1974
    %v1976 = vrot.slane %v1975, 1
    %v1977 = vadd.f32 %v1975, %v1976
    %v1978 = vadd.f32 %v1222, %v1228
    %v1979 = vrot.slane %v1978, 4
    %v1980 = vadd.f32 %v1978, %v1979
    %v1981 = vrot.slane %v1980, 2
    %v1982 = vadd.f32 %v1980, %v1981
    %v1983 = vrot.slane %v1982, 1
    %v1984 = vadd.f32 %v1982, %v1983
    %v1985 = vadd.f32 %v1223, %v1229
    %v1986 = vrot.slane %v1985, 4
    %v1987 = vadd.f32 %v1985, %v1986
    %v1988 = vrot.slane %v1987, 2
    %v1989 = vadd.f32 %v1987, %v1988
    %v1990 = vrot.slane %v1989, 1
    %v1991 = vadd.f32 %v1989, %v1990
    %v1992 = vadd.f32 %v1224, %v1230
    %v1993 = vrot.slane %v1992, 4
    %v1994 = vadd.f32 %v1992, %v1993
    %v1995 = vrot.slane %v1994, 2
    %v1996 = vadd.f32 %v1994, %v1995
    %v1997 = vrot.slane %v1996, 1
    %v1998 = vadd.f32 %v1996, %v1997
    %v1999 = vadd.f32 %v1225, %v1231
    %v2000 = vrot.slane %v1999, 4
    %v2001 = vadd.f32 %v1999, %v2000
    %v2002 = vrot.slane %v2001, 2
    %v2003 = vadd.f32 %v2001, %v2002
    %v2004 = vrot.slane %v2003, 1
    %v2005 = vadd.f32 %v2003, %v2004
    %v2006 = vadd.f32 %v1226, %v1232
    %v2007 = vrot.slane %v2006, 4
    %v2008 = vadd.f32 %v2006, %v2007
    %v2009 = vrot.slane %v2008, 2
    %v2010 = vadd.f32 %v2008, %v2009
    %v2011 = vrot.slane %v2010, 1
    %v2012 = vadd.f32 %v2010, %v2011
    %v2013 = vadd.f32 %v1227, %v1233
    %v2014 = vrot.slane %v2013, 4
    %v2015 = vadd.f32 %v2013, %v2014
    %v2016 = vrot.slane %v2015, 2
    %v2017 = vadd.f32 %v2015, %v2016
    %v2018 = vrot.slane %v2017, 1
    %v2019 = vadd.f32 %v2017, %v2018
    %v2020 = vadd.f32 %v1234, %v1240
    %v2021 = vrot.slane %v2020, 4
    %v2022 = vadd.f32 %v2020, %v2021
    %v2023 = vrot.slane %v2022, 2
    %v2024 = vadd.f32 %v2022, %v2023
    %v2025 = vrot.slane %v2024, 1
    %v2026 = vadd.f32 %v2024, %v2025
    %v2027 = vadd.f32 %v1235, %v1241
    %v2028 = vrot.slane %v2027, 4
    %v2029 = vadd.f32 %v2027, %v2028
    %v2030 = vrot.slane %v2029, 2
    %v2031 = vadd.f32 %v2029, %v2030
    %v2032 = vrot.slane %v2031, 1
    %v2033 = vadd.f32 %v2031, %v2032
    %v2034 = vadd.f32 %v1236, %v1242
    %v2035 = vrot.slane %v2034, 4
    %v2036 = vadd.f32 %v2034, %v2035
    %v2037 = vrot.slane %v2036, 2
    %v2038 = vadd.f32 %v2036, %v2037
    %v2039 = vrot.slane %v2038, 1
    %v2040 = vadd.f32 %v2038, %v2039
    %v2041 = vadd.f32 %v1237, %v1243
    %v2042 = vrot.slane %v2041, 4
    %v2043 = vadd.f32 %v2041, %v2042
    %v2044 = vrot.slane %v2043, 2
    %v2045 = vadd.f32 %v2043, %v2044
    %v2046 = vrot.slane %v2045, 1
    %v2047 = vadd.f32 %v2045, %v2046
    %v2048 = vadd.f32 %v1238, %v1244
    %v2049 = vrot.slane %v2048, 4
    %v2050 = vadd.f32 %v2048, %v2049
    %v2051 = vrot.slane %v2050, 2
    %v2052 = vadd.f32 %v2050, %v2051
    %v2053 = vrot.slane %v2052, 1
    %v2054 = vadd.f32 %v2052, %v2053
    %v2055 = vadd.f32 %v1239, %v1245
    %v2056 = vrot.slane %v2055, 4
    %v2057 = vadd.f32 %v2055, %v2056
    %v2058 = vrot.slane %v2057, 2
    %v2059 = vadd.f32 %v2057, %v2058
    %v2060 = vrot.slane %v2059, 1
    %v2061 = vadd.f32 %v2059, %v2060
    %v2062 = vadd.f32 %v1246, %v1252
    %v2063 = vrot.slane %v2062, 4
    %v2064 = vadd.f32 %v2062, %v2063
    %v2065 = vrot.slane %v2064, 2
    %v2066 = vadd.f32 %v2064, %v2065
    %v2067 = vrot.slane %v2066, 1
    %v2068 = vadd.f32 %v2066, %v2067
    %v2069 = vadd.f32 %v1247, %v1253
    %v2070 = vrot.slane %v2069, 4
    %v2071 = vadd.f32 %v2069, %v2070
    %v2072 = vrot.slane %v2071, 2
    %v2073 = vadd.f32 %v2071, %v2072
    %v2074 = vrot.slane %v2073, 1
    %v2075 = vadd.f32 %v2073, %v2074
    %v2076 = vadd.f32 %v1248, %v1254
    %v2077 = vrot.slane %v2076, 4
    %v2078 = vadd.f32 %v2076, %v2077
    %v2079 = vrot.slane %v2078, 2
    %v2080 = vadd.f32 %v2078, %v2079
    %v2081 = vrot.slane %v2080, 1
    %v2082 = vadd.f32 %v2080, %v2081
    %v2083 = vadd.f32 %v1249, %v1255
    %v2084 = vrot.slane %v2083, 4
    %v2085 = vadd.f32 %v2083, %v2084
    %v2086 = vrot.slane %v2085, 2
    %v2087 = vadd.f32 %v2085, %v2086
    %v2088 = vrot.slane %v2087, 1
    %v2089 = vadd.f32 %v2087, %v2088
    %v2090 = vadd.f32 %v1250, %v1256
    %v2091 = vrot.slane %v2090, 4
    %v2092 = vadd.f32 %v2090, %v2091
    %v2093 = vrot.slane %v2092, 2
    %v2094 = vadd.f32 %v2092, %v2093
    %v2095 = vrot.slane %v2094, 1
    %v2096 = vadd.f32 %v2094, %v2095
    %v2097 = vadd.f32 %v1251, %v1257
    %v2098 = vrot.slane %v2097, 4
    %v2099 = vadd.f32 %v2097, %v2098
    %v2100 = vrot.slane %v2099, 2
    %v2101 = vadd.f32 %v2099, %v2100
    %v2102 = vrot.slane %v2101, 1
    %v2103 = vadd.f32 %v2101, %v2102
    %v2104 = vadd.f32 %v1258, %v1264
    %v2105 = vrot.slane %v2104, 4
    %v2106 = vadd.f32 %v2104, %v2105
    %v2107 = vrot.slane %v2106, 2
    %v2108 = vadd.f32 %v2106, %v2107
    %v2109 = vrot.slane %v2108, 1
    %v2110 = vadd.f32 %v2108, %v2109
    %v2111 = vadd.f32 %v1259, %v1265
    %v2112 = vrot.slane %v2111, 4
    %v2113 = vadd.f32 %v2111, %v2112
    %v2114 = vrot.slane %v2113, 2
    %v2115 = vadd.f32 %v2113, %v2114
    %v2116 = vrot.slane %v2115, 1
    %v2117 = vadd.f32 %v2115, %v2116
    %v2118 = vadd.f32 %v1260, %v1266
    %v2119 = vrot.slane %v2118, 4
    %v2120 = vadd.f32 %v2118, %v2119
    %v2121 = vrot.slane %v2120, 2
    %v2122 = vadd.f32 %v2120, %v2121
    %v2123 = vrot.slane %v2122, 1
    %v2124 = vadd.f32 %v2122, %v2123
    %v2125 = vadd.f32 %v1261, %v1267
    %v2126 = vrot.slane %v2125, 4
    %v2127 = vadd.f32 %v2125, %v2126
    %v2128 = vrot.slane %v2127, 2
    %v2129 = vadd.f32 %v2127, %v2128
    %v2130 = vrot.slane %v2129, 1
    %v2131 = vadd.f32 %v2129, %v2130
    %v2132 = vadd.f32 %v1262, %v1268
    %v2133 = vrot.slane %v2132, 4
    %v2134 = vadd.f32 %v2132, %v2133
    %v2135 = vrot.slane %v2134, 2
    %v2136 = vadd.f32 %v2134, %v2135
    %v2137 = vrot.slane %v2136, 1
    %v2138 = vadd.f32 %v2136, %v2137
    %v2139 = vadd.f32 %v1263, %v1269
    %v2140 = vrot.slane %v2139, 4
    %v2141 = vadd.f32 %v2139, %v2140
    %v2142 = vrot.slane %v2141, 2
    %v2143 = vadd.f32 %v2141, %v2142
    %v2144 = vrot.slane %v2143, 1
    %v2145 = vadd.f32 %v2143, %v2144
    %v2146 = vadd.f32 %v1270, %v1276
    %v2147 = vrot.slane %v2146, 4
    %v2148 = vadd.f32 %v2146, %v2147
    %v2149 = vrot.slane %v2148, 2
    %v2150 = vadd.f32 %v2148, %v2149
    %v2151 = vrot.slane %v2150, 1
    %v2152 = vadd.f32 %v2150, %v2151
    %v2153 = vadd.f32 %v1271, %v1277
    %v2154 = vrot.slane %v2153, 4
    %v2155 = vadd.f32 %v2153, %v2154
    %v2156 = vrot.slane %v2155, 2
    %v2157 = vadd.f32 %v2155, %v2156
    %v2158 = vrot.slane %v2157, 1
    %v2159 = vadd.f32 %v2157, %v2158
    %v2160 = vadd.f32 %v1272, %v1278
    %v2161 = vrot.slane %v2160, 4
    %v2162 = vadd.f32 %v2160, %v2161
    %v2163 = vrot.slane %v2162, 2
    %v2164 = vadd.f32 %v2162, %v2163
    %v2165 = vrot.slane %v2164, 1
    %v2166 = vadd.f32 %v2164, %v2165
    %v2167 = vadd.f32 %v1273, %v1279
    %v2168 = vrot.slane %v2167, 4
    %v2169 = vadd.f32 %v2167, %v2168
    %v2170 = vrot.slane %v2169, 2
    %v2171 = vadd.f32 %v2169, %v2170
    %v2172 = vrot.slane %v2171, 1
    %v2173 = vadd.f32 %v2171, %v2172
    %v2174 = vadd.f32 %v1274, %v1280
    %v2175 = vrot.slane %v2174, 4
    %v2176 = vadd.f32 %v2174, %v2175
    %v2177 = vrot.slane %v2176, 2
    %v2178 = vadd.f32 %v2176, %v2177
    %v2179 = vrot.slane %v2178, 1
    %v2180 = vadd.f32 %v2178, %v2179
    %v2181 = vadd.f32 %v1275, %v1281
    %v2182 = vrot.slane %v2181, 4
    %v2183 = vadd.f32 %v2181, %v2182
    %v2184 = vrot.slane %v2183, 2
    %v2185 = vadd.f32 %v2183, %v2184
    %v2186 = vrot.slane %v2185, 1
    %v2187 = vadd.f32 %v2185, %v2186
    %v2188 = vadd.f32 %v1282, %v1288
    %v2189 = vrot.slane %v2188, 4
    %v2190 = vadd.f32 %v2188, %v2189
    %v2191 = vrot.slane %v2190, 2
    %v2192 = vadd.f32 %v2190, %v2191
    %v2193 = vrot.slane %v2192, 1
    %v2194 = vadd.f32 %v2192, %v2193
    %v2195 = vadd.f32 %v1283, %v1289
    %v2196 = vrot.slane %v2195, 4
    %v2197 = vadd.f32 %v2195, %v2196
    %v2198 = vrot.slane %v2197, 2
    %v2199 = vadd.f32 %v2197, %v2198
    %v2200 = vrot.slane %v2199, 1
    %v2201 = vadd.f32 %v2199, %v2200
    %v2202 = vadd.f32 %v1284, %v1290
    %v2203 = vrot.slane %v2202, 4
    %v2204 = vadd.f32 %v2202, %v2203
    %v2205 = vrot.slane %v2204, 2
    %v2206 = vadd.f32 %v2204, %v2205
    %v2207 = vrot.slane %v2206, 1
    %v2208 = vadd.f32 %v2206, %v2207
    %v2209 = vadd.f32 %v1285, %v1291
    %v2210 = vrot.slane %v2209, 4
    %v2211 = vadd.f32 %v2209, %v2210
    %v2212 = vrot.slane %v2211, 2
    %v2213 = vadd.f32 %v2211, %v2212
    %v2214 = vrot.slane %v2213, 1
    %v2215 = vadd.f32 %v2213, %v2214
    %v2216 = vadd.f32 %v1286, %v1292
    %v2217 = vrot.slane %v2216, 4
    %v2218 = vadd.f32 %v2216, %v2217
    %v2219 = vrot.slane %v2218, 2
    %v2220 = vadd.f32 %v2218, %v2219
    %v2221 = vrot.slane %v2220, 1
    %v2222 = vadd.f32 %v2220, %v2221
    %v2223 = vadd.f32 %v1287, %v1293
    %v2224 = vrot.slane %v2223, 4
    %v2225 = vadd.f32 %v2223, %v2224
    %v2226 = vrot.slane %v2225, 2
    %v2227 = vadd.f32 %v2225, %v2226
    %v2228 = vrot.slane %v2227, 1
    %v2229 = vadd.f32 %v2227, %v2228
    %v2230 = vadd.f32 %v1294, %v1300
    %v2231 = vrot.slane %v2230, 4
    %v2232 = vadd.f32 %v2230, %v2231
    %v2233 = vrot.slane %v2232, 2
    %v2234 = vadd.f32 %v2232, %v2233
    %v2235 = vrot.slane %v2234, 1
    %v2236 = vadd.f32 %v2234, %v2235
    %v2237 = vadd.f32 %v1295, %v1301
    %v2238 = vrot.slane %v2237, 4
    %v2239 = vadd.f32 %v2237, %v2238
    %v2240 = vrot.slane %v2239, 2
    %v2241 = vadd.f32 %v2239, %v2240
    %v2242 = vrot.slane %v2241, 1
    %v2243 = vadd.f32 %v2241, %v2242
    %v2244 = vadd.f32 %v1296, %v1302
    %v2245 = vrot.slane %v2244, 4
    %v2246 = vadd.f32 %v2244, %v2245
    %v2247 = vrot.slane %v2246, 2
    %v2248 = vadd.f32 %v2246, %v2247
    %v2249 = vrot.slane %v2248, 1
    %v2250 = vadd.f32 %v2248, %v2249
    %v2251 = vadd.f32 %v1297, %v1303
    %v2252 = vrot.slane %v2251, 4
    %v2253 = vadd.f32 %v2251, %v2252
    %v2254 = vrot.slane %v2253, 2
    %v2255 = vadd.f32 %v2253, %v2254
    %v2256 = vrot.slane %v2255, 1
    %v2257 = vadd.f32 %v2255, %v2256
    %v2258 = vadd.f32 %v1298, %v1304
    %v2259 = vrot.slane %v2258, 4
    %v2260 = vadd.f32 %v2258, %v2259
    %v2261 = vrot.slane %v2260, 2
    %v2262 = vadd.f32 %v2260, %v2261
    %v2263 = vrot.slane %v2262, 1
    %v2264 = vadd.f32 %v2262, %v2263
    %v2265 = vadd.f32 %v1299, %v1305
    %v2266 = vrot.slane %v2265, 4
    %v2267 = vadd.f32 %v2265, %v2266
    %v2268 = vrot.slane %v2267, 2
    %v2269 = vadd.f32 %v2267, %v2268
    %v2270 = vrot.slane %v2269, 1
    %v2271 = vadd.f32 %v2269, %v2270
    %v2272 = vadd.f32 %v1306, %v1312
    %v2273 = vrot.slane %v2272, 4
    %v2274 = vadd.f32 %v2272, %v2273
    %v2275 = vrot.slane %v2274, 2
    %v2276 = vadd.f32 %v2274, %v2275
    %v2277 = vrot.slane %v2276, 1
    %v2278 = vadd.f32 %v2276, %v2277
    %v2279 = vadd.f32 %v1307, %v1313
    %v2280 = vrot.slane %v2279, 4
    %v2281 = vadd.f32 %v2279, %v2280
    %v2282 = vrot.slane %v2281, 2
    %v2283 = vadd.f32 %v2281, %v2282
    %v2284 = vrot.slane %v2283, 1
    %v2285 = vadd.f32 %v2283, %v2284
    %v2286 = vadd.f32 %v1308, %v1314
    %v2287 = vrot.slane %v2286, 4
    %v2288 = vadd.f32 %v2286, %v2287
    %v2289 = vrot.slane %v2288, 2
    %v2290 = vadd.f32 %v2288, %v2289
    %v2291 = vrot.slane %v2290, 1
    %v2292 = vadd.f32 %v2290, %v2291
    %v2293 = vadd.f32 %v1309, %v1315
    %v2294 = vrot.slane %v2293, 4
    %v2295 = vadd.f32 %v2293, %v2294
    %v2296 = vrot.slane %v2295, 2
    %v2297 = vadd.f32 %v2295, %v2296
    %v2298 = vrot.slane %v2297, 1
    %v2299 = vadd.f32 %v2297, %v2298
    %v2300 = vadd.f32 %v1310, %v1316
    %v2301 = vrot.slane %v2300, 4
    %v2302 = vadd.f32 %v2300, %v2301
    %v2303 = vrot.slane %v2302, 2
    %v2304 = vadd.f32 %v2302, %v2303
    %v2305 = vrot.slane %v2304, 1
    %v2306 = vadd.f32 %v2304, %v2305
    %v2307 = vadd.f32 %v1311, %v1317
    %v2308 = vrot.slane %v2307, 4
    %v2309 = vadd.f32 %v2307, %v2308
    %v2310 = vrot.slane %v2309, 2
    %v2311 = vadd.f32 %v2309, %v2310
    %v2312 = vrot.slane %v2311, 1
    %v2313 = vadd.f32 %v2311, %v2312
    %v2314 = vadd.f32 %v1318, %v1324
    %v2315 = vrot.slane %v2314, 4
    %v2316 = vadd.f32 %v2314, %v2315
    %v2317 = vrot.slane %v2316, 2
    %v2318 = vadd.f32 %v2316, %v2317
    %v2319 = vrot.slane %v2318, 1
    %v2320 = vadd.f32 %v2318, %v2319
    %v2321 = vadd.f32 %v1319, %v1325
    %v2322 = vrot.slane %v2321, 4
    %v2323 = vadd.f32 %v2321, %v2322
    %v2324 = vrot.slane %v2323, 2
    %v2325 = vadd.f32 %v2323, %v2324
    %v2326 = vrot.slane %v2325, 1
    %v2327 = vadd.f32 %v2325, %v2326
    %v2328 = vadd.f32 %v1320, %v1326
    %v2329 = vrot.slane %v2328, 4
    %v2330 = vadd.f32 %v2328, %v2329
    %v2331 = vrot.slane %v2330, 2
    %v2332 = vadd.f32 %v2330, %v2331
    %v2333 = vrot.slane %v2332, 1
    %v2334 = vadd.f32 %v2332, %v2333
    %v2335 = vadd.f32 %v1321, %v1327
    %v2336 = vrot.slane %v2335, 4
    %v2337 = vadd.f32 %v2335, %v2336
    %v2338 = vrot.slane %v2337, 2
    %v2339 = vadd.f32 %v2337, %v2338
    %v2340 = vrot.slane %v2339, 1
    %v2341 = vadd.f32 %v2339, %v2340
    %v2342 = vadd.f32 %v1322, %v1328
    %v2343 = vrot.slane %v2342, 4
    %v2344 = vadd.f32 %v2342, %v2343
    %v2345 = vrot.slane %v2344, 2
    %v2346 = vadd.f32 %v2344, %v2345
    %v2347 = vrot.slane %v2346, 1
    %v2348 = vadd.f32 %v2346, %v2347
    %v2349 = vadd.f32 %v1323, %v1329
    %v2350 = vrot.slane %v2349, 4
    %v2351 = vadd.f32 %v2349, %v2350
    %v2352 = vrot.slane %v2351, 2
    %v2353 = vadd.f32 %v2351, %v2352
    %v2354 = vrot.slane %v2353, 1
    %v2355 = vadd.f32 %v2353, %v2354
    %v2356 = vadd.f32 %v1330, %v1336
    %v2357 = vrot.slane %v2356, 4
    %v2358 = vadd.f32 %v2356, %v2357
    %v2359 = vrot.slane %v2358, 2
    %v2360 = vadd.f32 %v2358, %v2359
    %v2361 = vrot.slane %v2360, 1
    %v2362 = vadd.f32 %v2360, %v2361
    %v2363 = vadd.f32 %v1331, %v1337
    %v2364 = vrot.slane %v2363, 4
    %v2365 = vadd.f32 %v2363, %v2364
    %v2366 = vrot.slane %v2365, 2
    %v2367 = vadd.f32 %v2365, %v2366
    %v2368 = vrot.slane %v2367, 1
    %v2369 = vadd.f32 %v2367, %v2368
    %v2370 = vadd.f32 %v1332, %v1338
    %v2371 = vrot.slane %v2370, 4
    %v2372 = vadd.f32 %v2370, %v2371
    %v2373 = vrot.slane %v2372, 2
    %v2374 = vadd.f32 %v2372, %v2373
    %v2375 = vrot.slane %v2374, 1
    %v2376 = vadd.f32 %v2374, %v2375
    %v2377 = vadd.f32 %v1333, %v1339
    %v2378 = vrot.slane %v2377, 4
    %v2379 = vadd.f32 %v2377, %v2378
    %v2380 = vrot.slane %v2379, 2
    %v2381 = vadd.f32 %v2379, %v2380
    %v2382 = vrot.slane %v2381, 1
    %v2383 = vadd.f32 %v2381, %v2382
    %v2384 = vadd.f32 %v1334, %v1340
    %v2385 = vrot.slane %v2384, 4
    %v2386 = vadd.f32 %v2384, %v2385
    %v2387 = vrot.slane %v2386, 2
    %v2388 = vadd.f32 %v2386, %v2387
    %v2389 = vrot.slane %v2388, 1
    %v2390 = vadd.f32 %v2388, %v2389
    %v2391 = vadd.f32 %v1335, %v1341
    %v2392 = vrot.slane %v2391, 4
    %v2393 = vadd.f32 %v2391, %v2392
    %v2394 = vrot.slane %v2393, 2
    %v2395 = vadd.f32 %v2393, %v2394
    %v2396 = vrot.slane %v2395, 1
    %v2397 = vadd.f32 %v2395, %v2396
    %v2398 = vadd.f32 %v1342, %v1348
    %v2399 = vrot.slane %v2398, 4
    %v2400 = vadd.f32 %v2398, %v2399
    %v2401 = vrot.slane %v2400, 2
    %v2402 = vadd.f32 %v2400, %v2401
    %v2403 = vrot.slane %v2402, 1
    %v2404 = vadd.f32 %v2402, %v2403
    %v2405 = vadd.f32 %v1343, %v1349
    %v2406 = vrot.slane %v2405, 4
    %v2407 = vadd.f32 %v2405, %v2406
    %v2408 = vrot.slane %v2407, 2
    %v2409 = vadd.f32 %v2407, %v2408
    %v2410 = vrot.slane %v2409, 1
    %v2411 = vadd.f32 %v2409, %v2410
    %v2412 = vadd.f32 %v1344, %v1350
    %v2413 = vrot.slane %v2412, 4
    %v2414 = vadd.f32 %v2412, %v2413
    %v2415 = vrot.slane %v2414, 2
    %v2416 = vadd.f32 %v2414, %v2415
    %v2417 = vrot.slane %v2416, 1
    %v2418 = vadd.f32 %v2416, %v2417
    %v2419 = vadd.f32 %v1345, %v1351
    %v2420 = vrot.slane %v2419, 4
    %v2421 = vadd.f32 %v2419, %v2420
    %v2422 = vrot.slane %v2421, 2
    %v2423 = vadd.f32 %v2421, %v2422
    %v2424 = vrot.slane %v2423, 1
    %v2425 = vadd.f32 %v2423, %v2424
    %v2426 = vadd.f32 %v1346, %v1352
    %v2427 = vrot.slane %v2426, 4
    %v2428 = vadd.f32 %v2426, %v2427
    %v2429 = vrot.slane %v2428, 2
    %v2430 = vadd.f32 %v2428, %v2429
    %v2431 = vrot.slane %v2430, 1
    %v2432 = vadd.f32 %v2430, %v2431
    %v2433 = vadd.f32 %v1347, %v1353
    %v2434 = vrot.slane %v2433, 4
    %v2435 = vadd.f32 %v2433, %v2434
    %v2436 = vrot.slane %v2435, 2
    %v2437 = vadd.f32 %v2435, %v2436
    %v2438 = vrot.slane %v2437, 1
    %v2439 = vadd.f32 %v2437, %v2438
    %v2440 = vadd.f32 %v1354, %v1360
    %v2441 = vrot.slane %v2440, 4
    %v2442 = vadd.f32 %v2440, %v2441
    %v2443 = vrot.slane %v2442, 2
    %v2444 = vadd.f32 %v2442, %v2443
    %v2445 = vrot.slane %v2444, 1
    %v2446 = vadd.f32 %v2444, %v2445
    %v2447 = vadd.f32 %v1355, %v1361
    %v2448 = vrot.slane %v2447, 4
    %v2449 = vadd.f32 %v2447, %v2448
    %v2450 = vrot.slane %v2449, 2
    %v2451 = vadd.f32 %v2449, %v2450
    %v2452 = vrot.slane %v2451, 1
    %v2453 = vadd.f32 %v2451, %v2452
    %v2454 = vadd.f32 %v1356, %v1362
    %v2455 = vrot.slane %v2454, 4
    %v2456 = vadd.f32 %v2454, %v2455
    %v2457 = vrot.slane %v2456, 2
    %v2458 = vadd.f32 %v2456, %v2457
    %v2459 = vrot.slane %v2458, 1
    %v2460 = vadd.f32 %v2458, %v2459
    %v2461 = vadd.f32 %v1357, %v1363
    %v2462 = vrot.slane %v2461, 4
    %v2463 = vadd.f32 %v2461, %v2462
    %v2464 = vrot.slane %v2463, 2
    %v2465 = vadd.f32 %v2463, %v2464
    %v2466 = vrot.slane %v2465, 1
    %v2467 = vadd.f32 %v2465, %v2466
    %v2468 = vadd.f32 %v1358, %v1364
    %v2469 = vrot.slane %v2468, 4
    %v2470 = vadd.f32 %v2468, %v2469
    %v2471 = vrot.slane %v2470, 2
    %v2472 = vadd.f32 %v2470, %v2471
    %v2473 = vrot.slane %v2472, 1
    %v2474 = vadd.f32 %v2472, %v2473
    %v2475 = vadd.f32 %v1359, %v1365
    %v2476 = vrot.slane %v2475, 4
    %v2477 = vadd.f32 %v2475, %v2476
    %v2478 = vrot.slane %v2477, 2
    %v2479 = vadd.f32 %v2477, %v2478
    %v2480 = vrot.slane %v2479, 1
    %v2481 = vadd.f32 %v2479, %v2480
    %v2482 = vadd.f32 %v1366, %v1372
    %v2483 = vrot.slane %v2482, 4
    %v2484 = vadd.f32 %v2482, %v2483
    %v2485 = vrot.slane %v2484, 2
    %v2486 = vadd.f32 %v2484, %v2485
    %v2487 = vrot.slane %v2486, 1
    %v2488 = vadd.f32 %v2486, %v2487
    %v2489 = vadd.f32 %v1367, %v1373
    %v2490 = vrot.slane %v2489, 4
    %v2491 = vadd.f32 %v2489, %v2490
    %v2492 = vrot.slane %v2491, 2
    %v2493 = vadd.f32 %v2491, %v2492
    %v2494 = vrot.slane %v2493, 1
    %v2495 = vadd.f32 %v2493, %v2494
    %v2496 = vadd.f32 %v1368, %v1374
    %v2497 = vrot.slane %v2496, 4
    %v2498 = vadd.f32 %v2496, %v2497
    %v2499 = vrot.slane %v2498, 2
    %v2500 = vadd.f32 %v2498, %v2499
    %v2501 = vrot.slane %v2500, 1
    %v2502 = vadd.f32 %v2500, %v2501
    %v2503 = vadd.f32 %v1369, %v1375
    %v2504 = vrot.slane %v2503, 4
    %v2505 = vadd.f32 %v2503, %v2504
    %v2506 = vrot.slane %v2505, 2
    %v2507 = vadd.f32 %v2505, %v2506
    %v2508 = vrot.slane %v2507, 1
    %v2509 = vadd.f32 %v2507, %v2508
    %v2510 = vadd.f32 %v1370, %v1376
    %v2511 = vrot.slane %v2510, 4
    %v2512 = vadd.f32 %v2510, %v2511
    %v2513 = vrot.slane %v2512, 2
    %v2514 = vadd.f32 %v2512, %v2513
    %v2515 = vrot.slane %v2514, 1
    %v2516 = vadd.f32 %v2514, %v2515
    %v2517 = vadd.f32 %v1371, %v1377
    %v2518 = vrot.slane %v2517, 4
    %v2519 = vadd.f32 %v2517, %v2518
    %v2520 = vrot.slane %v2519, 2
    %v2521 = vadd.f32 %v2519, %v2520
    %v2522 = vrot.slane %v2521, 1
    %v2523 = vadd.f32 %v2521, %v2522
    %v2524 = vadd.f32 %v1378, %v1384
    %v2525 = vrot.slane %v2524, 4
    %v2526 = vadd.f32 %v2524, %v2525
    %v2527 = vrot.slane %v2526, 2
    %v2528 = vadd.f32 %v2526, %v2527
    %v2529 = vrot.slane %v2528, 1
    %v2530 = vadd.f32 %v2528, %v2529
    %v2531 = vadd.f32 %v1379, %v1385
    %v2532 = vrot.slane %v2531, 4
    %v2533 = vadd.f32 %v2531, %v2532
    %v2534 = vrot.slane %v2533, 2
    %v2535 = vadd.f32 %v2533, %v2534
    %v2536 = vrot.slane %v2535, 1
    %v2537 = vadd.f32 %v2535, %v2536
    %v2538 = vadd.f32 %v1380, %v1386
    %v2539 = vrot.slane %v2538, 4
    %v2540 = vadd.f32 %v2538, %v2539
    %v2541 = vrot.slane %v2540, 2
    %v2542 = vadd.f32 %v2540, %v2541
    %v2543 = vrot.slane %v2542, 1
    %v2544 = vadd.f32 %v2542, %v2543
    %v2545 = vadd.f32 %v1381, %v1387
    %v2546 = vrot.slane %v2545, 4
    %v2547 = vadd.f32 %v2545, %v2546
    %v2548 = vrot.slane %v2547, 2
    %v2549 = vadd.f32 %v2547, %v2548
    %v2550 = vrot.slane %v2549, 1
    %v2551 = vadd.f32 %v2549, %v2550
    %v2552 = vadd.f32 %v1382, %v1388
    %v2553 = vrot.slane %v2552, 4
    %v2554 = vadd.f32 %v2552, %v2553
    %v2555 = vrot.slane %v2554, 2
    %v2556 = vadd.f32 %v2554, %v2555
    %v2557 = vrot.slane %v2556, 1
    %v2558 = vadd.f32 %v2556, %v2557
    %v2559 = vadd.f32 %v1383, %v1389
    %v2560 = vrot.slane %v2559, 4
    %v2561 = vadd.f32 %v2559, %v2560
    %v2562 = vrot.slane %v2561, 2
    %v2563 = vadd.f32 %v2561, %v2562
    %v2564 = vrot.slane %v2563, 1
    %v2565 = vadd.f32 %v2563, %v2564
    %v2566 = vadd.f32 %v1390, %v1396
    %v2567 = vrot.slane %v2566, 4
    %v2568 = vadd.f32 %v2566, %v2567
    %v2569 = vrot.slane %v2568, 2
    %v2570 = vadd.f32 %v2568, %v2569
    %v2571 = vrot.slane %v2570, 1
    %v2572 = vadd.f32 %v2570, %v2571
    %v2573 = vadd.f32 %v1391, %v1397
    %v2574 = vrot.slane %v2573, 4
    %v2575 = vadd.f32 %v2573, %v2574
    %v2576 = vrot.slane %v2575, 2
    %v2577 = vadd.f32 %v2575, %v2576
    %v2578 = vrot.slane %v2577, 1
    %v2579 = vadd.f32 %v2577, %v2578
    %v2580 = vadd.f32 %v1392, %v1398
    %v2581 = vrot.slane %v2580, 4
    %v2582 = vadd.f32 %v2580, %v2581
    %v2583 = vrot.slane %v2582, 2
    %v2584 = vadd.f32 %v2582, %v2583
    %v2585 = vrot.slane %v2584, 1
    %v2586 = vadd.f32 %v2584, %v2585
    %v2587 = vadd.f32 %v1393, %v1399
    %v2588 = vrot.slane %v2587, 4
    %v2589 = vadd.f32 %v2587, %v2588
    %v2590 = vrot.slane %v2589, 2
    %v2591 = vadd.f32 %v2589, %v2590
    %v2592 = vrot.slane %v2591, 1
    %v2593 = vadd.f32 %v2591, %v2592
    %v2594 = vadd.f32 %v1394, %v1400
    %v2595 = vrot.slane %v2594, 4
    %v2596 = vadd.f32 %v2594, %v2595
    %v2597 = vrot.slane %v2596, 2
    %v2598 = vadd.f32 %v2596, %v2597
    %v2599 = vrot.slane %v2598, 1
    %v2600 = vadd.f32 %v2598, %v2599
    %v2601 = vadd.f32 %v1395, %v1401
    %v2602 = vrot.slane %v2601, 4
    %v2603 = vadd.f32 %v2601, %v2602
    %v2604 = vrot.slane %v2603, 2
    %v2605 = vadd.f32 %v2603, %v2604
    %v2606 = vrot.slane %v2605, 1
    %v2607 = vadd.f32 %v2605, %v2606
    %v2608 = vadd.f32 %v1402, %v1408
    %v2609 = vrot.slane %v2608, 4
    %v2610 = vadd.f32 %v2608, %v2609
    %v2611 = vrot.slane %v2610, 2
    %v2612 = vadd.f32 %v2610, %v2611
    %v2613 = vrot.slane %v2612, 1
    %v2614 = vadd.f32 %v2612, %v2613
    %v2615 = vadd.f32 %v1403, %v1409
    %v2616 = vrot.slane %v2615, 4
    %v2617 = vadd.f32 %v2615, %v2616
    %v2618 = vrot.slane %v2617, 2
    %v2619 = vadd.f32 %v2617, %v2618
    %v2620 = vrot.slane %v2619, 1
    %v2621 = vadd.f32 %v2619, %v2620
    %v2622 = vadd.f32 %v1404, %v1410
    %v2623 = vrot.slane %v2622, 4
    %v2624 = vadd.f32 %v2622, %v2623
    %v2625 = vrot.slane %v2624, 2
    %v2626 = vadd.f32 %v2624, %v2625
    %v2627 = vrot.slane %v2626, 1
    %v2628 = vadd.f32 %v2626, %v2627
    %v2629 = vadd.f32 %v1405, %v1411
    %v2630 = vrot.slane %v2629, 4
    %v2631 = vadd.f32 %v2629, %v2630
    %v2632 = vrot.slane %v2631, 2
    %v2633 = vadd.f32 %v2631, %v2632
    %v2634 = vrot.slane %v2633, 1
    %v2635 = vadd.f32 %v2633, %v2634
    %v2636 = vadd.f32 %v1406, %v1412
    %v2637 = vrot.slane %v2636, 4
    %v2638 = vadd.f32 %v2636, %v2637
    %v2639 = vrot.slane %v2638, 2
    %v2640 = vadd.f32 %v2638, %v2639
    %v2641 = vrot.slane %v2640, 1
    %v2642 = vadd.f32 %v2640, %v2641
    %v2643 = vadd.f32 %v1407, %v1413
    %v2644 = vrot.slane %v2643, 4
    %v2645 = vadd.f32 %v2643, %v2644
    %v2646 = vrot.slane %v2645, 2
    %v2647 = vadd.f32 %v2645, %v2646
    %v2648 = vrot.slane %v2647, 1
    %v2649 = vadd.f32 %v2647, %v2648
    %v2650 = vadd.f32 %v1414, %v1420
    %v2651 = vrot.slane %v2650, 4
    %v2652 = vadd.f32 %v2650, %v2651
    %v2653 = vrot.slane %v2652, 2
    %v2654 = vadd.f32 %v2652, %v2653
    %v2655 = vrot.slane %v2654, 1
    %v2656 = vadd.f32 %v2654, %v2655
    %v2657 = vadd.f32 %v1415, %v1421
    %v2658 = vrot.slane %v2657, 4
    %v2659 = vadd.f32 %v2657, %v2658
    %v2660 = vrot.slane %v2659, 2
    %v2661 = vadd.f32 %v2659, %v2660
    %v2662 = vrot.slane %v2661, 1
    %v2663 = vadd.f32 %v2661, %v2662
    %v2664 = vadd.f32 %v1416, %v1422
    %v2665 = vrot.slane %v2664, 4
    %v2666 = vadd.f32 %v2664, %v2665
    %v2667 = vrot.slane %v2666, 2
    %v2668 = vadd.f32 %v2666, %v2667
    %v2669 = vrot.slane %v2668, 1
    %v2670 = vadd.f32 %v2668, %v2669
    %v2671 = vadd.f32 %v1417, %v1423
    %v2672 = vrot.slane %v2671, 4
    %v2673 = vadd.f32 %v2671, %v2672
    %v2674 = vrot.slane %v2673, 2
    %v2675 = vadd.f32 %v2673, %v2674
    %v2676 = vrot.slane %v2675, 1
    %v2677 = vadd.f32 %v2675, %v2676
    %v2678 = vadd.f32 %v1418, %v1424
    %v2679 = vrot.slane %v2678, 4
    %v2680 = vadd.f32 %v2678, %v2679
    %v2681 = vrot.slane %v2680, 2
    %v2682 = vadd.f32 %v2680, %v2681
    %v2683 = vrot.slane %v2682, 1
    %v2684 = vadd.f32 %v2682, %v2683
    %v2685 = vadd.f32 %v1419, %v1425
    %v2686 = vrot.slane %v2685, 4
    %v2687 = vadd.f32 %v2685, %v2686
    %v2688 = vrot.slane %v2687, 2
    %v2689 = vadd.f32 %v2687, %v2688
    %v2690 = vrot.slane %v2689, 1
    %v2691 = vadd.f32 %v2689, %v2690
    %v2692 = vadd.f32 %v1426, %v1432
    %v2693 = vrot.slane %v2692, 4
    %v2694 = vadd.f32 %v2692, %v2693
    %v2695 = vrot.slane %v2694, 2
    %v2696 = vadd.f32 %v2694, %v2695
    %v2697 = vrot.slane %v2696, 1
    %v2698 = vadd.f32 %v2696, %v2697
    %v2699 = vadd.f32 %v1427, %v1433
    %v2700 = vrot.slane %v2699, 4
    %v2701 = vadd.f32 %v2699, %v2700
    %v2702 = vrot.slane %v2701, 2
    %v2703 = vadd.f32 %v2701, %v2702
    %v2704 = vrot.slane %v2703, 1
    %v2705 = vadd.f32 %v2703, %v2704
    %v2706 = vadd.f32 %v1428, %v1434
    %v2707 = vrot.slane %v2706, 4
    %v2708 = vadd.f32 %v2706, %v2707
    %v2709 = vrot.slane %v2708, 2
    %v2710 = vadd.f32 %v2708, %v2709
    %v2711 = vrot.slane %v2710, 1
    %v2712 = vadd.f32 %v2710, %v2711
    %v2713 = vadd.f32 %v1429, %v1435
    %v2714 = vrot.slane %v2713, 4
    %v2715 = vadd.f32 %v2713, %v2714
    %v2716 = vrot.slane %v2715, 2
    %v2717 = vadd.f32 %v2715, %v2716
    %v2718 = vrot.slane %v2717, 1
    %v2719 = vadd.f32 %v2717, %v2718
    %v2720 = vadd.f32 %v1430, %v1436
    %v2721 = vrot.slane %v2720, 4
    %v2722 = vadd.f32 %v2720, %v2721
    %v2723 = vrot.slane %v2722, 2
    %v2724 = vadd.f32 %v2722, %v2723
    %v2725 = vrot.slane %v2724, 1
    %v2726 = vadd.f32 %v2724, %v2725
    %v2727 = vadd.f32 %v1431, %v1437
    %v2728 = vrot.slane %v2727, 4
    %v2729 = vadd.f32 %v2727, %v2728
    %v2730 = vrot.slane %v2729, 2
    %v2731 = vadd.f32 %v2729, %v2730
    %v2732 = vrot.slane %v2731, 1
    %v2733 = vadd.f32 %v2731, %v2732
    %v2734 = vadd.f32 %v1438, %v1444
    %v2735 = vrot.slane %v2734, 4
    %v2736 = vadd.f32 %v2734, %v2735
    %v2737 = vrot.slane %v2736, 2
    %v2738 = vadd.f32 %v2736, %v2737
    %v2739 = vrot.slane %v2738, 1
    %v2740 = vadd.f32 %v2738, %v2739
    %v2741 = vadd.f32 %v1439, %v1445
    %v2742 = vrot.slane %v2741, 4
    %v2743 = vadd.f32 %v2741, %v2742
    %v2744 = vrot.slane %v2743, 2
    %v2745 = vadd.f32 %v2743, %v2744
    %v2746 = vrot.slane %v2745, 1
    %v2747 = vadd.f32 %v2745, %v2746
    %v2748 = vadd.f32 %v1440, %v1446
    %v2749 = vrot.slane %v2748, 4
    %v2750 = vadd.f32 %v2748, %v2749
    %v2751 = vrot.slane %v2750, 2
    %v2752 = vadd.f32 %v2750, %v2751
    %v2753 = vrot.slane %v2752, 1
    %v2754 = vadd.f32 %v2752, %v2753
    %v2755 = vadd.f32 %v1441, %v1447
    %v2756 = vrot.slane %v2755, 4
    %v2757 = vadd.f32 %v2755, %v2756
    %v2758 = vrot.slane %v2757, 2
    %v2759 = vadd.f32 %v2757, %v2758
    %v2760 = vrot.slane %v2759, 1
    %v2761 = vadd.f32 %v2759, %v2760
    %v2762 = vadd.f32 %v1442, %v1448
    %v2763 = vrot.slane %v2762, 4
    %v2764 = vadd.f32 %v2762, %v2763
    %v2765 = vrot.slane %v2764, 2
    %v2766 = vadd.f32 %v2764, %v2765
    %v2767 = vrot.slane %v2766, 1
    %v2768 = vadd.f32 %v2766, %v2767
    %v2769 = vadd.f32 %v1443, %v1449
    %v2770 = vrot.slane %v2769, 4
    %v2771 = vadd.f32 %v2769, %v2770
    %v2772 = vrot.slane %v2771, 2
    %v2773 = vadd.f32 %v2771, %v2772
    %v2774 = vrot.slane %v2773, 1
    %v2775 = vadd.f32 %v2773, %v2774
    %v2776 = vadd.f32 %v1450, %v1456
    %v2777 = vrot.slane %v2776, 4
    %v2778 = vadd.f32 %v2776, %v2777
    %v2779 = vrot.slane %v2778, 2
    %v2780 = vadd.f32 %v2778, %v2779
    %v2781 = vrot.slane %v2780, 1
    %v2782 = vadd.f32 %v2780, %v2781
    %v2783 = vadd.f32 %v1451, %v1457
    %v2784 = vrot.slane %v2783, 4
    %v2785 = vadd.f32 %v2783, %v2784
    %v2786 = vrot.slane %v2785, 2
    %v2787 = vadd.f32 %v2785, %v2786
    %v2788 = vrot.slane %v2787, 1
    %v2789 = vadd.f32 %v2787, %v2788
    %v2790 = vadd.f32 %v1452, %v1458
    %v2791 = vrot.slane %v2790, 4
    %v2792 = vadd.f32 %v2790, %v2791
    %v2793 = vrot.slane %v2792, 2
    %v2794 = vadd.f32 %v2792, %v2793
    %v2795 = vrot.slane %v2794, 1
    %v2796 = vadd.f32 %v2794, %v2795
    %v2797 = vadd.f32 %v1453, %v1459
    %v2798 = vrot.slane %v2797, 4
    %v2799 = vadd.f32 %v2797, %v2798
    %v2800 = vrot.slane %v2799, 2
    %v2801 = vadd.f32 %v2799, %v2800
    %v2802 = vrot.slane %v2801, 1
    %v2803 = vadd.f32 %v2801, %v2802
    %v2804 = vadd.f32 %v1454, %v1460
    %v2805 = vrot.slane %v2804, 4
    %v2806 = vadd.f32 %v2804, %v2805
    %v2807 = vrot.slane %v2806, 2
    %v2808 = vadd.f32 %v2806, %v2807
    %v2809 = vrot.slane %v2808, 1
    %v2810 = vadd.f32 %v2808, %v2809
    %v2811 = vadd.f32 %v1455, %v1461
    %v2812 = vrot.slane %v2811, 4
    %v2813 = vadd.f32 %v2811, %v2812
    %v2814 = vrot.slane %v2813, 2
    %v2815 = vadd.f32 %v2813, %v2814
    %v2816 = vrot.slane %v2815, 1
    %v2817 = vadd.f32 %v2815, %v2816
    %v2818 = vadd.f32 %v1462, %v1468
    %v2819 = vrot.slane %v2818, 4
    %v2820 = vadd.f32 %v2818, %v2819
    %v2821 = vrot.slane %v2820, 2
    %v2822 = vadd.f32 %v2820, %v2821
    %v2823 = vrot.slane %v2822, 1
    %v2824 = vadd.f32 %v2822, %v2823
    %v2825 = vadd.f32 %v1463, %v1469
    %v2826 = vrot.slane %v2825, 4
    %v2827 = vadd.f32 %v2825, %v2826
    %v2828 = vrot.slane %v2827, 2
    %v2829 = vadd.f32 %v2827, %v2828
    %v2830 = vrot.slane %v2829, 1
    %v2831 = vadd.f32 %v2829, %v2830
    %v2832 = vadd.f32 %v1464, %v1470
    %v2833 = vrot.slane %v2832, 4
    %v2834 = vadd.f32 %v2832, %v2833
    %v2835 = vrot.slane %v2834, 2
    %v2836 = vadd.f32 %v2834, %v2835
    %v2837 = vrot.slane %v2836, 1
    %v2838 = vadd.f32 %v2836, %v2837
    %v2839 = vadd.f32 %v1465, %v1471
    %v2840 = vrot.slane %v2839, 4
    %v2841 = vadd.f32 %v2839, %v2840
    %v2842 = vrot.slane %v2841, 2
    %v2843 = vadd.f32 %v2841, %v2842
    %v2844 = vrot.slane %v2843, 1
    %v2845 = vadd.f32 %v2843, %v2844
    %v2846 = vadd.f32 %v1466, %v1472
    %v2847 = vrot.slane %v2846, 4
    %v2848 = vadd.f32 %v2846, %v2847
    %v2849 = vrot.slane %v2848, 2
    %v2850 = vadd.f32 %v2848, %v2849
    %v2851 = vrot.slane %v2850, 1
    %v2852 = vadd.f32 %v2850, %v2851
    %v2853 = vadd.f32 %v1467, %v1473
    %v2854 = vrot.slane %v2853, 4
    %v2855 = vadd.f32 %v2853, %v2854
    %v2856 = vrot.slane %v2855, 2
    %v2857 = vadd.f32 %v2855, %v2856
    %v2858 = vrot.slane %v2857, 1
    %v2859 = vadd.f32 %v2857, %v2858
    %v2860 = vadd.f32 %v1474, %v1480
    %v2861 = vrot.slane %v2860, 4
    %v2862 = vadd.f32 %v2860, %v2861
    %v2863 = vrot.slane %v2862, 2
    %v2864 = vadd.f32 %v2862, %v2863
    %v2865 = vrot.slane %v2864, 1
    %v2866 = vadd.f32 %v2864, %v2865
    %v2867 = vadd.f32 %v1475, %v1481
    %v2868 = vrot.slane %v2867, 4
    %v2869 = vadd.f32 %v2867, %v2868
    %v2870 = vrot.slane %v2869, 2
    %v2871 = vadd.f32 %v2869, %v2870
    %v2872 = vrot.slane %v2871, 1
    %v2873 = vadd.f32 %v2871, %v2872
    %v2874 = vadd.f32 %v1476, %v1482
    %v2875 = vrot.slane %v2874, 4
    %v2876 = vadd.f32 %v2874, %v2875
    %v2877 = vrot.slane %v2876, 2
    %v2878 = vadd.f32 %v2876, %v2877
    %v2879 = vrot.slane %v2878, 1
    %v2880 = vadd.f32 %v2878, %v2879
    %v2881 = vadd.f32 %v1477, %v1483
    %v2882 = vrot.slane %v2881, 4
    %v2883 = vadd.f32 %v2881, %v2882
    %v2884 = vrot.slane %v2883, 2
    %v2885 = vadd.f32 %v2883, %v2884
    %v2886 = vrot.slane %v2885, 1
    %v2887 = vadd.f32 %v2885, %v2886
    %v2888 = vadd.f32 %v1478, %v1484
    %v2889 = vrot.slane %v2888, 4
    %v2890 = vadd.f32 %v2888, %v2889
    %v2891 = vrot.slane %v2890, 2
    %v2892 = vadd.f32 %v2890, %v2891
    %v2893 = vrot.slane %v2892, 1
    %v2894 = vadd.f32 %v2892, %v2893
    %v2895 = vadd.f32 %v1479, %v1485
    %v2896 = vrot.slane %v2895, 4
    %v2897 = vadd.f32 %v2895, %v2896
    %v2898 = vrot.slane %v2897, 2
    %v2899 = vadd.f32 %v2897, %v2898
    %v2900 = vrot.slane %v2899, 1
    %v2901 = vadd.f32 %v2899, %v2900
    %v2902 = vadd.f32 %v1486, %v1492
    %v2903 = vrot.slane %v2902, 4
    %v2904 = vadd.f32 %v2902, %v2903
    %v2905 = vrot.slane %v2904, 2
    %v2906 = vadd.f32 %v2904, %v2905
    %v2907 = vrot.slane %v2906, 1
    %v2908 = vadd.f32 %v2906, %v2907
    %v2909 = vadd.f32 %v1487, %v1493
    %v2910 = vrot.slane %v2909, 4
    %v2911 = vadd.f32 %v2909, %v2910
    %v2912 = vrot.slane %v2911, 2
    %v2913 = vadd.f32 %v2911, %v2912
    %v2914 = vrot.slane %v2913, 1
    %v2915 = vadd.f32 %v2913, %v2914
    %v2916 = vadd.f32 %v1488, %v1494
    %v2917 = vrot.slane %v2916, 4
    %v2918 = vadd.f32 %v2916, %v2917
    %v2919 = vrot.slane %v2918, 2
    %v2920 = vadd.f32 %v2918, %v2919
    %v2921 = vrot.slane %v2920, 1
    %v2922 = vadd.f32 %v2920, %v2921
    %v2923 = vadd.f32 %v1489, %v1495
    %v2924 = vrot.slane %v2923, 4
    %v2925 = vadd.f32 %v2923, %v2924
    %v2926 = vrot.slane %v2925, 2
    %v2927 = vadd.f32 %v2925, %v2926
    %v2928 = vrot.slane %v2927, 1
    %v2929 = vadd.f32 %v2927, %v2928
    %v2930 = vadd.f32 %v1490, %v1496
    %v2931 = vrot.slane %v2930, 4
    %v2932 = vadd.f32 %v2930, %v2931
    %v2933 = vrot.slane %v2932, 2
    %v2934 = vadd.f32 %v2932, %v2933
    %v2935 = vrot.slane %v2934, 1
    %v2936 = vadd.f32 %v2934, %v2935
    %v2937 = vadd.f32 %v1491, %v1497
    %v2938 = vrot.slane %v2937, 4
    %v2939 = vadd.f32 %v2937, %v2938
    %v2940 = vrot.slane %v2939, 2
    %v2941 = vadd.f32 %v2939, %v2940
    %v2942 = vrot.slane %v2941, 1
    %v2943 = vadd.f32 %v2941, %v2942
    %v2944 = vadd.f32 %v1498, %v1504
    %v2945 = vrot.slane %v2944, 4
    %v2946 = vadd.f32 %v2944, %v2945
    %v2947 = vrot.slane %v2946, 2
    %v2948 = vadd.f32 %v2946, %v2947
    %v2949 = vrot.slane %v2948, 1
    %v2950 = vadd.f32 %v2948, %v2949
    %v2951 = vadd.f32 %v1499, %v1505
    %v2952 = vrot.slane %v2951, 4
    %v2953 = vadd.f32 %v2951, %v2952
    %v2954 = vrot.slane %v2953, 2
    %v2955 = vadd.f32 %v2953, %v2954
    %v2956 = vrot.slane %v2955, 1
    %v2957 = vadd.f32 %v2955, %v2956
    %v2958 = vadd.f32 %v1500, %v1506
    %v2959 = vrot.slane %v2958, 4
    %v2960 = vadd.f32 %v2958, %v2959
    %v2961 = vrot.slane %v2960, 2
    %v2962 = vadd.f32 %v2960, %v2961
    %v2963 = vrot.slane %v2962, 1
    %v2964 = vadd.f32 %v2962, %v2963
    %v2965 = vadd.f32 %v1501, %v1507
    %v2966 = vrot.slane %v2965, 4
    %v2967 = vadd.f32 %v2965, %v2966
    %v2968 = vrot.slane %v2967, 2
    %v2969 = vadd.f32 %v2967, %v2968
    %v2970 = vrot.slane %v2969, 1
    %v2971 = vadd.f32 %v2969, %v2970
    %v2972 = vadd.f32 %v1502, %v1508
    %v2973 = vrot.slane %v2972, 4
    %v2974 = vadd.f32 %v2972, %v2973
    %v2975 = vrot.slane %v2974, 2
    %v2976 = vadd.f32 %v2974, %v2975
    %v2977 = vrot.slane %v2976, 1
    %v2978 = vadd.f32 %v2976, %v2977
    %v2979 = vadd.f32 %v1503, %v1509
    %v2980 = vrot.slane %v2979, 4
    %v2981 = vadd.f32 %v2979, %v2980
    %v2982 = vrot.slane %v2981, 2
    %v2983 = vadd.f32 %v2981, %v2982
    %v2984 = vrot.slane %v2983, 1
    %v2985 = vadd.f32 %v2983, %v2984
    %v2986 = vadd.f32 %v1510, %v1516
    %v2987 = vrot.slane %v2986, 4
    %v2988 = vadd.f32 %v2986, %v2987
    %v2989 = vrot.slane %v2988, 2
    %v2990 = vadd.f32 %v2988, %v2989
    %v2991 = vrot.slane %v2990, 1
    %v2992 = vadd.f32 %v2990, %v2991
    %v2993 = vadd.f32 %v1511, %v1517
    %v2994 = vrot.slane %v2993, 4
    %v2995 = vadd.f32 %v2993, %v2994
    %v2996 = vrot.slane %v2995, 2
    %v2997 = vadd.f32 %v2995, %v2996
    %v2998 = vrot.slane %v2997, 1
    %v2999 = vadd.f32 %v2997, %v2998
    %v3000 = vadd.f32 %v1512, %v1518
    %v3001 = vrot.slane %v3000, 4
    %v3002 = vadd.f32 %v3000, %v3001
    %v3003 = vrot.slane %v3002, 2
    %v3004 = vadd.f32 %v3002, %v3003
    %v3005 = vrot.slane %v3004, 1
    %v3006 = vadd.f32 %v3004, %v3005
    %v3007 = vadd.f32 %v1513, %v1519
    %v3008 = vrot.slane %v3007, 4
    %v3009 = vadd.f32 %v3007, %v3008
    %v3010 = vrot.slane %v3009, 2
    %v3011 = vadd.f32 %v3009, %v3010
    %v3012 = vrot.slane %v3011, 1
    %v3013 = vadd.f32 %v3011, %v3012
    %v3014 = vadd.f32 %v1514, %v1520
    %v3015 = vrot.slane %v3014, 4
    %v3016 = vadd.f32 %v3014, %v3015
    %v3017 = vrot.slane %v3016, 2
    %v3018 = vadd.f32 %v3016, %v3017
    %v3019 = vrot.slane %v3018, 1
    %v3020 = vadd.f32 %v3018, %v3019
    %v3021 = vadd.f32 %v1515, %v1521
    %v3022 = vrot.slane %v3021, 4
    %v3023 = vadd.f32 %v3021, %v3022
    %v3024 = vrot.slane %v3023, 2
    %v3025 = vadd.f32 %v3023, %v3024
    %v3026 = vrot.slane %v3025, 1
    %v3027 = vadd.f32 %v3025, %v3026
    %v3028 = vadd.f32 %v1522, %v1528
    %v3029 = vrot.slane %v3028, 4
    %v3030 = vadd.f32 %v3028, %v3029
    %v3031 = vrot.slane %v3030, 2
    %v3032 = vadd.f32 %v3030, %v3031
    %v3033 = vrot.slane %v3032, 1
    %v3034 = vadd.f32 %v3032, %v3033
    %v3035 = vadd.f32 %v1523, %v1529
    %v3036 = vrot.slane %v3035, 4
    %v3037 = vadd.f32 %v3035, %v3036
    %v3038 = vrot.slane %v3037, 2
    %v3039 = vadd.f32 %v3037, %v3038
    %v3040 = vrot.slane %v3039, 1
    %v3041 = vadd.f32 %v3039, %v3040
    %v3042 = vadd.f32 %v1524, %v1530
    %v3043 = vrot.slane %v3042, 4
    %v3044 = vadd.f32 %v3042, %v3043
    %v3045 = vrot.slane %v3044, 2
    %v3046 = vadd.f32 %v3044, %v3045
    %v3047 = vrot.slane %v3046, 1
    %v3048 = vadd.f32 %v3046, %v3047
    %v3049 = vadd.f32 %v1525, %v1531
    %v3050 = vrot.slane %v3049, 4
    %v3051 = vadd.f32 %v3049, %v3050
    %v3052 = vrot.slane %v3051, 2
    %v3053 = vadd.f32 %v3051, %v3052
    %v3054 = vrot.slane %v3053, 1
    %v3055 = vadd.f32 %v3053, %v3054
    %v3056 = vadd.f32 %v1526, %v1532
    %v3057 = vrot.slane %v3056, 4
    %v3058 = vadd.f32 %v3056, %v3057
    %v3059 = vrot.slane %v3058, 2
    %v3060 = vadd.f32 %v3058, %v3059
    %v3061 = vrot.slane %v3060, 1
    %v3062 = vadd.f32 %v3060, %v3061
    %v3063 = vadd.f32 %v1527, %v1533
    %v3064 = vrot.slane %v3063, 4
    %v3065 = vadd.f32 %v3063, %v3064
    %v3066 = vrot.slane %v3065, 2
    %v3067 = vadd.f32 %v3065, %v3066
    %v3068 = vrot.slane %v3067, 1
    %v3069 = vadd.f32 %v3067, %v3068
    %v3070 = vadd.f32 %v1534, %v1540
    %v3071 = vrot.slane %v3070, 4
    %v3072 = vadd.f32 %v3070, %v3071
    %v3073 = vrot.slane %v3072, 2
    %v3074 = vadd.f32 %v3072, %v3073
    %v3075 = vrot.slane %v3074, 1
    %v3076 = vadd.f32 %v3074, %v3075
    %v3077 = vadd.f32 %v1535, %v1541
    %v3078 = vrot.slane %v3077, 4
    %v3079 = vadd.f32 %v3077, %v3078
    %v3080 = vrot.slane %v3079, 2
    %v3081 = vadd.f32 %v3079, %v3080
    %v3082 = vrot.slane %v3081, 1
    %v3083 = vadd.f32 %v3081, %v3082
    %v3084 = vadd.f32 %v1536, %v1542
    %v3085 = vrot.slane %v3084, 4
    %v3086 = vadd.f32 %v3084, %v3085
    %v3087 = vrot.slane %v3086, 2
    %v3088 = vadd.f32 %v3086, %v3087
    %v3089 = vrot.slane %v3088, 1
    %v3090 = vadd.f32 %v3088, %v3089
    %v3091 = vadd.f32 %v1537, %v1543
    %v3092 = vrot.slane %v3091, 4
    %v3093 = vadd.f32 %v3091, %v3092
    %v3094 = vrot.slane %v3093, 2
    %v3095 = vadd.f32 %v3093, %v3094
    %v3096 = vrot.slane %v3095, 1
    %v3097 = vadd.f32 %v3095, %v3096
    %v3098 = vadd.f32 %v1538, %v1544
    %v3099 = vrot.slane %v3098, 4
    %v3100 = vadd.f32 %v3098, %v3099
    %v3101 = vrot.slane %v3100, 2
    %v3102 = vadd.f32 %v3100, %v3101
    %v3103 = vrot.slane %v3102, 1
    %v3104 = vadd.f32 %v3102, %v3103
    %v3105 = vadd.f32 %v1539, %v1545
    %v3106 = vrot.slane %v3105, 4
    %v3107 = vadd.f32 %v3105, %v3106
    %v3108 = vrot.slane %v3107, 2
    %v3109 = vadd.f32 %v3107, %v3108
    %v3110 = vrot.slane %v3109, 1
    %v3111 = vadd.f32 %v3109, %v3110
    %v3112 = vadd.f32 %v1546, %v1552
    %v3113 = vrot.slane %v3112, 4
    %v3114 = vadd.f32 %v3112, %v3113
    %v3115 = vrot.slane %v3114, 2
    %v3116 = vadd.f32 %v3114, %v3115
    %v3117 = vrot.slane %v3116, 1
    %v3118 = vadd.f32 %v3116, %v3117
    %v3119 = vadd.f32 %v1547, %v1553
    %v3120 = vrot.slane %v3119, 4
    %v3121 = vadd.f32 %v3119, %v3120
    %v3122 = vrot.slane %v3121, 2
    %v3123 = vadd.f32 %v3121, %v3122
    %v3124 = vrot.slane %v3123, 1
    %v3125 = vadd.f32 %v3123, %v3124
    %v3126 = vadd.f32 %v1548, %v1554
    %v3127 = vrot.slane %v3126, 4
    %v3128 = vadd.f32 %v3126, %v3127
    %v3129 = vrot.slane %v3128, 2
    %v3130 = vadd.f32 %v3128, %v3129
    %v3131 = vrot.slane %v3130, 1
    %v3132 = vadd.f32 %v3130, %v3131
    %v3133 = vadd.f32 %v1549, %v1555
    %v3134 = vrot.slane %v3133, 4
    %v3135 = vadd.f32 %v3133, %v3134
    %v3136 = vrot.slane %v3135, 2
    %v3137 = vadd.f32 %v3135, %v3136
    %v3138 = vrot.slane %v3137, 1
    %v3139 = vadd.f32 %v3137, %v3138
    %v3140 = vadd.f32 %v1550, %v1556
    %v3141 = vrot.slane %v3140, 4
    %v3142 = vadd.f32 %v3140, %v3141
    %v3143 = vrot.slane %v3142, 2
    %v3144 = vadd.f32 %v3142, %v3143
    %v3145 = vrot.slane %v3144, 1
    %v3146 = vadd.f32 %v3144, %v3145
    %v3147 = vadd.f32 %v1551, %v1557
    %v3148 = vrot.slane %v3147, 4
    %v3149 = vadd.f32 %v3147, %v3148
    %v3150 = vrot.slane %v3149, 2
    %v3151 = vadd.f32 %v3149, %v3150
    %v3152 = vrot.slane %v3151, 1
    %v3153 = vadd.f32 %v3151, %v3152
    %v3154 = vadd.f32 %v1558, %v1564
    %v3155 = vrot.slane %v3154, 4
    %v3156 = vadd.f32 %v3154, %v3155
    %v3157 = vrot.slane %v3156, 2
    %v3158 = vadd.f32 %v3156, %v3157
    %v3159 = vrot.slane %v3158, 1
    %v3160 = vadd.f32 %v3158, %v3159
    %v3161 = vadd.f32 %v1559, %v1565
    %v3162 = vrot.slane %v3161, 4
    %v3163 = vadd.f32 %v3161, %v3162
    %v3164 = vrot.slane %v3163, 2
    %v3165 = vadd.f32 %v3163, %v3164
    %v3166 = vrot.slane %v3165, 1
    %v3167 = vadd.f32 %v3165, %v3166
    %v3168 = vadd.f32 %v1560, %v1566
    %v3169 = vrot.slane %v3168, 4
    %v3170 = vadd.f32 %v3168, %v3169
    %v3171 = vrot.slane %v3170, 2
    %v3172 = vadd.f32 %v3170, %v3171
    %v3173 = vrot.slane %v3172, 1
    %v3174 = vadd.f32 %v3172, %v3173
    %v3175 = vadd.f32 %v1561, %v1567
    %v3176 = vrot.slane %v3175, 4
    %v3177 = vadd.f32 %v3175, %v3176
    %v3178 = vrot.slane %v3177, 2
    %v3179 = vadd.f32 %v3177, %v3178
    %v3180 = vrot.slane %v3179, 1
    %v3181 = vadd.f32 %v3179, %v3180
    %v3182 = vadd.f32 %v1562, %v1568
    %v3183 = vrot.slane %v3182, 4
    %v3184 = vadd.f32 %v3182, %v3183
    %v3185 = vrot.slane %v3184, 2
    %v3186 = vadd.f32 %v3184, %v3185
    %v3187 = vrot.slane %v3186, 1
    %v3188 = vadd.f32 %v3186, %v3187
    %v3189 = vadd.f32 %v1563, %v1569
    %v3190 = vrot.slane %v3189, 4
    %v3191 = vadd.f32 %v3189, %v3190
    %v3192 = vrot.slane %v3191, 2
    %v3193 = vadd.f32 %v3191, %v3192
    %v3194 = vrot.slane %v3193, 1
    %v3195 = vadd.f32 %v3193, %v3194
    %v3196 = vadd.f32 %v1570, %v1576
    %v3197 = vrot.slane %v3196, 4
    %v3198 = vadd.f32 %v3196, %v3197
    %v3199 = vrot.slane %v3198, 2
    %v3200 = vadd.f32 %v3198, %v3199
    %v3201 = vrot.slane %v3200, 1
    %v3202 = vadd.f32 %v3200, %v3201
    %v3203 = vadd.f32 %v1571, %v1577
    %v3204 = vrot.slane %v3203, 4
    %v3205 = vadd.f32 %v3203, %v3204
    %v3206 = vrot.slane %v3205, 2
    %v3207 = vadd.f32 %v3205, %v3206
    %v3208 = vrot.slane %v3207, 1
    %v3209 = vadd.f32 %v3207, %v3208
    %v3210 = vadd.f32 %v1572, %v1578
    %v3211 = vrot.slane %v3210, 4
    %v3212 = vadd.f32 %v3210, %v3211
    %v3213 = vrot.slane %v3212, 2
    %v3214 = vadd.f32 %v3212, %v3213
    %v3215 = vrot.slane %v3214, 1
    %v3216 = vadd.f32 %v3214, %v3215
    %v3217 = vadd.f32 %v1573, %v1579
    %v3218 = vrot.slane %v3217, 4
    %v3219 = vadd.f32 %v3217, %v3218
    %v3220 = vrot.slane %v3219, 2
    %v3221 = vadd.f32 %v3219, %v3220
    %v3222 = vrot.slane %v3221, 1
    %v3223 = vadd.f32 %v3221, %v3222
    %v3224 = vadd.f32 %v1574, %v1580
    %v3225 = vrot.slane %v3224, 4
    %v3226 = vadd.f32 %v3224, %v3225
    %v3227 = vrot.slane %v3226, 2
    %v3228 = vadd.f32 %v3226, %v3227
    %v3229 = vrot.slane %v3228, 1
    %v3230 = vadd.f32 %v3228, %v3229
    %v3231 = vadd.f32 %v1575, %v1581
    %v3232 = vrot.slane %v3231, 4
    %v3233 = vadd.f32 %v3231, %v3232
    %v3234 = vrot.slane %v3233, 2
    %v3235 = vadd.f32 %v3233, %v3234
    %v3236 = vrot.slane %v3235, 1
    %v3237 = vadd.f32 %v3235, %v3236
    %v3238 = vadd.f32 %v1582, %v1588
    %v3239 = vrot.slane %v3238, 4
    %v3240 = vadd.f32 %v3238, %v3239
    %v3241 = vrot.slane %v3240, 2
    %v3242 = vadd.f32 %v3240, %v3241
    %v3243 = vrot.slane %v3242, 1
    %v3244 = vadd.f32 %v3242, %v3243
    %v3245 = vadd.f32 %v1583, %v1589
    %v3246 = vrot.slane %v3245, 4
    %v3247 = vadd.f32 %v3245, %v3246
    %v3248 = vrot.slane %v3247, 2
    %v3249 = vadd.f32 %v3247, %v3248
    %v3250 = vrot.slane %v3249, 1
    %v3251 = vadd.f32 %v3249, %v3250
    %v3252 = vadd.f32 %v1584, %v1590
    %v3253 = vrot.slane %v3252, 4
    %v3254 = vadd.f32 %v3252, %v3253
    %v3255 = vrot.slane %v3254, 2
    %v3256 = vadd.f32 %v3254, %v3255
    %v3257 = vrot.slane %v3256, 1
    %v3258 = vadd.f32 %v3256, %v3257
    %v3259 = vadd.f32 %v1585, %v1591
    %v3260 = vrot.slane %v3259, 4
    %v3261 = vadd.f32 %v3259, %v3260
    %v3262 = vrot.slane %v3261, 2
    %v3263 = vadd.f32 %v3261, %v3262
    %v3264 = vrot.slane %v3263, 1
    %v3265 = vadd.f32 %v3263, %v3264
    %v3266 = vadd.f32 %v1586, %v1592
    %v3267 = vrot.slane %v3266, 4
    %v3268 = vadd.f32 %v3266, %v3267
    %v3269 = vrot.slane %v3268, 2
    %v3270 = vadd.f32 %v3268, %v3269
    %v3271 = vrot.slane %v3270, 1
    %v3272 = vadd.f32 %v3270, %v3271
    %v3273 = vadd.f32 %v1587, %v1593
    %v3274 = vrot.slane %v3273, 4
    %v3275 = vadd.f32 %v3273, %v3274
    %v3276 = vrot.slane %v3275, 2
    %v3277 = vadd.f32 %v3275, %v3276
    %v3278 = vrot.slane %v3277, 1
    %v3279 = vadd.f32 %v3277, %v3278
    %v3280 = vadd.f32 %v1594, %v1600
    %v3281 = vrot.slane %v3280, 4
    %v3282 = vadd.f32 %v3280, %v3281
    %v3283 = vrot.slane %v3282, 2
    %v3284 = vadd.f32 %v3282, %v3283
    %v3285 = vrot.slane %v3284, 1
    %v3286 = vadd.f32 %v3284, %v3285
    %v3287 = vadd.f32 %v1595, %v1601
    %v3288 = vrot.slane %v3287, 4
    %v3289 = vadd.f32 %v3287, %v3288
    %v3290 = vrot.slane %v3289, 2
    %v3291 = vadd.f32 %v3289, %v3290
    %v3292 = vrot.slane %v3291, 1
    %v3293 = vadd.f32 %v3291, %v3292
    %v3294 = vadd.f32 %v1596, %v1602
    %v3295 = vrot.slane %v3294, 4
    %v3296 = vadd.f32 %v3294, %v3295
    %v3297 = vrot.slane %v3296, 2
    %v3298 = vadd.f32 %v3296, %v3297
    %v3299 = vrot.slane %v3298, 1
    %v3300 = vadd.f32 %v3298, %v3299
    %v3301 = vadd.f32 %v1597, %v1603
    %v3302 = vrot.slane %v3301, 4
    %v3303 = vadd.f32 %v3301, %v3302
    %v3304 = vrot.slane %v3303, 2
    %v3305 = vadd.f32 %v3303, %v3304
    %v3306 = vrot.slane %v3305, 1
    %v3307 = vadd.f32 %v3305, %v3306
    %v3308 = vadd.f32 %v1598, %v1604
    %v3309 = vrot.slane %v3308, 4
    %v3310 = vadd.f32 %v3308, %v3309
    %v3311 = vrot.slane %v3310, 2
    %v3312 = vadd.f32 %v3310, %v3311
    %v3313 = vrot.slane %v3312, 1
    %v3314 = vadd.f32 %v3312, %v3313
    %v3315 = vadd.f32 %v1599, %v1605
    %v3316 = vrot.slane %v3315, 4
    %v3317 = vadd.f32 %v3315, %v3316
    %v3318 = vrot.slane %v3317, 2
    %v3319 = vadd.f32 %v3317, %v3318
    %v3320 = vrot.slane %v3319, 1
    %v3321 = vadd.f32 %v3319, %v3320
    %v3322 = vadd.f32 %v1606, %v1612
    %v3323 = vrot.slane %v3322, 4
    %v3324 = vadd.f32 %v3322, %v3323
    %v3325 = vrot.slane %v3324, 2
    %v3326 = vadd.f32 %v3324, %v3325
    %v3327 = vrot.slane %v3326, 1
    %v3328 = vadd.f32 %v3326, %v3327
    %v3329 = vadd.f32 %v1607, %v1613
    %v3330 = vrot.slane %v3329, 4
    %v3331 = vadd.f32 %v3329, %v3330
    %v3332 = vrot.slane %v3331, 2
    %v3333 = vadd.f32 %v3331, %v3332
    %v3334 = vrot.slane %v3333, 1
    %v3335 = vadd.f32 %v3333, %v3334
    %v3336 = vadd.f32 %v1608, %v1614
    %v3337 = vrot.slane %v3336, 4
    %v3338 = vadd.f32 %v3336, %v3337
    %v3339 = vrot.slane %v3338, 2
    %v3340 = vadd.f32 %v3338, %v3339
    %v3341 = vrot.slane %v3340, 1
    %v3342 = vadd.f32 %v3340, %v3341
    %v3343 = vadd.f32 %v1609, %v1615
    %v3344 = vrot.slane %v3343, 4
    %v3345 = vadd.f32 %v3343, %v3344
    %v3346 = vrot.slane %v3345, 2
    %v3347 = vadd.f32 %v3345, %v3346
    %v3348 = vrot.slane %v3347, 1
    %v3349 = vadd.f32 %v3347, %v3348
    %v3350 = vadd.f32 %v1610, %v1616
    %v3351 = vrot.slane %v3350, 4
    %v3352 = vadd.f32 %v3350, %v3351
    %v3353 = vrot.slane %v3352, 2
    %v3354 = vadd.f32 %v3352, %v3353
    %v3355 = vrot.slane %v3354, 1
    %v3356 = vadd.f32 %v3354, %v3355
    %v3357 = vadd.f32 %v1611, %v1617
    %v3358 = vrot.slane %v3357, 4
    %v3359 = vadd.f32 %v3357, %v3358
    %v3360 = vrot.slane %v3359, 2
    %v3361 = vadd.f32 %v3359, %v3360
    %v3362 = vrot.slane %v3361, 1
    %v3363 = vadd.f32 %v3361, %v3362
    %v3364 = vadd.f32 %v1618, %v1624
    %v3365 = vrot.slane %v3364, 4
    %v3366 = vadd.f32 %v3364, %v3365
    %v3367 = vrot.slane %v3366, 2
    %v3368 = vadd.f32 %v3366, %v3367
    %v3369 = vrot.slane %v3368, 1
    %v3370 = vadd.f32 %v3368, %v3369
    %v3371 = vadd.f32 %v1619, %v1625
    %v3372 = vrot.slane %v3371, 4
    %v3373 = vadd.f32 %v3371, %v3372
    %v3374 = vrot.slane %v3373, 2
    %v3375 = vadd.f32 %v3373, %v3374
    %v3376 = vrot.slane %v3375, 1
    %v3377 = vadd.f32 %v3375, %v3376
    %v3378 = vadd.f32 %v1620, %v1626
    %v3379 = vrot.slane %v3378, 4
    %v3380 = vadd.f32 %v3378, %v3379
    %v3381 = vrot.slane %v3380, 2
    %v3382 = vadd.f32 %v3380, %v3381
    %v3383 = vrot.slane %v3382, 1
    %v3384 = vadd.f32 %v3382, %v3383
    %v3385 = vadd.f32 %v1621, %v1627
    %v3386 = vrot.slane %v3385, 4
    %v3387 = vadd.f32 %v3385, %v3386
    %v3388 = vrot.slane %v3387, 2
    %v3389 = vadd.f32 %v3387, %v3388
    %v3390 = vrot.slane %v3389, 1
    %v3391 = vadd.f32 %v3389, %v3390
    %v3392 = vadd.f32 %v1622, %v1628
    %v3393 = vrot.slane %v3392, 4
    %v3394 = vadd.f32 %v3392, %v3393
    %v3395 = vrot.slane %v3394, 2
    %v3396 = vadd.f32 %v3394, %v3395
    %v3397 = vrot.slane %v3396, 1
    %v3398 = vadd.f32 %v3396, %v3397
    %v3399 = vadd.f32 %v1623, %v1629
    %v3400 = vrot.slane %v3399, 4
    %v3401 = vadd.f32 %v3399, %v3400
    %v3402 = vrot.slane %v3401, 2
    %v3403 = vadd.f32 %v3401, %v3402
    %v3404 = vrot.slane %v3403, 1
    %v3405 = vadd.f32 %v3403, %v3404
    %v3406 = vadd.f32 %v1630, %v1636
    %v3407 = vrot.slane %v3406, 4
    %v3408 = vadd.f32 %v3406, %v3407
    %v3409 = vrot.slane %v3408, 2
    %v3410 = vadd.f32 %v3408, %v3409
    %v3411 = vrot.slane %v3410, 1
    %v3412 = vadd.f32 %v3410, %v3411
    %v3413 = vadd.f32 %v1631, %v1637
    %v3414 = vrot.slane %v3413, 4
    %v3415 = vadd.f32 %v3413, %v3414
    %v3416 = vrot.slane %v3415, 2
    %v3417 = vadd.f32 %v3415, %v3416
    %v3418 = vrot.slane %v3417, 1
    %v3419 = vadd.f32 %v3417, %v3418
    %v3420 = vadd.f32 %v1632, %v1638
    %v3421 = vrot.slane %v3420, 4
    %v3422 = vadd.f32 %v3420, %v3421
    %v3423 = vrot.slane %v3422, 2
    %v3424 = vadd.f32 %v3422, %v3423
    %v3425 = vrot.slane %v3424, 1
    %v3426 = vadd.f32 %v3424, %v3425
    %v3427 = vadd.f32 %v1633, %v1639
    %v3428 = vrot.slane %v3427, 4
    %v3429 = vadd.f32 %v3427, %v3428
    %v3430 = vrot.slane %v3429, 2
    %v3431 = vadd.f32 %v3429, %v3430
    %v3432 = vrot.slane %v3431, 1
    %v3433 = vadd.f32 %v3431, %v3432
    %v3434 = vadd.f32 %v1634, %v1640
    %v3435 = vrot.slane %v3434, 4
    %v3436 = vadd.f32 %v3434, %v3435
    %v3437 = vrot.slane %v3436, 2
    %v3438 = vadd.f32 %v3436, %v3437
    %v3439 = vrot.slane %v3438, 1
    %v3440 = vadd.f32 %v3438, %v3439
    %v3441 = vadd.f32 %v1635, %v1641
    %v3442 = vrot.slane %v3441, 4
    %v3443 = vadd.f32 %v3441, %v3442
    %v3444 = vrot.slane %v3443, 2
    %v3445 = vadd.f32 %v3443, %v3444
    %v3446 = vrot.slane %v3445, 1
    %v3447 = vadd.f32 %v3445, %v3446
    %v3448 = vadd.f32 %v1642, %v1648
    %v3449 = vrot.slane %v3448, 4
    %v3450 = vadd.f32 %v3448, %v3449
    %v3451 = vrot.slane %v3450, 2
    %v3452 = vadd.f32 %v3450, %v3451
    %v3453 = vrot.slane %v3452, 1
    %v3454 = vadd.f32 %v3452, %v3453
    %v3455 = vadd.f32 %v1643, %v1649
    %v3456 = vrot.slane %v3455, 4
    %v3457 = vadd.f32 %v3455, %v3456
    %v3458 = vrot.slane %v3457, 2
    %v3459 = vadd.f32 %v3457, %v3458
    %v3460 = vrot.slane %v3459, 1
    %v3461 = vadd.f32 %v3459, %v3460
    %v3462 = vadd.f32 %v1644, %v1650
    %v3463 = vrot.slane %v3462, 4
    %v3464 = vadd.f32 %v3462, %v3463
    %v3465 = vrot.slane %v3464, 2
    %v3466 = vadd.f32 %v3464, %v3465
    %v3467 = vrot.slane %v3466, 1
    %v3468 = vadd.f32 %v3466, %v3467
    %v3469 = vadd.f32 %v1645, %v1651
    %v3470 = vrot.slane %v3469, 4
    %v3471 = vadd.f32 %v3469, %v3470
    %v3472 = vrot.slane %v3471, 2
    %v3473 = vadd.f32 %v3471, %v3472
    %v3474 = vrot.slane %v3473, 1
    %v3475 = vadd.f32 %v3473, %v3474
    %v3476 = vadd.f32 %v1646, %v1652
    %v3477 = vrot.slane %v3476, 4
    %v3478 = vadd.f32 %v3476, %v3477
    %v3479 = vrot.slane %v3478, 2
    %v3480 = vadd.f32 %v3478, %v3479
    %v3481 = vrot.slane %v3480, 1
    %v3482 = vadd.f32 %v3480, %v3481
    %v3483 = vadd.f32 %v1647, %v1653
    %v3484 = vrot.slane %v3483, 4
    %v3485 = vadd.f32 %v3483, %v3484
    %v3486 = vrot.slane %v3485, 2
    %v3487 = vadd.f32 %v3485, %v3486
    %v3488 = vrot.slane %v3487, 1
    %v3489 = vadd.f32 %v3487, %v3488
    %v3490 = vadd.f32 %v1654, %v1660
    %v3491 = vrot.slane %v3490, 4
    %v3492 = vadd.f32 %v3490, %v3491
    %v3493 = vrot.slane %v3492, 2
    %v3494 = vadd.f32 %v3492, %v3493
    %v3495 = vrot.slane %v3494, 1
    %v3496 = vadd.f32 %v3494, %v3495
    %v3497 = vadd.f32 %v1655, %v1661
    %v3498 = vrot.slane %v3497, 4
    %v3499 = vadd.f32 %v3497, %v3498
    %v3500 = vrot.slane %v3499, 2
    %v3501 = vadd.f32 %v3499, %v3500
    %v3502 = vrot.slane %v3501, 1
    %v3503 = vadd.f32 %v3501, %v3502
    %v3504 = vadd.f32 %v1656, %v1662
    %v3505 = vrot.slane %v3504, 4
    %v3506 = vadd.f32 %v3504, %v3505
    %v3507 = vrot.slane %v3506, 2
    %v3508 = vadd.f32 %v3506, %v3507
    %v3509 = vrot.slane %v3508, 1
    %v3510 = vadd.f32 %v3508, %v3509
    %v3511 = vadd.f32 %v1657, %v1663
    %v3512 = vrot.slane %v3511, 4
    %v3513 = vadd.f32 %v3511, %v3512
    %v3514 = vrot.slane %v3513, 2
    %v3515 = vadd.f32 %v3513, %v3514
    %v3516 = vrot.slane %v3515, 1
    %v3517 = vadd.f32 %v3515, %v3516
    %v3518 = vadd.f32 %v1658, %v1664
    %v3519 = vrot.slane %v3518, 4
    %v3520 = vadd.f32 %v3518, %v3519
    %v3521 = vrot.slane %v3520, 2
    %v3522 = vadd.f32 %v3520, %v3521
    %v3523 = vrot.slane %v3522, 1
    %v3524 = vadd.f32 %v3522, %v3523
    %v3525 = vadd.f32 %v1659, %v1665
    %v3526 = vrot.slane %v3525, 4
    %v3527 = vadd.f32 %v3525, %v3526
    %v3528 = vrot.slane %v3527, 2
    %v3529 = vadd.f32 %v3527, %v3528
    %v3530 = vrot.slane %v3529, 1
    %v3531 = vadd.f32 %v3529, %v3530
    %v3532 = vadd.f32 %v1666, %v1672
    %v3533 = vrot.slane %v3532, 4
    %v3534 = vadd.f32 %v3532, %v3533
    %v3535 = vrot.slane %v3534, 2
    %v3536 = vadd.f32 %v3534, %v3535
    %v3537 = vrot.slane %v3536, 1
    %v3538 = vadd.f32 %v3536, %v3537
    %v3539 = vadd.f32 %v1667, %v1673
    %v3540 = vrot.slane %v3539, 4
    %v3541 = vadd.f32 %v3539, %v3540
    %v3542 = vrot.slane %v3541, 2
    %v3543 = vadd.f32 %v3541, %v3542
    %v3544 = vrot.slane %v3543, 1
    %v3545 = vadd.f32 %v3543, %v3544
    %v3546 = vadd.f32 %v1668, %v1674
    %v3547 = vrot.slane %v3546, 4
    %v3548 = vadd.f32 %v3546, %v3547
    %v3549 = vrot.slane %v3548, 2
    %v3550 = vadd.f32 %v3548, %v3549
    %v3551 = vrot.slane %v3550, 1
    %v3552 = vadd.f32 %v3550, %v3551
    %v3553 = vadd.f32 %v1669, %v1675
    %v3554 = vrot.slane %v3553, 4
    %v3555 = vadd.f32 %v3553, %v3554
    %v3556 = vrot.slane %v3555, 2
    %v3557 = vadd.f32 %v3555, %v3556
    %v3558 = vrot.slane %v3557, 1
    %v3559 = vadd.f32 %v3557, %v3558
    %v3560 = vadd.f32 %v1670, %v1676
    %v3561 = vrot.slane %v3560, 4
    %v3562 = vadd.f32 %v3560, %v3561
    %v3563 = vrot.slane %v3562, 2
    %v3564 = vadd.f32 %v3562, %v3563
    %v3565 = vrot.slane %v3564, 1
    %v3566 = vadd.f32 %v3564, %v3565
    %v3567 = vadd.f32 %v1671, %v1677
    %v3568 = vrot.slane %v3567, 4
    %v3569 = vadd.f32 %v3567, %v3568
    %v3570 = vrot.slane %v3569, 2
    %v3571 = vadd.f32 %v3569, %v3570
    %v3572 = vrot.slane %v3571, 1
    %v3573 = vadd.f32 %v3571, %v3572
    %v3574 = vadd.f32 %v1678, %v1684
    %v3575 = vrot.slane %v3574, 4
    %v3576 = vadd.f32 %v3574, %v3575
    %v3577 = vrot.slane %v3576, 2
    %v3578 = vadd.f32 %v3576, %v3577
    %v3579 = vrot.slane %v3578, 1
    %v3580 = vadd.f32 %v3578, %v3579
    %v3581 = vadd.f32 %v1679, %v1685
    %v3582 = vrot.slane %v3581, 4
    %v3583 = vadd.f32 %v3581, %v3582
    %v3584 = vrot.slane %v3583, 2
    %v3585 = vadd.f32 %v3583, %v3584
    %v3586 = vrot.slane %v3585, 1
    %v3587 = vadd.f32 %v3585, %v3586
    %v3588 = vadd.f32 %v1680, %v1686
    %v3589 = vrot.slane %v3588, 4
    %v3590 = vadd.f32 %v3588, %v3589
    %v3591 = vrot.slane %v3590, 2
    %v3592 = vadd.f32 %v3590, %v3591
    %v3593 = vrot.slane %v3592, 1
    %v3594 = vadd.f32 %v3592, %v3593
    %v3595 = vadd.f32 %v1681, %v1687
    %v3596 = vrot.slane %v3595, 4
    %v3597 = vadd.f32 %v3595, %v3596
    %v3598 = vrot.slane %v3597, 2
    %v3599 = vadd.f32 %v3597, %v3598
    %v3600 = vrot.slane %v3599, 1
    %v3601 = vadd.f32 %v3599, %v3600
    %v3602 = vadd.f32 %v1682, %v1688
    %v3603 = vrot.slane %v3602, 4
    %v3604 = vadd.f32 %v3602, %v3603
    %v3605 = vrot.slane %v3604, 2
    %v3606 = vadd.f32 %v3604, %v3605
    %v3607 = vrot.slane %v3606, 1
    %v3608 = vadd.f32 %v3606, %v3607
    %v3609 = vadd.f32 %v1683, %v1689
    %v3610 = vrot.slane %v3609, 4
    %v3611 = vadd.f32 %v3609, %v3610
    %v3612 = vrot.slane %v3611, 2
    %v3613 = vadd.f32 %v3611, %v3612
    %v3614 = vrot.slane %v3613, 1
    %v3615 = vadd.f32 %v3613, %v3614
    %v3616 = vadd.f32 %v1690, %v1696
    %v3617 = vrot.slane %v3616, 4
    %v3618 = vadd.f32 %v3616, %v3617
    %v3619 = vrot.slane %v3618, 2
    %v3620 = vadd.f32 %v3618, %v3619
    %v3621 = vrot.slane %v3620, 1
    %v3622 = vadd.f32 %v3620, %v3621
    %v3623 = vadd.f32 %v1691, %v1697
    %v3624 = vrot.slane %v3623, 4
    %v3625 = vadd.f32 %v3623, %v3624
    %v3626 = vrot.slane %v3625, 2
    %v3627 = vadd.f32 %v3625, %v3626
    %v3628 = vrot.slane %v3627, 1
    %v3629 = vadd.f32 %v3627, %v3628
    %v3630 = vadd.f32 %v1692, %v1698
    %v3631 = vrot.slane %v3630, 4
    %v3632 = vadd.f32 %v3630, %v3631
    %v3633 = vrot.slane %v3632, 2
    %v3634 = vadd.f32 %v3632, %v3633
    %v3635 = vrot.slane %v3634, 1
    %v3636 = vadd.f32 %v3634, %v3635
    %v3637 = vadd.f32 %v1693, %v1699
    %v3638 = vrot.slane %v3637, 4
    %v3639 = vadd.f32 %v3637, %v3638
    %v3640 = vrot.slane %v3639, 2
    %v3641 = vadd.f32 %v3639, %v3640
    %v3642 = vrot.slane %v3641, 1
    %v3643 = vadd.f32 %v3641, %v3642
    %v3644 = vadd.f32 %v1694, %v1700
    %v3645 = vrot.slane %v3644, 4
    %v3646 = vadd.f32 %v3644, %v3645
    %v3647 = vrot.slane %v3646, 2
    %v3648 = vadd.f32 %v3646, %v3647
    %v3649 = vrot.slane %v3648, 1
    %v3650 = vadd.f32 %v3648, %v3649
    %v3651 = vadd.f32 %v1695, %v1701
    %v3652 = vrot.slane %v3651, 4
    %v3653 = vadd.f32 %v3651, %v3652
    %v3654 = vrot.slane %v3653, 2
    %v3655 = vadd.f32 %v3653, %v3654
    %v3656 = vrot.slane %v3655, 1
    %v3657 = vadd.f32 %v3655, %v3656
    %v3658 = vadd.f32 %v1702, %v1708
    %v3659 = vrot.slane %v3658, 4
    %v3660 = vadd.f32 %v3658, %v3659
    %v3661 = vrot.slane %v3660, 2
    %v3662 = vadd.f32 %v3660, %v3661
    %v3663 = vrot.slane %v3662, 1
    %v3664 = vadd.f32 %v3662, %v3663
    %v3665 = vadd.f32 %v1703, %v1709
    %v3666 = vrot.slane %v3665, 4
    %v3667 = vadd.f32 %v3665, %v3666
    %v3668 = vrot.slane %v3667, 2
    %v3669 = vadd.f32 %v3667, %v3668
    %v3670 = vrot.slane %v3669, 1
    %v3671 = vadd.f32 %v3669, %v3670
    %v3672 = vadd.f32 %v1704, %v1710
    %v3673 = vrot.slane %v3672, 4
    %v3674 = vadd.f32 %v3672, %v3673
    %v3675 = vrot.slane %v3674, 2
    %v3676 = vadd.f32 %v3674, %v3675
    %v3677 = vrot.slane %v3676, 1
    %v3678 = vadd.f32 %v3676, %v3677
    %v3679 = vadd.f32 %v1705, %v1711
    %v3680 = vrot.slane %v3679, 4
    %v3681 = vadd.f32 %v3679, %v3680
    %v3682 = vrot.slane %v3681, 2
    %v3683 = vadd.f32 %v3681, %v3682
    %v3684 = vrot.slane %v3683, 1
    %v3685 = vadd.f32 %v3683, %v3684
    %v3686 = vadd.f32 %v1706, %v1712
    %v3687 = vrot.slane %v3686, 4
    %v3688 = vadd.f32 %v3686, %v3687
    %v3689 = vrot.slane %v3688, 2
    %v3690 = vadd.f32 %v3688, %v3689
    %v3691 = vrot.slane %v3690, 1
    %v3692 = vadd.f32 %v3690, %v3691
    %v3693 = vadd.f32 %v1707, %v1713
    %v3694 = vrot.slane %v3693, 4
    %v3695 = vadd.f32 %v3693, %v3694
    %v3696 = vrot.slane %v3695, 2
    %v3697 = vadd.f32 %v3695, %v3696
    %v3698 = vrot.slane %v3697, 1
    %v3699 = vadd.f32 %v3697, %v3698
    %v3700 = vadd.f32 %v1714, %v1720
    %v3701 = vrot.slane %v3700, 4
    %v3702 = vadd.f32 %v3700, %v3701
    %v3703 = vrot.slane %v3702, 2
    %v3704 = vadd.f32 %v3702, %v3703
    %v3705 = vrot.slane %v3704, 1
    %v3706 = vadd.f32 %v3704, %v3705
    %v3707 = vadd.f32 %v1715, %v1721
    %v3708 = vrot.slane %v3707, 4
    %v3709 = vadd.f32 %v3707, %v3708
    %v3710 = vrot.slane %v3709, 2
    %v3711 = vadd.f32 %v3709, %v3710
    %v3712 = vrot.slane %v3711, 1
    %v3713 = vadd.f32 %v3711, %v3712
    %v3714 = vadd.f32 %v1716, %v1722
    %v3715 = vrot.slane %v3714, 4
    %v3716 = vadd.f32 %v3714, %v3715
    %v3717 = vrot.slane %v3716, 2
    %v3718 = vadd.f32 %v3716, %v3717
    %v3719 = vrot.slane %v3718, 1
    %v3720 = vadd.f32 %v3718, %v3719
    %v3721 = vadd.f32 %v1717, %v1723
    %v3722 = vrot.slane %v3721, 4
    %v3723 = vadd.f32 %v3721, %v3722
    %v3724 = vrot.slane %v3723, 2
    %v3725 = vadd.f32 %v3723, %v3724
    %v3726 = vrot.slane %v3725, 1
    %v3727 = vadd.f32 %v3725, %v3726
    %v3728 = vadd.f32 %v1718, %v1724
    %v3729 = vrot.slane %v3728, 4
    %v3730 = vadd.f32 %v3728, %v3729
    %v3731 = vrot.slane %v3730, 2
    %v3732 = vadd.f32 %v3730, %v3731
    %v3733 = vrot.slane %v3732, 1
    %v3734 = vadd.f32 %v3732, %v3733
    %v3735 = vadd.f32 %v1719, %v1725
    %v3736 = vrot.slane %v3735, 4
    %v3737 = vadd.f32 %v3735, %v3736
    %v3738 = vrot.slane %v3737, 2
    %v3739 = vadd.f32 %v3737, %v3738
    %v3740 = vrot.slane %v3739, 1
    %v3741 = vadd.f32 %v3739, %v3740
    %vm3742 = vcmask 130048
    %v3743 = vsel %vm3742, %v616, 0.0
    %3744 = vadd.xlane.f32.xlu0 %v3743
    %v3745 = vpop.xlane.xlu0 %3744
    %v3746 = vsel %vm3742, %v617, 0.0
    %3747 = vadd.xlane.f32.xlu0 %v3746
    %v3748 = vpop.xlane.xlu0 %3747
    %v3749 = vsel %vm3742, %v618, 0.0
    %3750 = vadd.xlane.f32.xlu0 %v3749
    %v3751 = vpop.xlane.xlu0 %3750
    %v3752 = vsel %vm3742, %v619, 0.0
    %3753 = vadd.xlane.f32.xlu0 %v3752
    %v3754 = vpop.xlane.xlu0 %3753
    %v3755 = vsel %vm3742, %v620, 0.0
    %3756 = vadd.xlane.f32.xlu0 %v3755
    %v3757 = vpop.xlane.xlu0 %3756
    %v3758 = vsel %vm3742, %v621, 0.0
    %3759 = vadd.xlane.f32.xlu0 %v3758
    %v3760 = vpop.xlane.xlu0 %3759
    %v3761 = vmax.f32 %v3745, 1.0
    %v3762 = vmax.f32 %v3748, 1.0
    %v3763 = vmax.f32 %v3751, 1.0
    %v3764 = vmax.f32 %v3754, 1.0
    %v3765 = vmax.f32 %v3757, 1.0
    %v3766 = vmax.f32 %v3760, 1.0
    %v3773 = vrot.slane %v3761, 1
    %v3774 = vrot.slane %v3761, 2
    %v3775 = vrot.slane %v3761, 3
    %v3776 = vrot.slane %v3761, 4
    %v3777 = vrot.slane %v3761, 5
    %v3778 = vrot.slane %v3761, 6
    %v3779 = vrot.slane %v3761, 7
    %v3780 = vrot.slane %v3762, 1
    %v3781 = vrot.slane %v3762, 2
    %v3782 = vrot.slane %v3762, 3
    %v3783 = vrot.slane %v3762, 4
    %v3784 = vrot.slane %v3762, 5
    %v3785 = vrot.slane %v3762, 6
    %v3786 = vrot.slane %v3762, 7
    %v3787 = vrot.slane %v3763, 1
    %v3788 = vrot.slane %v3763, 2
    %v3789 = vrot.slane %v3763, 3
    %v3790 = vrot.slane %v3763, 4
    %v3791 = vrot.slane %v3763, 5
    %v3792 = vrot.slane %v3763, 6
    %v3793 = vrot.slane %v3763, 7
    %v3794 = vrot.slane %v3764, 1
    %v3795 = vrot.slane %v3764, 2
    %v3796 = vrot.slane %v3764, 3
    %v3797 = vrot.slane %v3764, 4
    %v3798 = vrot.slane %v3764, 5
    %v3799 = vrot.slane %v3764, 6
    %v3800 = vrot.slane %v3764, 7
    %v3801 = vrot.slane %v3765, 1
    %v3802 = vrot.slane %v3765, 2
    %v3803 = vrot.slane %v3765, 3
    %v3804 = vrot.slane %v3765, 4
    %v3805 = vrot.slane %v3765, 5
    %v3806 = vrot.slane %v3765, 6
    %v3807 = vrot.slane %v3765, 7
    %v3808 = vrot.slane %v3766, 1
    %v3809 = vrot.slane %v3766, 2
    %v3810 = vrot.slane %v3766, 3
    %v3811 = vrot.slane %v3766, 4
    %v3812 = vrot.slane %v3766, 5
    %v3813 = vrot.slane %v3766, 6
    %v3814 = vrot.slane %v3766, 7
    %v3863 = vrcp.pop %v3761
    %v3864 = vmul.f32 %v1732, %v3863
    %v3865 = vmul.f32 %v1739, %v3863
    %v3866 = vmul.f32 %v1746, %v3863
    %v3867 = vmul.f32 %v1753, %v3863
    %v3868 = vmul.f32 %v1760, %v3863
    %v3869 = vmul.f32 %v1767, %v3863
    %v3870 = vrcp.pop %v3773
    %v3871 = vmul.f32 %v1774, %v3870
    %v3872 = vmul.f32 %v1781, %v3870
    %v3873 = vmul.f32 %v1788, %v3870
    %v3874 = vmul.f32 %v1795, %v3870
    %v3875 = vmul.f32 %v1802, %v3870
    %v3876 = vmul.f32 %v1809, %v3870
    %v3877 = vrcp.pop %v3774
    %v3878 = vmul.f32 %v1816, %v3877
    %v3879 = vmul.f32 %v1823, %v3877
    %v3880 = vmul.f32 %v1830, %v3877
    %v3881 = vmul.f32 %v1837, %v3877
    %v3882 = vmul.f32 %v1844, %v3877
    %v3883 = vmul.f32 %v1851, %v3877
    %v3884 = vrcp.pop %v3775
    %v3885 = vmul.f32 %v1858, %v3884
    %v3886 = vmul.f32 %v1865, %v3884
    %v3887 = vmul.f32 %v1872, %v3884
    %v3888 = vmul.f32 %v1879, %v3884
    %v3889 = vmul.f32 %v1886, %v3884
    %v3890 = vmul.f32 %v1893, %v3884
    %v3891 = vrcp.pop %v3776
    %v3892 = vmul.f32 %v1900, %v3891
    %v3893 = vmul.f32 %v1907, %v3891
    %v3894 = vmul.f32 %v1914, %v3891
    %v3895 = vmul.f32 %v1921, %v3891
    %v3896 = vmul.f32 %v1928, %v3891
    %v3897 = vmul.f32 %v1935, %v3891
    %v3898 = vrcp.pop %v3777
    %v3899 = vmul.f32 %v1942, %v3898
    %v3900 = vmul.f32 %v1949, %v3898
    %v3901 = vmul.f32 %v1956, %v3898
    %v3902 = vmul.f32 %v1963, %v3898
    %v3903 = vmul.f32 %v1970, %v3898
    %v3904 = vmul.f32 %v1977, %v3898
    %v3905 = vrcp.pop %v3778
    %v3906 = vmul.f32 %v1984, %v3905
    %v3907 = vmul.f32 %v1991, %v3905
    %v3908 = vmul.f32 %v1998, %v3905
    %v3909 = vmul.f32 %v2005, %v3905
    %v3910 = vmul.f32 %v2012, %v3905
    %v3911 = vmul.f32 %v2019, %v3905
    %v3912 = vrcp.pop %v3779
    %v3913 = vmul.f32 %v2026, %v3912
    %v3914 = vmul.f32 %v2033, %v3912
    %v3915 = vmul.f32 %v2040, %v3912
    %v3916 = vmul.f32 %v2047, %v3912
    %v3917 = vmul.f32 %v2054, %v3912
    %v3918 = vmul.f32 %v2061, %v3912
    %v3919 = vrcp.pop %v3762
    %v3920 = vmul.f32 %v2068, %v3919
    %v3921 = vmul.f32 %v2075, %v3919
    %v3922 = vmul.f32 %v2082, %v3919
    %v3923 = vmul.f32 %v2089, %v3919
    %v3924 = vmul.f32 %v2096, %v3919
    %v3925 = vmul.f32 %v2103, %v3919
    %v3926 = vrcp.pop %v3780
    %v3927 = vmul.f32 %v2110, %v3926
    %v3928 = vmul.f32 %v2117, %v3926
    %v3929 = vmul.f32 %v2124, %v3926
    %v3930 = vmul.f32 %v2131, %v3926
    %v3931 = vmul.f32 %v2138, %v3926
    %v3932 = vmul.f32 %v2145, %v3926
    %v3933 = vrcp.pop %v3781
    %v3934 = vmul.f32 %v2152, %v3933
    %v3935 = vmul.f32 %v2159, %v3933
    %v3936 = vmul.f32 %v2166, %v3933
    %v3937 = vmul.f32 %v2173, %v3933
    %v3938 = vmul.f32 %v2180, %v3933
    %v3939 = vmul.f32 %v2187, %v3933
    %v3940 = vrcp.pop %v3782
    %v3941 = vmul.f32 %v2194, %v3940
    %v3942 = vmul.f32 %v2201, %v3940
    %v3943 = vmul.f32 %v2208, %v3940
    %v3944 = vmul.f32 %v2215, %v3940
    %v3945 = vmul.f32 %v2222, %v3940
    %v3946 = vmul.f32 %v2229, %v3940
    %v3947 = vrcp.pop %v3783
    %v3948 = vmul.f32 %v2236, %v3947
    %v3949 = vmul.f32 %v2243, %v3947
    %v3950 = vmul.f32 %v2250, %v3947
    %v3951 = vmul.f32 %v2257, %v3947
    %v3952 = vmul.f32 %v2264, %v3947
    %v3953 = vmul.f32 %v2271, %v3947
    %v3954 = vrcp.pop %v3784
    %v3955 = vmul.f32 %v2278, %v3954
    %v3956 = vmul.f32 %v2285, %v3954
    %v3957 = vmul.f32 %v2292, %v3954
    %v3958 = vmul.f32 %v2299, %v3954
    %v3959 = vmul.f32 %v2306, %v3954
    %v3960 = vmul.f32 %v2313, %v3954
    %v3961 = vrcp.pop %v3785
    %v3962 = vmul.f32 %v2320, %v3961
    %v3963 = vmul.f32 %v2327, %v3961
    %v3964 = vmul.f32 %v2334, %v3961
    %v3965 = vmul.f32 %v2341, %v3961
    %v3966 = vmul.f32 %v2348, %v3961
    %v3967 = vmul.f32 %v2355, %v3961
    %v3968 = vrcp.pop %v3786
    %v3969 = vmul.f32 %v2362, %v3968
    %v3970 = vmul.f32 %v2369, %v3968
    %v3971 = vmul.f32 %v2376, %v3968
    %v3972 = vmul.f32 %v2383, %v3968
    %v3973 = vmul.f32 %v2390, %v3968
    %v3974 = vmul.f32 %v2397, %v3968
    %v3975 = vrcp.pop %v3763
    %v3976 = vmul.f32 %v2404, %v3975
    %v3977 = vmul.f32 %v2411, %v3975
    %v3978 = vmul.f32 %v2418, %v3975
    %v3979 = vmul.f32 %v2425, %v3975
    %v3980 = vmul.f32 %v2432, %v3975
    %v3981 = vmul.f32 %v2439, %v3975
    %v3982 = vrcp.pop %v3787
    %v3983 = vmul.f32 %v2446, %v3982
    %v3984 = vmul.f32 %v2453, %v3982
    %v3985 = vmul.f32 %v2460, %v3982
    %v3986 = vmul.f32 %v2467, %v3982
    %v3987 = vmul.f32 %v2474, %v3982
    %v3988 = vmul.f32 %v2481, %v3982
    %v3989 = vrcp.pop %v3788
    %v3990 = vmul.f32 %v2488, %v3989
    %v3991 = vmul.f32 %v2495, %v3989
    %v3992 = vmul.f32 %v2502, %v3989
    %v3993 = vmul.f32 %v2509, %v3989
    %v3994 = vmul.f32 %v2516, %v3989
    %v3995 = vmul.f32 %v2523, %v3989
    %v3996 = vrcp.pop %v3789
    %v3997 = vmul.f32 %v2530, %v3996
    %v3998 = vmul.f32 %v2537, %v3996
    %v3999 = vmul.f32 %v2544, %v3996
    %v4000 = vmul.f32 %v2551, %v3996
    %v4001 = vmul.f32 %v2558, %v3996
    %v4002 = vmul.f32 %v2565, %v3996
    %v4003 = vrcp.pop %v3790
    %v4004 = vmul.f32 %v2572, %v4003
    %v4005 = vmul.f32 %v2579, %v4003
    %v4006 = vmul.f32 %v2586, %v4003
    %v4007 = vmul.f32 %v2593, %v4003
    %v4008 = vmul.f32 %v2600, %v4003
    %v4009 = vmul.f32 %v2607, %v4003
    %v4010 = vrcp.pop %v3791
    %v4011 = vmul.f32 %v2614, %v4010
    %v4012 = vmul.f32 %v2621, %v4010
    %v4013 = vmul.f32 %v2628, %v4010
    %v4014 = vmul.f32 %v2635, %v4010
    %v4015 = vmul.f32 %v2642, %v4010
    %v4016 = vmul.f32 %v2649, %v4010
    %v4017 = vrcp.pop %v3792
    %v4018 = vmul.f32 %v2656, %v4017
    %v4019 = vmul.f32 %v2663, %v4017
    %v4020 = vmul.f32 %v2670, %v4017
    %v4021 = vmul.f32 %v2677, %v4017
    %v4022 = vmul.f32 %v2684, %v4017
    %v4023 = vmul.f32 %v2691, %v4017
    %v4024 = vrcp.pop %v3793
    %v4025 = vmul.f32 %v2698, %v4024
    %v4026 = vmul.f32 %v2705, %v4024
    %v4027 = vmul.f32 %v2712, %v4024
    %v4028 = vmul.f32 %v2719, %v4024
    %v4029 = vmul.f32 %v2726, %v4024
    %v4030 = vmul.f32 %v2733, %v4024
    %v4031 = vrcp.pop %v3764
    %v4032 = vmul.f32 %v2740, %v4031
    %v4033 = vmul.f32 %v2747, %v4031
    %v4034 = vmul.f32 %v2754, %v4031
    %v4035 = vmul.f32 %v2761, %v4031
    %v4036 = vmul.f32 %v2768, %v4031
    %v4037 = vmul.f32 %v2775, %v4031
    %v4038 = vrcp.pop %v3794
    %v4039 = vmul.f32 %v2782, %v4038
    %v4040 = vmul.f32 %v2789, %v4038
    %v4041 = vmul.f32 %v2796, %v4038
    %v4042 = vmul.f32 %v2803, %v4038
    %v4043 = vmul.f32 %v2810, %v4038
    %v4044 = vmul.f32 %v2817, %v4038
    %v4045 = vrcp.pop %v3795
    %v4046 = vmul.f32 %v2824, %v4045
    %v4047 = vmul.f32 %v2831, %v4045
    %v4048 = vmul.f32 %v2838, %v4045
    %v4049 = vmul.f32 %v2845, %v4045
    %v4050 = vmul.f32 %v2852, %v4045
    %v4051 = vmul.f32 %v2859, %v4045
    %v4052 = vrcp.pop %v3796
    %v4053 = vmul.f32 %v2866, %v4052
    %v4054 = vmul.f32 %v2873, %v4052
    %v4055 = vmul.f32 %v2880, %v4052
    %v4056 = vmul.f32 %v2887, %v4052
    %v4057 = vmul.f32 %v2894, %v4052
    %v4058 = vmul.f32 %v2901, %v4052
    %v4059 = vrcp.pop %v3797
    %v4060 = vmul.f32 %v2908, %v4059
    %v4061 = vmul.f32 %v2915, %v4059
    %v4062 = vmul.f32 %v2922, %v4059
    %v4063 = vmul.f32 %v2929, %v4059
    %v4064 = vmul.f32 %v2936, %v4059
    %v4065 = vmul.f32 %v2943, %v4059
    %v4066 = vrcp.pop %v3798
    %v4067 = vmul.f32 %v2950, %v4066
    %v4068 = vmul.f32 %v2957, %v4066
    %v4069 = vmul.f32 %v2964, %v4066
    %v4070 = vmul.f32 %v2971, %v4066
    %v4071 = vmul.f32 %v2978, %v4066
    %v4072 = vmul.f32 %v2985, %v4066
    %v4073 = vrcp.pop %v3799
    %v4074 = vmul.f32 %v2992, %v4073
    %v4075 = vmul.f32 %v2999, %v4073
    %v4076 = vmul.f32 %v3006, %v4073
    %v4077 = vmul.f32 %v3013, %v4073
    %v4078 = vmul.f32 %v3020, %v4073
    %v4079 = vmul.f32 %v3027, %v4073
    %v4080 = vrcp.pop %v3800
    %v4081 = vmul.f32 %v3034, %v4080
    %v4082 = vmul.f32 %v3041, %v4080
    %v4083 = vmul.f32 %v3048, %v4080
    %v4084 = vmul.f32 %v3055, %v4080
    %v4085 = vmul.f32 %v3062, %v4080
    %v4086 = vmul.f32 %v3069, %v4080
    %v4087 = vrcp.pop %v3765
    %v4088 = vmul.f32 %v3076, %v4087
    %v4089 = vmul.f32 %v3083, %v4087
    %v4090 = vmul.f32 %v3090, %v4087
    %v4091 = vmul.f32 %v3097, %v4087
    %v4092 = vmul.f32 %v3104, %v4087
    %v4093 = vmul.f32 %v3111, %v4087
    %v4094 = vrcp.pop %v3801
    %v4095 = vmul.f32 %v3118, %v4094
    %v4096 = vmul.f32 %v3125, %v4094
    %v4097 = vmul.f32 %v3132, %v4094
    %v4098 = vmul.f32 %v3139, %v4094
    %v4099 = vmul.f32 %v3146, %v4094
    %v4100 = vmul.f32 %v3153, %v4094
    %v4101 = vrcp.pop %v3802
    %v4102 = vmul.f32 %v3160, %v4101
    %v4103 = vmul.f32 %v3167, %v4101
    %v4104 = vmul.f32 %v3174, %v4101
    %v4105 = vmul.f32 %v3181, %v4101
    %v4106 = vmul.f32 %v3188, %v4101
    %v4107 = vmul.f32 %v3195, %v4101
    %v4108 = vrcp.pop %v3803
    %v4109 = vmul.f32 %v3202, %v4108
    %v4110 = vmul.f32 %v3209, %v4108
    %v4111 = vmul.f32 %v3216, %v4108
    %v4112 = vmul.f32 %v3223, %v4108
    %v4113 = vmul.f32 %v3230, %v4108
    %v4114 = vmul.f32 %v3237, %v4108
    %v4115 = vrcp.pop %v3804
    %v4116 = vmul.f32 %v3244, %v4115
    %v4117 = vmul.f32 %v3251, %v4115
    %v4118 = vmul.f32 %v3258, %v4115
    %v4119 = vmul.f32 %v3265, %v4115
    %v4120 = vmul.f32 %v3272, %v4115
    %v4121 = vmul.f32 %v3279, %v4115
    %v4122 = vrcp.pop %v3805
    %v4123 = vmul.f32 %v3286, %v4122
    %v4124 = vmul.f32 %v3293, %v4122
    %v4125 = vmul.f32 %v3300, %v4122
    %v4126 = vmul.f32 %v3307, %v4122
    %v4127 = vmul.f32 %v3314, %v4122
    %v4128 = vmul.f32 %v3321, %v4122
    %v4129 = vrcp.pop %v3806
    %v4130 = vmul.f32 %v3328, %v4129
    %v4131 = vmul.f32 %v3335, %v4129
    %v4132 = vmul.f32 %v3342, %v4129
    %v4133 = vmul.f32 %v3349, %v4129
    %v4134 = vmul.f32 %v3356, %v4129
    %v4135 = vmul.f32 %v3363, %v4129
    %v4136 = vrcp.pop %v3807
    %v4137 = vmul.f32 %v3370, %v4136
    %v4138 = vmul.f32 %v3377, %v4136
    %v4139 = vmul.f32 %v3384, %v4136
    %v4140 = vmul.f32 %v3391, %v4136
    %v4141 = vmul.f32 %v3398, %v4136
    %v4142 = vmul.f32 %v3405, %v4136
    %v4143 = vrcp.pop %v3766
    %v4144 = vmul.f32 %v3412, %v4143
    %v4145 = vmul.f32 %v3419, %v4143
    %v4146 = vmul.f32 %v3426, %v4143
    %v4147 = vmul.f32 %v3433, %v4143
    %v4148 = vmul.f32 %v3440, %v4143
    %v4149 = vmul.f32 %v3447, %v4143
    %v4150 = vrcp.pop %v3808
    %v4151 = vmul.f32 %v3454, %v4150
    %v4152 = vmul.f32 %v3461, %v4150
    %v4153 = vmul.f32 %v3468, %v4150
    %v4154 = vmul.f32 %v3475, %v4150
    %v4155 = vmul.f32 %v3482, %v4150
    %v4156 = vmul.f32 %v3489, %v4150
    %v4157 = vrcp.pop %v3809
    %v4158 = vmul.f32 %v3496, %v4157
    %v4159 = vmul.f32 %v3503, %v4157
    %v4160 = vmul.f32 %v3510, %v4157
    %v4161 = vmul.f32 %v3517, %v4157
    %v4162 = vmul.f32 %v3524, %v4157
    %v4163 = vmul.f32 %v3531, %v4157
    %v4164 = vrcp.pop %v3810
    %v4165 = vmul.f32 %v3538, %v4164
    %v4166 = vmul.f32 %v3545, %v4164
    %v4167 = vmul.f32 %v3552, %v4164
    %v4168 = vmul.f32 %v3559, %v4164
    %v4169 = vmul.f32 %v3566, %v4164
    %v4170 = vmul.f32 %v3573, %v4164
    %v4171 = vrcp.pop %v3811
    %v4172 = vmul.f32 %v3580, %v4171
    %v4173 = vmul.f32 %v3587, %v4171
    %v4174 = vmul.f32 %v3594, %v4171
    %v4175 = vmul.f32 %v3601, %v4171
    %v4176 = vmul.f32 %v3608, %v4171
    %v4177 = vmul.f32 %v3615, %v4171
    %v4178 = vrcp.pop %v3812
    %v4179 = vmul.f32 %v3622, %v4178
    %v4180 = vmul.f32 %v3629, %v4178
    %v4181 = vmul.f32 %v3636, %v4178
    %v4182 = vmul.f32 %v3643, %v4178
    %v4183 = vmul.f32 %v3650, %v4178
    %v4184 = vmul.f32 %v3657, %v4178
    %v4185 = vrcp.pop %v3813
    %v4186 = vmul.f32 %v3664, %v4185
    %v4187 = vmul.f32 %v3671, %v4185
    %v4188 = vmul.f32 %v3678, %v4185
    %v4189 = vmul.f32 %v3685, %v4185
    %v4190 = vmul.f32 %v3692, %v4185
    %v4191 = vmul.f32 %v3699, %v4185
    %v4192 = vrcp.pop %v3814
    %v4193 = vmul.f32 %v3706, %v4192
    %v4194 = vmul.f32 %v3713, %v4192
    %v4195 = vmul.f32 %v3720, %v4192
    %v4196 = vmul.f32 %v3727, %v4192
    %v4197 = vmul.f32 %v3734, %v4192
    %v4198 = vmul.f32 %v3741, %v4192
    %v4199 = vmul.f32 %v3864, %v3864
    %v4200 = vmul.f32 %v3865, %v3865
    %v4201 = vmul.f32 %v3866, %v3866
    %v4202 = vmul.f32 %v3867, %v3867
    %v4203 = vmul.f32 %v3868, %v3868
    %v4204 = vmul.f32 %v3869, %v3869
    %v4205 = vmul.f32 %v3871, %v3871
    %v4206 = vmul.f32 %v3872, %v3872
    %v4207 = vmul.f32 %v3873, %v3873
    %v4208 = vmul.f32 %v3874, %v3874
    %v4209 = vmul.f32 %v3875, %v3875
    %v4210 = vmul.f32 %v3876, %v3876
    %v4211 = vmul.f32 %v3878, %v3878
    %v4212 = vmul.f32 %v3879, %v3879
    %v4213 = vmul.f32 %v3880, %v3880
    %v4214 = vmul.f32 %v3881, %v3881
    %v4215 = vmul.f32 %v3882, %v3882
    %v4216 = vmul.f32 %v3883, %v3883
    %v4217 = vmul.f32 %v3885, %v3885
    %v4218 = vmul.f32 %v3886, %v3886
    %v4219 = vmul.f32 %v3887, %v3887
    %v4220 = vmul.f32 %v3888, %v3888
    %v4221 = vmul.f32 %v3889, %v3889
    %v4222 = vmul.f32 %v3890, %v3890
    %v4223 = vmul.f32 %v3892, %v3892
    %v4224 = vmul.f32 %v3893, %v3893
    %v4225 = vmul.f32 %v3894, %v3894
    %v4226 = vmul.f32 %v3895, %v3895
    %v4227 = vmul.f32 %v3896, %v3896
    %v4228 = vmul.f32 %v3897, %v3897
    %v4229 = vmul.f32 %v3899, %v3899
    %v4230 = vmul.f32 %v3900, %v3900
    %v4231 = vmul.f32 %v3901, %v3901
    %v4232 = vmul.f32 %v3902, %v3902
    %v4233 = vmul.f32 %v3903, %v3903
    %v4234 = vmul.f32 %v3904, %v3904
    %v4235 = vmul.f32 %v3906, %v3906
    %v4236 = vmul.f32 %v3907, %v3907
    %v4237 = vmul.f32 %v3908, %v3908
    %v4238 = vmul.f32 %v3909, %v3909
    %v4239 = vmul.f32 %v3910, %v3910
    %v4240 = vmul.f32 %v3911, %v3911
    %v4241 = vmul.f32 %v3913, %v3913
    %v4242 = vmul.f32 %v3914, %v3914
    %v4243 = vmul.f32 %v3915, %v3915
    %v4244 = vmul.f32 %v3916, %v3916
    %v4245 = vmul.f32 %v3917, %v3917
    %v4246 = vmul.f32 %v3918, %v3918
    %v4247 = vmul.f32 %v3920, %v3920
    %v4248 = vmul.f32 %v3921, %v3921
    %v4249 = vmul.f32 %v3922, %v3922
    %v4250 = vmul.f32 %v3923, %v3923
    %v4251 = vmul.f32 %v3924, %v3924
    %v4252 = vmul.f32 %v3925, %v3925
    %v4253 = vmul.f32 %v3927, %v3927
    %v4254 = vmul.f32 %v3928, %v3928
    %v4255 = vmul.f32 %v3929, %v3929
    %v4256 = vmul.f32 %v3930, %v3930
    %v4257 = vmul.f32 %v3931, %v3931
    %v4258 = vmul.f32 %v3932, %v3932
    %v4259 = vmul.f32 %v3934, %v3934
    %v4260 = vmul.f32 %v3935, %v3935
    %v4261 = vmul.f32 %v3936, %v3936
    %v4262 = vmul.f32 %v3937, %v3937
    %v4263 = vmul.f32 %v3938, %v3938
    %v4264 = vmul.f32 %v3939, %v3939
    %v4265 = vmul.f32 %v3941, %v3941
    %v4266 = vmul.f32 %v3942, %v3942
    %v4267 = vmul.f32 %v3943, %v3943
    %v4268 = vmul.f32 %v3944, %v3944
    %v4269 = vmul.f32 %v3945, %v3945
    %v4270 = vmul.f32 %v3946, %v3946
    %v4271 = vmul.f32 %v3948, %v3948
    %v4272 = vmul.f32 %v3949, %v3949
    %v4273 = vmul.f32 %v3950, %v3950
    %v4274 = vmul.f32 %v3951, %v3951
    %v4275 = vmul.f32 %v3952, %v3952
    %v4276 = vmul.f32 %v3953, %v3953
    %v4277 = vmul.f32 %v3955, %v3955
    %v4278 = vmul.f32 %v3956, %v3956
    %v4279 = vmul.f32 %v3957, %v3957
    %v4280 = vmul.f32 %v3958, %v3958
    %v4281 = vmul.f32 %v3959, %v3959
    %v4282 = vmul.f32 %v3960, %v3960
    %v4283 = vmul.f32 %v3962, %v3962
    %v4284 = vmul.f32 %v3963, %v3963
    %v4285 = vmul.f32 %v3964, %v3964
    %v4286 = vmul.f32 %v3965, %v3965
    %v4287 = vmul.f32 %v3966, %v3966
    %v4288 = vmul.f32 %v3967, %v3967
    %v4289 = vmul.f32 %v3969, %v3969
    %v4290 = vmul.f32 %v3970, %v3970
    %v4291 = vmul.f32 %v3971, %v3971
    %v4292 = vmul.f32 %v3972, %v3972
    %v4293 = vmul.f32 %v3973, %v3973
    %v4294 = vmul.f32 %v3974, %v3974
    %v4295 = vmul.f32 %v3976, %v3976
    %v4296 = vmul.f32 %v3977, %v3977
    %v4297 = vmul.f32 %v3978, %v3978
    %v4298 = vmul.f32 %v3979, %v3979
    %v4299 = vmul.f32 %v3980, %v3980
    %v4300 = vmul.f32 %v3981, %v3981
    %v4301 = vmul.f32 %v3983, %v3983
    %v4302 = vmul.f32 %v3984, %v3984
    %v4303 = vmul.f32 %v3985, %v3985
    %v4304 = vmul.f32 %v3986, %v3986
    %v4305 = vmul.f32 %v3987, %v3987
    %v4306 = vmul.f32 %v3988, %v3988
    %v4307 = vmul.f32 %v3990, %v3990
    %v4308 = vmul.f32 %v3991, %v3991
    %v4309 = vmul.f32 %v3992, %v3992
    %v4310 = vmul.f32 %v3993, %v3993
    %v4311 = vmul.f32 %v3994, %v3994
    %v4312 = vmul.f32 %v3995, %v3995
    %v4313 = vmul.f32 %v3997, %v3997
    %v4314 = vmul.f32 %v3998, %v3998
    %v4315 = vmul.f32 %v3999, %v3999
    %v4316 = vmul.f32 %v4000, %v4000
    %v4317 = vmul.f32 %v4001, %v4001
    %v4318 = vmul.f32 %v4002, %v4002
    %v4319 = vmul.f32 %v4004, %v4004
    %v4320 = vmul.f32 %v4005, %v4005
    %v4321 = vmul.f32 %v4006, %v4006
    %v4322 = vmul.f32 %v4007, %v4007
    %v4323 = vmul.f32 %v4008, %v4008
    %v4324 = vmul.f32 %v4009, %v4009
    %v4325 = vmul.f32 %v4011, %v4011
    %v4326 = vmul.f32 %v4012, %v4012
    %v4327 = vmul.f32 %v4013, %v4013
    %v4328 = vmul.f32 %v4014, %v4014
    %v4329 = vmul.f32 %v4015, %v4015
    %v4330 = vmul.f32 %v4016, %v4016
    %v4331 = vmul.f32 %v4018, %v4018
    %v4332 = vmul.f32 %v4019, %v4019
    %v4333 = vmul.f32 %v4020, %v4020
    %v4334 = vmul.f32 %v4021, %v4021
    %v4335 = vmul.f32 %v4022, %v4022
    %v4336 = vmul.f32 %v4023, %v4023
    %v4337 = vmul.f32 %v4025, %v4025
    %v4338 = vmul.f32 %v4026, %v4026
    %v4339 = vmul.f32 %v4027, %v4027
    %v4340 = vmul.f32 %v4028, %v4028
    %v4341 = vmul.f32 %v4029, %v4029
    %v4342 = vmul.f32 %v4030, %v4030
    %v4343 = vmul.f32 %v4032, %v4032
    %v4344 = vmul.f32 %v4033, %v4033
    %v4345 = vmul.f32 %v4034, %v4034
    %v4346 = vmul.f32 %v4035, %v4035
    %v4347 = vmul.f32 %v4036, %v4036
    %v4348 = vmul.f32 %v4037, %v4037
    %v4349 = vmul.f32 %v4039, %v4039
    %v4350 = vmul.f32 %v4040, %v4040
    %v4351 = vmul.f32 %v4041, %v4041
    %v4352 = vmul.f32 %v4042, %v4042
    %v4353 = vmul.f32 %v4043, %v4043
    %v4354 = vmul.f32 %v4044, %v4044
    %v4355 = vmul.f32 %v4046, %v4046
    %v4356 = vmul.f32 %v4047, %v4047
    %v4357 = vmul.f32 %v4048, %v4048
    %v4358 = vmul.f32 %v4049, %v4049
    %v4359 = vmul.f32 %v4050, %v4050
    %v4360 = vmul.f32 %v4051, %v4051
    %v4361 = vmul.f32 %v4053, %v4053
    %v4362 = vmul.f32 %v4054, %v4054
    %v4363 = vmul.f32 %v4055, %v4055
    %v4364 = vmul.f32 %v4056, %v4056
    %v4365 = vmul.f32 %v4057, %v4057
    %v4366 = vmul.f32 %v4058, %v4058
    %v4367 = vmul.f32 %v4060, %v4060
    %v4368 = vmul.f32 %v4061, %v4061
    %v4369 = vmul.f32 %v4062, %v4062
    %v4370 = vmul.f32 %v4063, %v4063
    %v4371 = vmul.f32 %v4064, %v4064
    %v4372 = vmul.f32 %v4065, %v4065
    %v4373 = vmul.f32 %v4067, %v4067
    %v4374 = vmul.f32 %v4068, %v4068
    %v4375 = vmul.f32 %v4069, %v4069
    %v4376 = vmul.f32 %v4070, %v4070
    %v4377 = vmul.f32 %v4071, %v4071
    %v4378 = vmul.f32 %v4072, %v4072
    %v4379 = vmul.f32 %v4074, %v4074
    %v4380 = vmul.f32 %v4075, %v4075
    %v4381 = vmul.f32 %v4076, %v4076
    %v4382 = vmul.f32 %v4077, %v4077
    %v4383 = vmul.f32 %v4078, %v4078
    %v4384 = vmul.f32 %v4079, %v4079
    %v4385 = vmul.f32 %v4081, %v4081
    %v4386 = vmul.f32 %v4082, %v4082
    %v4387 = vmul.f32 %v4083, %v4083
    %v4388 = vmul.f32 %v4084, %v4084
    %v4389 = vmul.f32 %v4085, %v4085
    %v4390 = vmul.f32 %v4086, %v4086
    %v4391 = vmul.f32 %v4088, %v4088
    %v4392 = vmul.f32 %v4089, %v4089
    %v4393 = vmul.f32 %v4090, %v4090
    %v4394 = vmul.f32 %v4091, %v4091
    %v4395 = vmul.f32 %v4092, %v4092
    %v4396 = vmul.f32 %v4093, %v4093
    %v4397 = vmul.f32 %v4095, %v4095
    %v4398 = vmul.f32 %v4096, %v4096
    %v4399 = vmul.f32 %v4097, %v4097
    %v4400 = vmul.f32 %v4098, %v4098
    %v4401 = vmul.f32 %v4099, %v4099
    %v4402 = vmul.f32 %v4100, %v4100
    %v4403 = vmul.f32 %v4102, %v4102
    %v4404 = vmul.f32 %v4103, %v4103
    %v4405 = vmul.f32 %v4104, %v4104
    %v4406 = vmul.f32 %v4105, %v4105
    %v4407 = vmul.f32 %v4106, %v4106
    %v4408 = vmul.f32 %v4107, %v4107
    %v4409 = vmul.f32 %v4109, %v4109
    %v4410 = vmul.f32 %v4110, %v4110
    %v4411 = vmul.f32 %v4111, %v4111
    %v4412 = vmul.f32 %v4112, %v4112
    %v4413 = vmul.f32 %v4113, %v4113
    %v4414 = vmul.f32 %v4114, %v4114
    %v4415 = vmul.f32 %v4116, %v4116
    %v4416 = vmul.f32 %v4117, %v4117
    %v4417 = vmul.f32 %v4118, %v4118
    %v4418 = vmul.f32 %v4119, %v4119
    %v4419 = vmul.f32 %v4120, %v4120
    %v4420 = vmul.f32 %v4121, %v4121
    %v4421 = vmul.f32 %v4123, %v4123
    %v4422 = vmul.f32 %v4124, %v4124
    %v4423 = vmul.f32 %v4125, %v4125
    %v4424 = vmul.f32 %v4126, %v4126
    %v4425 = vmul.f32 %v4127, %v4127
    %v4426 = vmul.f32 %v4128, %v4128
    %v4427 = vmul.f32 %v4130, %v4130
    %v4428 = vmul.f32 %v4131, %v4131
    %v4429 = vmul.f32 %v4132, %v4132
    %v4430 = vmul.f32 %v4133, %v4133
    %v4431 = vmul.f32 %v4134, %v4134
    %v4432 = vmul.f32 %v4135, %v4135
    %v4433 = vmul.f32 %v4137, %v4137
    %v4434 = vmul.f32 %v4138, %v4138
    %v4435 = vmul.f32 %v4139, %v4139
    %v4436 = vmul.f32 %v4140, %v4140
    %v4437 = vmul.f32 %v4141, %v4141
    %v4438 = vmul.f32 %v4142, %v4142
    %v4439 = vmul.f32 %v4144, %v4144
    %v4440 = vmul.f32 %v4145, %v4145
    %v4441 = vmul.f32 %v4146, %v4146
    %v4442 = vmul.f32 %v4147, %v4147
    %v4443 = vmul.f32 %v4148, %v4148
    %v4444 = vmul.f32 %v4149, %v4149
    %v4445 = vmul.f32 %v4151, %v4151
    %v4446 = vmul.f32 %v4152, %v4152
    %v4447 = vmul.f32 %v4153, %v4153
    %v4448 = vmul.f32 %v4154, %v4154
    %v4449 = vmul.f32 %v4155, %v4155
    %v4450 = vmul.f32 %v4156, %v4156
    %v4451 = vmul.f32 %v4158, %v4158
    %v4452 = vmul.f32 %v4159, %v4159
    %v4453 = vmul.f32 %v4160, %v4160
    %v4454 = vmul.f32 %v4161, %v4161
    %v4455 = vmul.f32 %v4162, %v4162
    %v4456 = vmul.f32 %v4163, %v4163
    %v4457 = vmul.f32 %v4165, %v4165
    %v4458 = vmul.f32 %v4166, %v4166
    %v4459 = vmul.f32 %v4167, %v4167
    %v4460 = vmul.f32 %v4168, %v4168
    %v4461 = vmul.f32 %v4169, %v4169
    %v4462 = vmul.f32 %v4170, %v4170
    %v4463 = vmul.f32 %v4172, %v4172
    %v4464 = vmul.f32 %v4173, %v4173
    %v4465 = vmul.f32 %v4174, %v4174
    %v4466 = vmul.f32 %v4175, %v4175
    %v4467 = vmul.f32 %v4176, %v4176
    %v4468 = vmul.f32 %v4177, %v4177
    %v4469 = vmul.f32 %v4179, %v4179
    %v4470 = vmul.f32 %v4180, %v4180
    %v4471 = vmul.f32 %v4181, %v4181
    %v4472 = vmul.f32 %v4182, %v4182
    %v4473 = vmul.f32 %v4183, %v4183
    %v4474 = vmul.f32 %v4184, %v4184
    %v4475 = vmul.f32 %v4186, %v4186
    %v4476 = vmul.f32 %v4187, %v4187
    %v4477 = vmul.f32 %v4188, %v4188
    %v4478 = vmul.f32 %v4189, %v4189
    %v4479 = vmul.f32 %v4190, %v4190
    %v4480 = vmul.f32 %v4191, %v4191
    %v4481 = vmul.f32 %v4193, %v4193
    %v4482 = vmul.f32 %v4194, %v4194
    %v4483 = vmul.f32 %v4195, %v4195
    %v4484 = vmul.f32 %v4196, %v4196
    %v4485 = vmul.f32 %v4197, %v4197
    %v4486 = vmul.f32 %v4198, %v4198
    %v4775 = vrot.slane %v4205, 7
    %vm4776 = vcmask 1041409
    %v4777 = vsel %vm4776, %v4775, %v4199
    %v4778 = vrot.slane %v4211, 6
    %vm4779 = vcmask 1042434
    %v4780 = vsel %vm4779, %v4778, %v4777
    %v4781 = vrot.slane %v4217, 5
    %vm4782 = vcmask 1043459
    %v4783 = vsel %vm4782, %v4781, %v4780
    %v4784 = vrot.slane %v4223, 4
    %vm4785 = vcmask 1044484
    %v4786 = vsel %vm4785, %v4784, %v4783
    %v4787 = vrot.slane %v4229, 3
    %vm4788 = vcmask 1045509
    %v4789 = vsel %vm4788, %v4787, %v4786
    %v4790 = vrot.slane %v4235, 2
    %vm4791 = vcmask 1046534
    %v4792 = vsel %vm4791, %v4790, %v4789
    %v4793 = vrot.slane %v4241, 1
    %vm4794 = vcmask 1047559
    %v4795 = vsel %vm4794, %v4793, %v4792
    %v4796 = vrot.slane %v4206, 7
    %v4797 = vsel %vm4776, %v4796, %v4200
    %v4798 = vrot.slane %v4212, 6
    %v4799 = vsel %vm4779, %v4798, %v4797
    %v4800 = vrot.slane %v4218, 5
    %v4801 = vsel %vm4782, %v4800, %v4799
    %v4802 = vrot.slane %v4224, 4
    %v4803 = vsel %vm4785, %v4802, %v4801
    %v4804 = vrot.slane %v4230, 3
    %v4805 = vsel %vm4788, %v4804, %v4803
    %v4806 = vrot.slane %v4236, 2
    %v4807 = vsel %vm4791, %v4806, %v4805
    %v4808 = vrot.slane %v4242, 1
    %v4809 = vsel %vm4794, %v4808, %v4807
    %v4810 = vrot.slane %v4207, 7
    %v4811 = vsel %vm4776, %v4810, %v4201
    %v4812 = vrot.slane %v4213, 6
    %v4813 = vsel %vm4779, %v4812, %v4811
    %v4814 = vrot.slane %v4219, 5
    %v4815 = vsel %vm4782, %v4814, %v4813
    %v4816 = vrot.slane %v4225, 4
    %v4817 = vsel %vm4785, %v4816, %v4815
    %v4818 = vrot.slane %v4231, 3
    %v4819 = vsel %vm4788, %v4818, %v4817
    %v4820 = vrot.slane %v4237, 2
    %v4821 = vsel %vm4791, %v4820, %v4819
    %v4822 = vrot.slane %v4243, 1
    %v4823 = vsel %vm4794, %v4822, %v4821
    %v4824 = vrot.slane %v4208, 7
    %v4825 = vsel %vm4776, %v4824, %v4202
    %v4826 = vrot.slane %v4214, 6
    %v4827 = vsel %vm4779, %v4826, %v4825
    %v4828 = vrot.slane %v4220, 5
    %v4829 = vsel %vm4782, %v4828, %v4827
    %v4830 = vrot.slane %v4226, 4
    %v4831 = vsel %vm4785, %v4830, %v4829
    %v4832 = vrot.slane %v4232, 3
    %v4833 = vsel %vm4788, %v4832, %v4831
    %v4834 = vrot.slane %v4238, 2
    %v4835 = vsel %vm4791, %v4834, %v4833
    %v4836 = vrot.slane %v4244, 1
    %v4837 = vsel %vm4794, %v4836, %v4835
    %v4838 = vrot.slane %v4209, 7
    %v4839 = vsel %vm4776, %v4838, %v4203
    %v4840 = vrot.slane %v4215, 6
    %v4841 = vsel %vm4779, %v4840, %v4839
    %v4842 = vrot.slane %v4221, 5
    %v4843 = vsel %vm4782, %v4842, %v4841
    %v4844 = vrot.slane %v4227, 4
    %v4845 = vsel %vm4785, %v4844, %v4843
    %v4846 = vrot.slane %v4233, 3
    %v4847 = vsel %vm4788, %v4846, %v4845
    %v4848 = vrot.slane %v4239, 2
    %v4849 = vsel %vm4791, %v4848, %v4847
    %v4850 = vrot.slane %v4245, 1
    %v4851 = vsel %vm4794, %v4850, %v4849
    %v4852 = vrot.slane %v4210, 7
    %v4853 = vsel %vm4776, %v4852, %v4204
    %v4854 = vrot.slane %v4216, 6
    %v4855 = vsel %vm4779, %v4854, %v4853
    %v4856 = vrot.slane %v4222, 5
    %v4857 = vsel %vm4782, %v4856, %v4855
    %v4858 = vrot.slane %v4228, 4
    %v4859 = vsel %vm4785, %v4858, %v4857
    %v4860 = vrot.slane %v4234, 3
    %v4861 = vsel %vm4788, %v4860, %v4859
    %v4862 = vrot.slane %v4240, 2
    %v4863 = vsel %vm4791, %v4862, %v4861
    %v4864 = vrot.slane %v4246, 1
    %v4865 = vsel %vm4794, %v4864, %v4863
    %v4866 = vrot.slane %v4253, 7
    %v4867 = vsel %vm4776, %v4866, %v4247
    %v4868 = vrot.slane %v4259, 6
    %v4869 = vsel %vm4779, %v4868, %v4867
    %v4870 = vrot.slane %v4265, 5
    %v4871 = vsel %vm4782, %v4870, %v4869
    %v4872 = vrot.slane %v4271, 4
    %v4873 = vsel %vm4785, %v4872, %v4871
    %v4874 = vrot.slane %v4277, 3
    %v4875 = vsel %vm4788, %v4874, %v4873
    %v4876 = vrot.slane %v4283, 2
    %v4877 = vsel %vm4791, %v4876, %v4875
    %v4878 = vrot.slane %v4289, 1
    %v4879 = vsel %vm4794, %v4878, %v4877
    %v4880 = vrot.slane %v4254, 7
    %v4881 = vsel %vm4776, %v4880, %v4248
    %v4882 = vrot.slane %v4260, 6
    %v4883 = vsel %vm4779, %v4882, %v4881
    %v4884 = vrot.slane %v4266, 5
    %v4885 = vsel %vm4782, %v4884, %v4883
    %v4886 = vrot.slane %v4272, 4
    %v4887 = vsel %vm4785, %v4886, %v4885
    %v4888 = vrot.slane %v4278, 3
    %v4889 = vsel %vm4788, %v4888, %v4887
    %v4890 = vrot.slane %v4284, 2
    %v4891 = vsel %vm4791, %v4890, %v4889
    %v4892 = vrot.slane %v4290, 1
    %v4893 = vsel %vm4794, %v4892, %v4891
    %v4894 = vrot.slane %v4255, 7
    %v4895 = vsel %vm4776, %v4894, %v4249
    %v4896 = vrot.slane %v4261, 6
    %v4897 = vsel %vm4779, %v4896, %v4895
    %v4898 = vrot.slane %v4267, 5
    %v4899 = vsel %vm4782, %v4898, %v4897
    %v4900 = vrot.slane %v4273, 4
    %v4901 = vsel %vm4785, %v4900, %v4899
    %v4902 = vrot.slane %v4279, 3
    %v4903 = vsel %vm4788, %v4902, %v4901
    %v4904 = vrot.slane %v4285, 2
    %v4905 = vsel %vm4791, %v4904, %v4903
    %v4906 = vrot.slane %v4291, 1
    %v4907 = vsel %vm4794, %v4906, %v4905
    %v4908 = vrot.slane %v4256, 7
    %v4909 = vsel %vm4776, %v4908, %v4250
    %v4910 = vrot.slane %v4262, 6
    %v4911 = vsel %vm4779, %v4910, %v4909
    %v4912 = vrot.slane %v4268, 5
    %v4913 = vsel %vm4782, %v4912, %v4911
    %v4914 = vrot.slane %v4274, 4
    %v4915 = vsel %vm4785, %v4914, %v4913
    %v4916 = vrot.slane %v4280, 3
    %v4917 = vsel %vm4788, %v4916, %v4915
    %v4918 = vrot.slane %v4286, 2
    %v4919 = vsel %vm4791, %v4918, %v4917
    %v4920 = vrot.slane %v4292, 1
    %v4921 = vsel %vm4794, %v4920, %v4919
    %v4922 = vrot.slane %v4257, 7
    %v4923 = vsel %vm4776, %v4922, %v4251
    %v4924 = vrot.slane %v4263, 6
    %v4925 = vsel %vm4779, %v4924, %v4923
    %v4926 = vrot.slane %v4269, 5
    %v4927 = vsel %vm4782, %v4926, %v4925
    %v4928 = vrot.slane %v4275, 4
    %v4929 = vsel %vm4785, %v4928, %v4927
    %v4930 = vrot.slane %v4281, 3
    %v4931 = vsel %vm4788, %v4930, %v4929
    %v4932 = vrot.slane %v4287, 2
    %v4933 = vsel %vm4791, %v4932, %v4931
    %v4934 = vrot.slane %v4293, 1
    %v4935 = vsel %vm4794, %v4934, %v4933
    %v4936 = vrot.slane %v4258, 7
    %v4937 = vsel %vm4776, %v4936, %v4252
    %v4938 = vrot.slane %v4264, 6
    %v4939 = vsel %vm4779, %v4938, %v4937
    %v4940 = vrot.slane %v4270, 5
    %v4941 = vsel %vm4782, %v4940, %v4939
    %v4942 = vrot.slane %v4276, 4
    %v4943 = vsel %vm4785, %v4942, %v4941
    %v4944 = vrot.slane %v4282, 3
    %v4945 = vsel %vm4788, %v4944, %v4943
    %v4946 = vrot.slane %v4288, 2
    %v4947 = vsel %vm4791, %v4946, %v4945
    %v4948 = vrot.slane %v4294, 1
    %v4949 = vsel %vm4794, %v4948, %v4947
    %v4950 = vrot.slane %v4301, 7
    %v4951 = vsel %vm4776, %v4950, %v4295
    %v4952 = vrot.slane %v4307, 6
    %v4953 = vsel %vm4779, %v4952, %v4951
    %v4954 = vrot.slane %v4313, 5
    %v4955 = vsel %vm4782, %v4954, %v4953
    %v4956 = vrot.slane %v4319, 4
    %v4957 = vsel %vm4785, %v4956, %v4955
    %v4958 = vrot.slane %v4325, 3
    %v4959 = vsel %vm4788, %v4958, %v4957
    %v4960 = vrot.slane %v4331, 2
    %v4961 = vsel %vm4791, %v4960, %v4959
    %v4962 = vrot.slane %v4337, 1
    %v4963 = vsel %vm4794, %v4962, %v4961
    %v4964 = vrot.slane %v4302, 7
    %v4965 = vsel %vm4776, %v4964, %v4296
    %v4966 = vrot.slane %v4308, 6
    %v4967 = vsel %vm4779, %v4966, %v4965
    %v4968 = vrot.slane %v4314, 5
    %v4969 = vsel %vm4782, %v4968, %v4967
    %v4970 = vrot.slane %v4320, 4
    %v4971 = vsel %vm4785, %v4970, %v4969
    %v4972 = vrot.slane %v4326, 3
    %v4973 = vsel %vm4788, %v4972, %v4971
    %v4974 = vrot.slane %v4332, 2
    %v4975 = vsel %vm4791, %v4974, %v4973
    %v4976 = vrot.slane %v4338, 1
    %v4977 = vsel %vm4794, %v4976, %v4975
    %v4978 = vrot.slane %v4303, 7
    %v4979 = vsel %vm4776, %v4978, %v4297
    %v4980 = vrot.slane %v4309, 6
    %v4981 = vsel %vm4779, %v4980, %v4979
    %v4982 = vrot.slane %v4315, 5
    %v4983 = vsel %vm4782, %v4982, %v4981
    %v4984 = vrot.slane %v4321, 4
    %v4985 = vsel %vm4785, %v4984, %v4983
    %v4986 = vrot.slane %v4327, 3
    %v4987 = vsel %vm4788, %v4986, %v4985
    %v4988 = vrot.slane %v4333, 2
    %v4989 = vsel %vm4791, %v4988, %v4987
    %v4990 = vrot.slane %v4339, 1
    %v4991 = vsel %vm4794, %v4990, %v4989
    %v4992 = vrot.slane %v4304, 7
    %v4993 = vsel %vm4776, %v4992, %v4298
    %v4994 = vrot.slane %v4310, 6
    %v4995 = vsel %vm4779, %v4994, %v4993
    %v4996 = vrot.slane %v4316, 5
    %v4997 = vsel %vm4782, %v4996, %v4995
    %v4998 = vrot.slane %v4322, 4
    %v4999 = vsel %vm4785, %v4998, %v4997
    %v5000 = vrot.slane %v4328, 3
    %v5001 = vsel %vm4788, %v5000, %v4999
    %v5002 = vrot.slane %v4334, 2
    %v5003 = vsel %vm4791, %v5002, %v5001
    %v5004 = vrot.slane %v4340, 1
    %v5005 = vsel %vm4794, %v5004, %v5003
    %v5006 = vrot.slane %v4305, 7
    %v5007 = vsel %vm4776, %v5006, %v4299
    %v5008 = vrot.slane %v4311, 6
    %v5009 = vsel %vm4779, %v5008, %v5007
    %v5010 = vrot.slane %v4317, 5
    %v5011 = vsel %vm4782, %v5010, %v5009
    %v5012 = vrot.slane %v4323, 4
    %v5013 = vsel %vm4785, %v5012, %v5011
    %v5014 = vrot.slane %v4329, 3
    %v5015 = vsel %vm4788, %v5014, %v5013
    %v5016 = vrot.slane %v4335, 2
    %v5017 = vsel %vm4791, %v5016, %v5015
    %v5018 = vrot.slane %v4341, 1
    %v5019 = vsel %vm4794, %v5018, %v5017
    %v5020 = vrot.slane %v4306, 7
    %v5021 = vsel %vm4776, %v5020, %v4300
    %v5022 = vrot.slane %v4312, 6
    %v5023 = vsel %vm4779, %v5022, %v5021
    %v5024 = vrot.slane %v4318, 5
    %v5025 = vsel %vm4782, %v5024, %v5023
    %v5026 = vrot.slane %v4324, 4
    %v5027 = vsel %vm4785, %v5026, %v5025
    %v5028 = vrot.slane %v4330, 3
    %v5029 = vsel %vm4788, %v5028, %v5027
    %v5030 = vrot.slane %v4336, 2
    %v5031 = vsel %vm4791, %v5030, %v5029
    %v5032 = vrot.slane %v4342, 1
    %v5033 = vsel %vm4794, %v5032, %v5031
    %v5034 = vrot.slane %v4349, 7
    %v5035 = vsel %vm4776, %v5034, %v4343
    %v5036 = vrot.slane %v4355, 6
    %v5037 = vsel %vm4779, %v5036, %v5035
    %v5038 = vrot.slane %v4361, 5
    %v5039 = vsel %vm4782, %v5038, %v5037
    %v5040 = vrot.slane %v4367, 4
    %v5041 = vsel %vm4785, %v5040, %v5039
    %v5042 = vrot.slane %v4373, 3
    %v5043 = vsel %vm4788, %v5042, %v5041
    %v5044 = vrot.slane %v4379, 2
    %v5045 = vsel %vm4791, %v5044, %v5043
    %v5046 = vrot.slane %v4385, 1
    %v5047 = vsel %vm4794, %v5046, %v5045
    %v5048 = vrot.slane %v4350, 7
    %v5049 = vsel %vm4776, %v5048, %v4344
    %v5050 = vrot.slane %v4356, 6
    %v5051 = vsel %vm4779, %v5050, %v5049
    %v5052 = vrot.slane %v4362, 5
    %v5053 = vsel %vm4782, %v5052, %v5051
    %v5054 = vrot.slane %v4368, 4
    %v5055 = vsel %vm4785, %v5054, %v5053
    %v5056 = vrot.slane %v4374, 3
    %v5057 = vsel %vm4788, %v5056, %v5055
    %v5058 = vrot.slane %v4380, 2
    %v5059 = vsel %vm4791, %v5058, %v5057
    %v5060 = vrot.slane %v4386, 1
    %v5061 = vsel %vm4794, %v5060, %v5059
    %v5062 = vrot.slane %v4351, 7
    %v5063 = vsel %vm4776, %v5062, %v4345
    %v5064 = vrot.slane %v4357, 6
    %v5065 = vsel %vm4779, %v5064, %v5063
    %v5066 = vrot.slane %v4363, 5
    %v5067 = vsel %vm4782, %v5066, %v5065
    %v5068 = vrot.slane %v4369, 4
    %v5069 = vsel %vm4785, %v5068, %v5067
    %v5070 = vrot.slane %v4375, 3
    %v5071 = vsel %vm4788, %v5070, %v5069
    %v5072 = vrot.slane %v4381, 2
    %v5073 = vsel %vm4791, %v5072, %v5071
    %v5074 = vrot.slane %v4387, 1
    %v5075 = vsel %vm4794, %v5074, %v5073
    %v5076 = vrot.slane %v4352, 7
    %v5077 = vsel %vm4776, %v5076, %v4346
    %v5078 = vrot.slane %v4358, 6
    %v5079 = vsel %vm4779, %v5078, %v5077
    %v5080 = vrot.slane %v4364, 5
    %v5081 = vsel %vm4782, %v5080, %v5079
    %v5082 = vrot.slane %v4370, 4
    %v5083 = vsel %vm4785, %v5082, %v5081
    %v5084 = vrot.slane %v4376, 3
    %v5085 = vsel %vm4788, %v5084, %v5083
    %v5086 = vrot.slane %v4382, 2
    %v5087 = vsel %vm4791, %v5086, %v5085
    %v5088 = vrot.slane %v4388, 1
    %v5089 = vsel %vm4794, %v5088, %v5087
    %v5090 = vrot.slane %v4353, 7
    %v5091 = vsel %vm4776, %v5090, %v4347
    %v5092 = vrot.slane %v4359, 6
    %v5093 = vsel %vm4779, %v5092, %v5091
    %v5094 = vrot.slane %v4365, 5
    %v5095 = vsel %vm4782, %v5094, %v5093
    %v5096 = vrot.slane %v4371, 4
    %v5097 = vsel %vm4785, %v5096, %v5095
    %v5098 = vrot.slane %v4377, 3
    %v5099 = vsel %vm4788, %v5098, %v5097
    %v5100 = vrot.slane %v4383, 2
    %v5101 = vsel %vm4791, %v5100, %v5099
    %v5102 = vrot.slane %v4389, 1
    %v5103 = vsel %vm4794, %v5102, %v5101
    %v5104 = vrot.slane %v4354, 7
    %v5105 = vsel %vm4776, %v5104, %v4348
    %v5106 = vrot.slane %v4360, 6
    %v5107 = vsel %vm4779, %v5106, %v5105
    %v5108 = vrot.slane %v4366, 5
    %v5109 = vsel %vm4782, %v5108, %v5107
    %v5110 = vrot.slane %v4372, 4
    %v5111 = vsel %vm4785, %v5110, %v5109
    %v5112 = vrot.slane %v4378, 3
    %v5113 = vsel %vm4788, %v5112, %v5111
    %v5114 = vrot.slane %v4384, 2
    %v5115 = vsel %vm4791, %v5114, %v5113
    %v5116 = vrot.slane %v4390, 1
    %v5117 = vsel %vm4794, %v5116, %v5115
    %v5118 = vrot.slane %v4397, 7
    %v5119 = vsel %vm4776, %v5118, %v4391
    %v5120 = vrot.slane %v4403, 6
    %v5121 = vsel %vm4779, %v5120, %v5119
    %v5122 = vrot.slane %v4409, 5
    %v5123 = vsel %vm4782, %v5122, %v5121
    %v5124 = vrot.slane %v4415, 4
    %v5125 = vsel %vm4785, %v5124, %v5123
    %v5126 = vrot.slane %v4421, 3
    %v5127 = vsel %vm4788, %v5126, %v5125
    %v5128 = vrot.slane %v4427, 2
    %v5129 = vsel %vm4791, %v5128, %v5127
    %v5130 = vrot.slane %v4433, 1
    %v5131 = vsel %vm4794, %v5130, %v5129
    %v5132 = vrot.slane %v4398, 7
    %v5133 = vsel %vm4776, %v5132, %v4392
    %v5134 = vrot.slane %v4404, 6
    %v5135 = vsel %vm4779, %v5134, %v5133
    %v5136 = vrot.slane %v4410, 5
    %v5137 = vsel %vm4782, %v5136, %v5135
    %v5138 = vrot.slane %v4416, 4
    %v5139 = vsel %vm4785, %v5138, %v5137
    %v5140 = vrot.slane %v4422, 3
    %v5141 = vsel %vm4788, %v5140, %v5139
    %v5142 = vrot.slane %v4428, 2
    %v5143 = vsel %vm4791, %v5142, %v5141
    %v5144 = vrot.slane %v4434, 1
    %v5145 = vsel %vm4794, %v5144, %v5143
    %v5146 = vrot.slane %v4399, 7
    %v5147 = vsel %vm4776, %v5146, %v4393
    %v5148 = vrot.slane %v4405, 6
    %v5149 = vsel %vm4779, %v5148, %v5147
    %v5150 = vrot.slane %v4411, 5
    %v5151 = vsel %vm4782, %v5150, %v5149
    %v5152 = vrot.slane %v4417, 4
    %v5153 = vsel %vm4785, %v5152, %v5151
    %v5154 = vrot.slane %v4423, 3
    %v5155 = vsel %vm4788, %v5154, %v5153
    %v5156 = vrot.slane %v4429, 2
    %v5157 = vsel %vm4791, %v5156, %v5155
    %v5158 = vrot.slane %v4435, 1
    %v5159 = vsel %vm4794, %v5158, %v5157
    %v5160 = vrot.slane %v4400, 7
    %v5161 = vsel %vm4776, %v5160, %v4394
    %v5162 = vrot.slane %v4406, 6
    %v5163 = vsel %vm4779, %v5162, %v5161
    %v5164 = vrot.slane %v4412, 5
    %v5165 = vsel %vm4782, %v5164, %v5163
    %v5166 = vrot.slane %v4418, 4
    %v5167 = vsel %vm4785, %v5166, %v5165
    %v5168 = vrot.slane %v4424, 3
    %v5169 = vsel %vm4788, %v5168, %v5167
    %v5170 = vrot.slane %v4430, 2
    %v5171 = vsel %vm4791, %v5170, %v5169
    %v5172 = vrot.slane %v4436, 1
    %v5173 = vsel %vm4794, %v5172, %v5171
    %v5174 = vrot.slane %v4401, 7
    %v5175 = vsel %vm4776, %v5174, %v4395
    %v5176 = vrot.slane %v4407, 6
    %v5177 = vsel %vm4779, %v5176, %v5175
    %v5178 = vrot.slane %v4413, 5
    %v5179 = vsel %vm4782, %v5178, %v5177
    %v5180 = vrot.slane %v4419, 4
    %v5181 = vsel %vm4785, %v5180, %v5179
    %v5182 = vrot.slane %v4425, 3
    %v5183 = vsel %vm4788, %v5182, %v5181
    %v5184 = vrot.slane %v4431, 2
    %v5185 = vsel %vm4791, %v5184, %v5183
    %v5186 = vrot.slane %v4437, 1
    %v5187 = vsel %vm4794, %v5186, %v5185
    %v5188 = vrot.slane %v4402, 7
    %v5189 = vsel %vm4776, %v5188, %v4396
    %v5190 = vrot.slane %v4408, 6
    %v5191 = vsel %vm4779, %v5190, %v5189
    %v5192 = vrot.slane %v4414, 5
    %v5193 = vsel %vm4782, %v5192, %v5191
    %v5194 = vrot.slane %v4420, 4
    %v5195 = vsel %vm4785, %v5194, %v5193
    %v5196 = vrot.slane %v4426, 3
    %v5197 = vsel %vm4788, %v5196, %v5195
    %v5198 = vrot.slane %v4432, 2
    %v5199 = vsel %vm4791, %v5198, %v5197
    %v5200 = vrot.slane %v4438, 1
    %v5201 = vsel %vm4794, %v5200, %v5199
    %v5202 = vrot.slane %v4445, 7
    %v5203 = vsel %vm4776, %v5202, %v4439
    %v5204 = vrot.slane %v4451, 6
    %v5205 = vsel %vm4779, %v5204, %v5203
    %v5206 = vrot.slane %v4457, 5
    %v5207 = vsel %vm4782, %v5206, %v5205
    %v5208 = vrot.slane %v4463, 4
    %v5209 = vsel %vm4785, %v5208, %v5207
    %v5210 = vrot.slane %v4469, 3
    %v5211 = vsel %vm4788, %v5210, %v5209
    %v5212 = vrot.slane %v4475, 2
    %v5213 = vsel %vm4791, %v5212, %v5211
    %v5214 = vrot.slane %v4481, 1
    %v5215 = vsel %vm4794, %v5214, %v5213
    %v5216 = vrot.slane %v4446, 7
    %v5217 = vsel %vm4776, %v5216, %v4440
    %v5218 = vrot.slane %v4452, 6
    %v5219 = vsel %vm4779, %v5218, %v5217
    %v5220 = vrot.slane %v4458, 5
    %v5221 = vsel %vm4782, %v5220, %v5219
    %v5222 = vrot.slane %v4464, 4
    %v5223 = vsel %vm4785, %v5222, %v5221
    %v5224 = vrot.slane %v4470, 3
    %v5225 = vsel %vm4788, %v5224, %v5223
    %v5226 = vrot.slane %v4476, 2
    %v5227 = vsel %vm4791, %v5226, %v5225
    %v5228 = vrot.slane %v4482, 1
    %v5229 = vsel %vm4794, %v5228, %v5227
    %v5230 = vrot.slane %v4447, 7
    %v5231 = vsel %vm4776, %v5230, %v4441
    %v5232 = vrot.slane %v4453, 6
    %v5233 = vsel %vm4779, %v5232, %v5231
    %v5234 = vrot.slane %v4459, 5
    %v5235 = vsel %vm4782, %v5234, %v5233
    %v5236 = vrot.slane %v4465, 4
    %v5237 = vsel %vm4785, %v5236, %v5235
    %v5238 = vrot.slane %v4471, 3
    %v5239 = vsel %vm4788, %v5238, %v5237
    %v5240 = vrot.slane %v4477, 2
    %v5241 = vsel %vm4791, %v5240, %v5239
    %v5242 = vrot.slane %v4483, 1
    %v5243 = vsel %vm4794, %v5242, %v5241
    %v5244 = vrot.slane %v4448, 7
    %v5245 = vsel %vm4776, %v5244, %v4442
    %v5246 = vrot.slane %v4454, 6
    %v5247 = vsel %vm4779, %v5246, %v5245
    %v5248 = vrot.slane %v4460, 5
    %v5249 = vsel %vm4782, %v5248, %v5247
    %v5250 = vrot.slane %v4466, 4
    %v5251 = vsel %vm4785, %v5250, %v5249
    %v5252 = vrot.slane %v4472, 3
    %v5253 = vsel %vm4788, %v5252, %v5251
    %v5254 = vrot.slane %v4478, 2
    %v5255 = vsel %vm4791, %v5254, %v5253
    %v5256 = vrot.slane %v4484, 1
    %v5257 = vsel %vm4794, %v5256, %v5255
    %v5258 = vrot.slane %v4449, 7
    %v5259 = vsel %vm4776, %v5258, %v4443
    %v5260 = vrot.slane %v4455, 6
    %v5261 = vsel %vm4779, %v5260, %v5259
    %v5262 = vrot.slane %v4461, 5
    %v5263 = vsel %vm4782, %v5262, %v5261
    %v5264 = vrot.slane %v4467, 4
    %v5265 = vsel %vm4785, %v5264, %v5263
    %v5266 = vrot.slane %v4473, 3
    %v5267 = vsel %vm4788, %v5266, %v5265
    %v5268 = vrot.slane %v4479, 2
    %v5269 = vsel %vm4791, %v5268, %v5267
    %v5270 = vrot.slane %v4485, 1
    %v5271 = vsel %vm4794, %v5270, %v5269
    %v5272 = vrot.slane %v4450, 7
    %v5273 = vsel %vm4776, %v5272, %v4444
    %v5274 = vrot.slane %v4456, 6
    %v5275 = vsel %vm4779, %v5274, %v5273
    %v5276 = vrot.slane %v4462, 5
    %v5277 = vsel %vm4782, %v5276, %v5275
    %v5278 = vrot.slane %v4468, 4
    %v5279 = vsel %vm4785, %v5278, %v5277
    %v5280 = vrot.slane %v4474, 3
    %v5281 = vsel %vm4788, %v5280, %v5279
    %v5282 = vrot.slane %v4480, 2
    %v5283 = vsel %vm4791, %v5282, %v5281
    %v5284 = vrot.slane %v4486, 1
    %v5285 = vsel %vm4794, %v5284, %v5283
    %v5322 = vadd.f32 %v4795, %v4809
    %v5323 = vadd.f32 %v5322, %v4823
    %v5324 = vadd.f32 %v5323, %v4837
    %v5325 = vadd.f32 %v5324, %v4851
    %v5326 = vadd.f32 %v5325, %v4865
    %5327 = vadd.xlane.f32.xlu0 %v5326
    %v5328 = vpop.xlane.xlu0 %5327
    %v5329 = vadd.f32 %v4879, %v4893
    %v5330 = vadd.f32 %v5329, %v4907
    %v5331 = vadd.f32 %v5330, %v4921
    %v5332 = vadd.f32 %v5331, %v4935
    %v5333 = vadd.f32 %v5332, %v4949
    %5334 = vadd.xlane.f32.xlu0 %v5333
    %v5335 = vpop.xlane.xlu0 %5334
    %v5336 = vadd.f32 %v4963, %v4977
    %v5337 = vadd.f32 %v5336, %v4991
    %v5338 = vadd.f32 %v5337, %v5005
    %v5339 = vadd.f32 %v5338, %v5019
    %v5340 = vadd.f32 %v5339, %v5033
    %5341 = vadd.xlane.f32.xlu0 %v5340
    %v5342 = vpop.xlane.xlu0 %5341
    %v5343 = vadd.f32 %v5047, %v5061
    %v5344 = vadd.f32 %v5343, %v5075
    %v5345 = vadd.f32 %v5344, %v5089
    %v5346 = vadd.f32 %v5345, %v5103
    %v5347 = vadd.f32 %v5346, %v5117
    %5348 = vadd.xlane.f32.xlu0 %v5347
    %v5349 = vpop.xlane.xlu0 %5348
    %v5350 = vadd.f32 %v5131, %v5145
    %v5351 = vadd.f32 %v5350, %v5159
    %v5352 = vadd.f32 %v5351, %v5173
    %v5353 = vadd.f32 %v5352, %v5187
    %v5354 = vadd.f32 %v5353, %v5201
    %5355 = vadd.xlane.f32.xlu0 %v5354
    %v5356 = vpop.xlane.xlu0 %5355
    %v5357 = vadd.f32 %v5215, %v5229
    %v5358 = vadd.f32 %v5357, %v5243
    %v5359 = vadd.f32 %v5358, %v5257
    %v5360 = vadd.f32 %v5359, %v5271
    %v5361 = vadd.f32 %v5360, %v5285
    %5362 = vadd.xlane.f32.xlu0 %v5361
    %v5363 = vpop.xlane.xlu0 %5362
    %v5364 = vmax.f32 %v5328, 1e-24
    %v5365 = vmax.f32 %v5335, 1e-24
    %v5366 = vmax.f32 %v5342, 1e-24
    %v5367 = vmax.f32 %v5349, 1e-24
    %v5368 = vmax.f32 %v5356, 1e-24
    %v5369 = vmax.f32 %v5363, 1e-24
    %v5370 = vrsqrt.pop %v5364
    %v5371 = vrsqrt.pop %v5365
    %v5372 = vrsqrt.pop %v5366
    %v5373 = vrsqrt.pop %v5367
    %v5374 = vrsqrt.pop %v5368
    %v5375 = vrsqrt.pop %v5369
    %v5382 = vrot.slane %v5370, 1
    %v5383 = vrot.slane %v5370, 2
    %v5384 = vrot.slane %v5370, 3
    %v5385 = vrot.slane %v5370, 4
    %v5386 = vrot.slane %v5370, 5
    %v5387 = vrot.slane %v5370, 6
    %v5388 = vrot.slane %v5370, 7
    %v5389 = vrot.slane %v5371, 1
    %v5390 = vrot.slane %v5371, 2
    %v5391 = vrot.slane %v5371, 3
    %v5392 = vrot.slane %v5371, 4
    %v5393 = vrot.slane %v5371, 5
    %v5394 = vrot.slane %v5371, 6
    %v5395 = vrot.slane %v5371, 7
    %v5396 = vrot.slane %v5372, 1
    %v5397 = vrot.slane %v5372, 2
    %v5398 = vrot.slane %v5372, 3
    %v5399 = vrot.slane %v5372, 4
    %v5400 = vrot.slane %v5372, 5
    %v5401 = vrot.slane %v5372, 6
    %v5402 = vrot.slane %v5372, 7
    %v5403 = vrot.slane %v5373, 1
    %v5404 = vrot.slane %v5373, 2
    %v5405 = vrot.slane %v5373, 3
    %v5406 = vrot.slane %v5373, 4
    %v5407 = vrot.slane %v5373, 5
    %v5408 = vrot.slane %v5373, 6
    %v5409 = vrot.slane %v5373, 7
    %v5410 = vrot.slane %v5374, 1
    %v5411 = vrot.slane %v5374, 2
    %v5412 = vrot.slane %v5374, 3
    %v5413 = vrot.slane %v5374, 4
    %v5414 = vrot.slane %v5374, 5
    %v5415 = vrot.slane %v5374, 6
    %v5416 = vrot.slane %v5374, 7
    %v5417 = vrot.slane %v5375, 1
    %v5418 = vrot.slane %v5375, 2
    %v5419 = vrot.slane %v5375, 3
    %v5420 = vrot.slane %v5375, 4
    %v5421 = vrot.slane %v5375, 5
    %v5422 = vrot.slane %v5375, 6
    %v5423 = vrot.slane %v5375, 7
    %v5472 = vmul.f32 %v3864, %v5370
    %v5473 = vmul.f32 %v3865, %v5370
    %v5474 = vmul.f32 %v3866, %v5370
    %v5475 = vmul.f32 %v3867, %v5370
    %v5476 = vmul.f32 %v3868, %v5370
    %v5477 = vmul.f32 %v3869, %v5370
    %v5478 = vmul.f32 %v3871, %v5382
    %v5479 = vmul.f32 %v3872, %v5382
    %v5480 = vmul.f32 %v3873, %v5382
    %v5481 = vmul.f32 %v3874, %v5382
    %v5482 = vmul.f32 %v3875, %v5382
    %v5483 = vmul.f32 %v3876, %v5382
    %v5484 = vmul.f32 %v3878, %v5383
    %v5485 = vmul.f32 %v3879, %v5383
    %v5486 = vmul.f32 %v3880, %v5383
    %v5487 = vmul.f32 %v3881, %v5383
    %v5488 = vmul.f32 %v3882, %v5383
    %v5489 = vmul.f32 %v3883, %v5383
    %v5490 = vmul.f32 %v3885, %v5384
    %v5491 = vmul.f32 %v3886, %v5384
    %v5492 = vmul.f32 %v3887, %v5384
    %v5493 = vmul.f32 %v3888, %v5384
    %v5494 = vmul.f32 %v3889, %v5384
    %v5495 = vmul.f32 %v3890, %v5384
    %v5496 = vmul.f32 %v3892, %v5385
    %v5497 = vmul.f32 %v3893, %v5385
    %v5498 = vmul.f32 %v3894, %v5385
    %v5499 = vmul.f32 %v3895, %v5385
    %v5500 = vmul.f32 %v3896, %v5385
    %v5501 = vmul.f32 %v3897, %v5385
    %v5502 = vmul.f32 %v3899, %v5386
    %v5503 = vmul.f32 %v3900, %v5386
    %v5504 = vmul.f32 %v3901, %v5386
    %v5505 = vmul.f32 %v3902, %v5386
    %v5506 = vmul.f32 %v3903, %v5386
    %v5507 = vmul.f32 %v3904, %v5386
    %v5508 = vmul.f32 %v3906, %v5387
    %v5509 = vmul.f32 %v3907, %v5387
    %v5510 = vmul.f32 %v3908, %v5387
    %v5511 = vmul.f32 %v3909, %v5387
    %v5512 = vmul.f32 %v3910, %v5387
    %v5513 = vmul.f32 %v3911, %v5387
    %v5514 = vmul.f32 %v3913, %v5388
    %v5515 = vmul.f32 %v3914, %v5388
    %v5516 = vmul.f32 %v3915, %v5388
    %v5517 = vmul.f32 %v3916, %v5388
    %v5518 = vmul.f32 %v3917, %v5388
    %v5519 = vmul.f32 %v3918, %v5388
    %v5520 = vmul.f32 %v3920, %v5371
    %v5521 = vmul.f32 %v3921, %v5371
    %v5522 = vmul.f32 %v3922, %v5371
    %v5523 = vmul.f32 %v3923, %v5371
    %v5524 = vmul.f32 %v3924, %v5371
    %v5525 = vmul.f32 %v3925, %v5371
    %v5526 = vmul.f32 %v3927, %v5389
    %v5527 = vmul.f32 %v3928, %v5389
    %v5528 = vmul.f32 %v3929, %v5389
    %v5529 = vmul.f32 %v3930, %v5389
    %v5530 = vmul.f32 %v3931, %v5389
    %v5531 = vmul.f32 %v3932, %v5389
    %v5532 = vmul.f32 %v3934, %v5390
    %v5533 = vmul.f32 %v3935, %v5390
    %v5534 = vmul.f32 %v3936, %v5390
    %v5535 = vmul.f32 %v3937, %v5390
    %v5536 = vmul.f32 %v3938, %v5390
    %v5537 = vmul.f32 %v3939, %v5390
    %v5538 = vmul.f32 %v3941, %v5391
    %v5539 = vmul.f32 %v3942, %v5391
    %v5540 = vmul.f32 %v3943, %v5391
    %v5541 = vmul.f32 %v3944, %v5391
    %v5542 = vmul.f32 %v3945, %v5391
    %v5543 = vmul.f32 %v3946, %v5391
    %v5544 = vmul.f32 %v3948, %v5392
    %v5545 = vmul.f32 %v3949, %v5392
    %v5546 = vmul.f32 %v3950, %v5392
    %v5547 = vmul.f32 %v3951, %v5392
    %v5548 = vmul.f32 %v3952, %v5392
    %v5549 = vmul.f32 %v3953, %v5392
    %v5550 = vmul.f32 %v3955, %v5393
    %v5551 = vmul.f32 %v3956, %v5393
    %v5552 = vmul.f32 %v3957, %v5393
    %v5553 = vmul.f32 %v3958, %v5393
    %v5554 = vmul.f32 %v3959, %v5393
    %v5555 = vmul.f32 %v3960, %v5393
    %v5556 = vmul.f32 %v3962, %v5394
    %v5557 = vmul.f32 %v3963, %v5394
    %v5558 = vmul.f32 %v3964, %v5394
    %v5559 = vmul.f32 %v3965, %v5394
    %v5560 = vmul.f32 %v3966, %v5394
    %v5561 = vmul.f32 %v3967, %v5394
    %v5562 = vmul.f32 %v3969, %v5395
    %v5563 = vmul.f32 %v3970, %v5395
    %v5564 = vmul.f32 %v3971, %v5395
    %v5565 = vmul.f32 %v3972, %v5395
    %v5566 = vmul.f32 %v3973, %v5395
    %v5567 = vmul.f32 %v3974, %v5395
    %v5568 = vmul.f32 %v3976, %v5372
    %v5569 = vmul.f32 %v3977, %v5372
    %v5570 = vmul.f32 %v3978, %v5372
    %v5571 = vmul.f32 %v3979, %v5372
    %v5572 = vmul.f32 %v3980, %v5372
    %v5573 = vmul.f32 %v3981, %v5372
    %v5574 = vmul.f32 %v3983, %v5396
    %v5575 = vmul.f32 %v3984, %v5396
    %v5576 = vmul.f32 %v3985, %v5396
    %v5577 = vmul.f32 %v3986, %v5396
    %v5578 = vmul.f32 %v3987, %v5396
    %v5579 = vmul.f32 %v3988, %v5396
    %v5580 = vmul.f32 %v3990, %v5397
    %v5581 = vmul.f32 %v3991, %v5397
    %v5582 = vmul.f32 %v3992, %v5397
    %v5583 = vmul.f32 %v3993, %v5397
    %v5584 = vmul.f32 %v3994, %v5397
    %v5585 = vmul.f32 %v3995, %v5397
    %v5586 = vmul.f32 %v3997, %v5398
    %v5587 = vmul.f32 %v3998, %v5398
    %v5588 = vmul.f32 %v3999, %v5398
    %v5589 = vmul.f32 %v4000, %v5398
    %v5590 = vmul.f32 %v4001, %v5398
    %v5591 = vmul.f32 %v4002, %v5398
    %v5592 = vmul.f32 %v4004, %v5399
    %v5593 = vmul.f32 %v4005, %v5399
    %v5594 = vmul.f32 %v4006, %v5399
    %v5595 = vmul.f32 %v4007, %v5399
    %v5596 = vmul.f32 %v4008, %v5399
    %v5597 = vmul.f32 %v4009, %v5399
    %v5598 = vmul.f32 %v4011, %v5400
    %v5599 = vmul.f32 %v4012, %v5400
    %v5600 = vmul.f32 %v4013, %v5400
    %v5601 = vmul.f32 %v4014, %v5400
    %v5602 = vmul.f32 %v4015, %v5400
    %v5603 = vmul.f32 %v4016, %v5400
    %v5604 = vmul.f32 %v4018, %v5401
    %v5605 = vmul.f32 %v4019, %v5401
    %v5606 = vmul.f32 %v4020, %v5401
    %v5607 = vmul.f32 %v4021, %v5401
    %v5608 = vmul.f32 %v4022, %v5401
    %v5609 = vmul.f32 %v4023, %v5401
    %v5610 = vmul.f32 %v4025, %v5402
    %v5611 = vmul.f32 %v4026, %v5402
    %v5612 = vmul.f32 %v4027, %v5402
    %v5613 = vmul.f32 %v4028, %v5402
    %v5614 = vmul.f32 %v4029, %v5402
    %v5615 = vmul.f32 %v4030, %v5402
    %v5616 = vmul.f32 %v4032, %v5373
    %v5617 = vmul.f32 %v4033, %v5373
    %v5618 = vmul.f32 %v4034, %v5373
    %v5619 = vmul.f32 %v4035, %v5373
    %v5620 = vmul.f32 %v4036, %v5373
    %v5621 = vmul.f32 %v4037, %v5373
    %v5622 = vmul.f32 %v4039, %v5403
    %v5623 = vmul.f32 %v4040, %v5403
    %v5624 = vmul.f32 %v4041, %v5403
    %v5625 = vmul.f32 %v4042, %v5403
    %v5626 = vmul.f32 %v4043, %v5403
    %v5627 = vmul.f32 %v4044, %v5403
    %v5628 = vmul.f32 %v4046, %v5404
    %v5629 = vmul.f32 %v4047, %v5404
    %v5630 = vmul.f32 %v4048, %v5404
    %v5631 = vmul.f32 %v4049, %v5404
    %v5632 = vmul.f32 %v4050, %v5404
    %v5633 = vmul.f32 %v4051, %v5404
    %v5634 = vmul.f32 %v4053, %v5405
    %v5635 = vmul.f32 %v4054, %v5405
    %v5636 = vmul.f32 %v4055, %v5405
    %v5637 = vmul.f32 %v4056, %v5405
    %v5638 = vmul.f32 %v4057, %v5405
    %v5639 = vmul.f32 %v4058, %v5405
    %v5640 = vmul.f32 %v4060, %v5406
    %v5641 = vmul.f32 %v4061, %v5406
    %v5642 = vmul.f32 %v4062, %v5406
    %v5643 = vmul.f32 %v4063, %v5406
    %v5644 = vmul.f32 %v4064, %v5406
    %v5645 = vmul.f32 %v4065, %v5406
    %v5646 = vmul.f32 %v4067, %v5407
    %v5647 = vmul.f32 %v4068, %v5407
    %v5648 = vmul.f32 %v4069, %v5407
    %v5649 = vmul.f32 %v4070, %v5407
    %v5650 = vmul.f32 %v4071, %v5407
    %v5651 = vmul.f32 %v4072, %v5407
    %v5652 = vmul.f32 %v4074, %v5408
    %v5653 = vmul.f32 %v4075, %v5408
    %v5654 = vmul.f32 %v4076, %v5408
    %v5655 = vmul.f32 %v4077, %v5408
    %v5656 = vmul.f32 %v4078, %v5408
    %v5657 = vmul.f32 %v4079, %v5408
    %v5658 = vmul.f32 %v4081, %v5409
    %v5659 = vmul.f32 %v4082, %v5409
    %v5660 = vmul.f32 %v4083, %v5409
    %v5661 = vmul.f32 %v4084, %v5409
    %v5662 = vmul.f32 %v4085, %v5409
    %v5663 = vmul.f32 %v4086, %v5409
    %v5664 = vmul.f32 %v4088, %v5374
    %v5665 = vmul.f32 %v4089, %v5374
    %v5666 = vmul.f32 %v4090, %v5374
    %v5667 = vmul.f32 %v4091, %v5374
    %v5668 = vmul.f32 %v4092, %v5374
    %v5669 = vmul.f32 %v4093, %v5374
    %v5670 = vmul.f32 %v4095, %v5410
    %v5671 = vmul.f32 %v4096, %v5410
    %v5672 = vmul.f32 %v4097, %v5410
    %v5673 = vmul.f32 %v4098, %v5410
    %v5674 = vmul.f32 %v4099, %v5410
    %v5675 = vmul.f32 %v4100, %v5410
    %v5676 = vmul.f32 %v4102, %v5411
    %v5677 = vmul.f32 %v4103, %v5411
    %v5678 = vmul.f32 %v4104, %v5411
    %v5679 = vmul.f32 %v4105, %v5411
    %v5680 = vmul.f32 %v4106, %v5411
    %v5681 = vmul.f32 %v4107, %v5411
    %v5682 = vmul.f32 %v4109, %v5412
    %v5683 = vmul.f32 %v4110, %v5412
    %v5684 = vmul.f32 %v4111, %v5412
    %v5685 = vmul.f32 %v4112, %v5412
    %v5686 = vmul.f32 %v4113, %v5412
    %v5687 = vmul.f32 %v4114, %v5412
    %v5688 = vmul.f32 %v4116, %v5413
    %v5689 = vmul.f32 %v4117, %v5413
    %v5690 = vmul.f32 %v4118, %v5413
    %v5691 = vmul.f32 %v4119, %v5413
    %v5692 = vmul.f32 %v4120, %v5413
    %v5693 = vmul.f32 %v4121, %v5413
    %v5694 = vmul.f32 %v4123, %v5414
    %v5695 = vmul.f32 %v4124, %v5414
    %v5696 = vmul.f32 %v4125, %v5414
    %v5697 = vmul.f32 %v4126, %v5414
    %v5698 = vmul.f32 %v4127, %v5414
    %v5699 = vmul.f32 %v4128, %v5414
    %v5700 = vmul.f32 %v4130, %v5415
    %v5701 = vmul.f32 %v4131, %v5415
    %v5702 = vmul.f32 %v4132, %v5415
    %v5703 = vmul.f32 %v4133, %v5415
    %v5704 = vmul.f32 %v4134, %v5415
    %v5705 = vmul.f32 %v4135, %v5415
    %v5706 = vmul.f32 %v4137, %v5416
    %v5707 = vmul.f32 %v4138, %v5416
    %v5708 = vmul.f32 %v4139, %v5416
    %v5709 = vmul.f32 %v4140, %v5416
    %v5710 = vmul.f32 %v4141, %v5416
    %v5711 = vmul.f32 %v4142, %v5416
    %v5712 = vmul.f32 %v4144, %v5375
    %v5713 = vmul.f32 %v4145, %v5375
    %v5714 = vmul.f32 %v4146, %v5375
    %v5715 = vmul.f32 %v4147, %v5375
    %v5716 = vmul.f32 %v4148, %v5375
    %v5717 = vmul.f32 %v4149, %v5375
    %v5718 = vmul.f32 %v4151, %v5417
    %v5719 = vmul.f32 %v4152, %v5417
    %v5720 = vmul.f32 %v4153, %v5417
    %v5721 = vmul.f32 %v4154, %v5417
    %v5722 = vmul.f32 %v4155, %v5417
    %v5723 = vmul.f32 %v4156, %v5417
    %v5724 = vmul.f32 %v4158, %v5418
    %v5725 = vmul.f32 %v4159, %v5418
    %v5726 = vmul.f32 %v4160, %v5418
    %v5727 = vmul.f32 %v4161, %v5418
    %v5728 = vmul.f32 %v4162, %v5418
    %v5729 = vmul.f32 %v4163, %v5418
    %v5730 = vmul.f32 %v4165, %v5419
    %v5731 = vmul.f32 %v4166, %v5419
    %v5732 = vmul.f32 %v4167, %v5419
    %v5733 = vmul.f32 %v4168, %v5419
    %v5734 = vmul.f32 %v4169, %v5419
    %v5735 = vmul.f32 %v4170, %v5419
    %v5736 = vmul.f32 %v4172, %v5420
    %v5737 = vmul.f32 %v4173, %v5420
    %v5738 = vmul.f32 %v4174, %v5420
    %v5739 = vmul.f32 %v4175, %v5420
    %v5740 = vmul.f32 %v4176, %v5420
    %v5741 = vmul.f32 %v4177, %v5420
    %v5742 = vmul.f32 %v4179, %v5421
    %v5743 = vmul.f32 %v4180, %v5421
    %v5744 = vmul.f32 %v4181, %v5421
    %v5745 = vmul.f32 %v4182, %v5421
    %v5746 = vmul.f32 %v4183, %v5421
    %v5747 = vmul.f32 %v4184, %v5421
    %v5748 = vmul.f32 %v4186, %v5422
    %v5749 = vmul.f32 %v4187, %v5422
    %v5750 = vmul.f32 %v4188, %v5422
    %v5751 = vmul.f32 %v4189, %v5422
    %v5752 = vmul.f32 %v4190, %v5422
    %v5753 = vmul.f32 %v4191, %v5422
    %v5754 = vmul.f32 %v4193, %v5423
    %v5755 = vmul.f32 %v4194, %v5423
    %v5756 = vmul.f32 %v4195, %v5423
    %v5757 = vmul.f32 %v4196, %v5423
    %v5758 = vmul.f32 %v4197, %v5423
    %v5759 = vmul.f32 %v4198, %v5423
    %v6048 = vrot.slane %v5478, 7
    %v6049 = vsel %vm4776, %v6048, %v5472
    %v6050 = vrot.slane %v5484, 6
    %v6051 = vsel %vm4779, %v6050, %v6049
    %v6052 = vrot.slane %v5490, 5
    %v6053 = vsel %vm4782, %v6052, %v6051
    %v6054 = vrot.slane %v5496, 4
    %v6055 = vsel %vm4785, %v6054, %v6053
    %v6056 = vrot.slane %v5502, 3
    %v6057 = vsel %vm4788, %v6056, %v6055
    %v6058 = vrot.slane %v5508, 2
    %v6059 = vsel %vm4791, %v6058, %v6057
    %v6060 = vrot.slane %v5514, 1
    %v6061 = vsel %vm4794, %v6060, %v6059
    %v6062 = vrot.slane %v5479, 7
    %v6063 = vsel %vm4776, %v6062, %v5473
    %v6064 = vrot.slane %v5485, 6
    %v6065 = vsel %vm4779, %v6064, %v6063
    %v6066 = vrot.slane %v5491, 5
    %v6067 = vsel %vm4782, %v6066, %v6065
    %v6068 = vrot.slane %v5497, 4
    %v6069 = vsel %vm4785, %v6068, %v6067
    %v6070 = vrot.slane %v5503, 3
    %v6071 = vsel %vm4788, %v6070, %v6069
    %v6072 = vrot.slane %v5509, 2
    %v6073 = vsel %vm4791, %v6072, %v6071
    %v6074 = vrot.slane %v5515, 1
    %v6075 = vsel %vm4794, %v6074, %v6073
    %v6076 = vrot.slane %v5480, 7
    %v6077 = vsel %vm4776, %v6076, %v5474
    %v6078 = vrot.slane %v5486, 6
    %v6079 = vsel %vm4779, %v6078, %v6077
    %v6080 = vrot.slane %v5492, 5
    %v6081 = vsel %vm4782, %v6080, %v6079
    %v6082 = vrot.slane %v5498, 4
    %v6083 = vsel %vm4785, %v6082, %v6081
    %v6084 = vrot.slane %v5504, 3
    %v6085 = vsel %vm4788, %v6084, %v6083
    %v6086 = vrot.slane %v5510, 2
    %v6087 = vsel %vm4791, %v6086, %v6085
    %v6088 = vrot.slane %v5516, 1
    %v6089 = vsel %vm4794, %v6088, %v6087
    %v6090 = vrot.slane %v5481, 7
    %v6091 = vsel %vm4776, %v6090, %v5475
    %v6092 = vrot.slane %v5487, 6
    %v6093 = vsel %vm4779, %v6092, %v6091
    %v6094 = vrot.slane %v5493, 5
    %v6095 = vsel %vm4782, %v6094, %v6093
    %v6096 = vrot.slane %v5499, 4
    %v6097 = vsel %vm4785, %v6096, %v6095
    %v6098 = vrot.slane %v5505, 3
    %v6099 = vsel %vm4788, %v6098, %v6097
    %v6100 = vrot.slane %v5511, 2
    %v6101 = vsel %vm4791, %v6100, %v6099
    %v6102 = vrot.slane %v5517, 1
    %v6103 = vsel %vm4794, %v6102, %v6101
    %v6104 = vrot.slane %v5482, 7
    %v6105 = vsel %vm4776, %v6104, %v5476
    %v6106 = vrot.slane %v5488, 6
    %v6107 = vsel %vm4779, %v6106, %v6105
    %v6108 = vrot.slane %v5494, 5
    %v6109 = vsel %vm4782, %v6108, %v6107
    %v6110 = vrot.slane %v5500, 4
    %v6111 = vsel %vm4785, %v6110, %v6109
    %v6112 = vrot.slane %v5506, 3
    %v6113 = vsel %vm4788, %v6112, %v6111
    %v6114 = vrot.slane %v5512, 2
    %v6115 = vsel %vm4791, %v6114, %v6113
    %v6116 = vrot.slane %v5518, 1
    %v6117 = vsel %vm4794, %v6116, %v6115
    %v6118 = vrot.slane %v5483, 7
    %v6119 = vsel %vm4776, %v6118, %v5477
    %v6120 = vrot.slane %v5489, 6
    %v6121 = vsel %vm4779, %v6120, %v6119
    %v6122 = vrot.slane %v5495, 5
    %v6123 = vsel %vm4782, %v6122, %v6121
    %v6124 = vrot.slane %v5501, 4
    %v6125 = vsel %vm4785, %v6124, %v6123
    %v6126 = vrot.slane %v5507, 3
    %v6127 = vsel %vm4788, %v6126, %v6125
    %v6128 = vrot.slane %v5513, 2
    %v6129 = vsel %vm4791, %v6128, %v6127
    %v6130 = vrot.slane %v5519, 1
    %v6131 = vsel %vm4794, %v6130, %v6129
    %v6132 = vrot.slane %v5526, 7
    %v6133 = vsel %vm4776, %v6132, %v5520
    %v6134 = vrot.slane %v5532, 6
    %v6135 = vsel %vm4779, %v6134, %v6133
    %v6136 = vrot.slane %v5538, 5
    %v6137 = vsel %vm4782, %v6136, %v6135
    %v6138 = vrot.slane %v5544, 4
    %v6139 = vsel %vm4785, %v6138, %v6137
    %v6140 = vrot.slane %v5550, 3
    %v6141 = vsel %vm4788, %v6140, %v6139
    %v6142 = vrot.slane %v5556, 2
    %v6143 = vsel %vm4791, %v6142, %v6141
    %v6144 = vrot.slane %v5562, 1
    %v6145 = vsel %vm4794, %v6144, %v6143
    %v6146 = vrot.slane %v5527, 7
    %v6147 = vsel %vm4776, %v6146, %v5521
    %v6148 = vrot.slane %v5533, 6
    %v6149 = vsel %vm4779, %v6148, %v6147
    %v6150 = vrot.slane %v5539, 5
    %v6151 = vsel %vm4782, %v6150, %v6149
    %v6152 = vrot.slane %v5545, 4
    %v6153 = vsel %vm4785, %v6152, %v6151
    %v6154 = vrot.slane %v5551, 3
    %v6155 = vsel %vm4788, %v6154, %v6153
    %v6156 = vrot.slane %v5557, 2
    %v6157 = vsel %vm4791, %v6156, %v6155
    %v6158 = vrot.slane %v5563, 1
    %v6159 = vsel %vm4794, %v6158, %v6157
    %v6160 = vrot.slane %v5528, 7
    %v6161 = vsel %vm4776, %v6160, %v5522
    %v6162 = vrot.slane %v5534, 6
    %v6163 = vsel %vm4779, %v6162, %v6161
    %v6164 = vrot.slane %v5540, 5
    %v6165 = vsel %vm4782, %v6164, %v6163
    %v6166 = vrot.slane %v5546, 4
    %v6167 = vsel %vm4785, %v6166, %v6165
    %v6168 = vrot.slane %v5552, 3
    %v6169 = vsel %vm4788, %v6168, %v6167
    %v6170 = vrot.slane %v5558, 2
    %v6171 = vsel %vm4791, %v6170, %v6169
    %v6172 = vrot.slane %v5564, 1
    %v6173 = vsel %vm4794, %v6172, %v6171
    %v6174 = vrot.slane %v5529, 7
    %v6175 = vsel %vm4776, %v6174, %v5523
    %v6176 = vrot.slane %v5535, 6
    %v6177 = vsel %vm4779, %v6176, %v6175
    %v6178 = vrot.slane %v5541, 5
    %v6179 = vsel %vm4782, %v6178, %v6177
    %v6180 = vrot.slane %v5547, 4
    %v6181 = vsel %vm4785, %v6180, %v6179
    %v6182 = vrot.slane %v5553, 3
    %v6183 = vsel %vm4788, %v6182, %v6181
    %v6184 = vrot.slane %v5559, 2
    %v6185 = vsel %vm4791, %v6184, %v6183
    %v6186 = vrot.slane %v5565, 1
    %v6187 = vsel %vm4794, %v6186, %v6185
    %v6188 = vrot.slane %v5530, 7
    %v6189 = vsel %vm4776, %v6188, %v5524
    %v6190 = vrot.slane %v5536, 6
    %v6191 = vsel %vm4779, %v6190, %v6189
    %v6192 = vrot.slane %v5542, 5
    %v6193 = vsel %vm4782, %v6192, %v6191
    %v6194 = vrot.slane %v5548, 4
    %v6195 = vsel %vm4785, %v6194, %v6193
    %v6196 = vrot.slane %v5554, 3
    %v6197 = vsel %vm4788, %v6196, %v6195
    %v6198 = vrot.slane %v5560, 2
    %v6199 = vsel %vm4791, %v6198, %v6197
    %v6200 = vrot.slane %v5566, 1
    %v6201 = vsel %vm4794, %v6200, %v6199
    %v6202 = vrot.slane %v5531, 7
    %v6203 = vsel %vm4776, %v6202, %v5525
    %v6204 = vrot.slane %v5537, 6
    %v6205 = vsel %vm4779, %v6204, %v6203
    %v6206 = vrot.slane %v5543, 5
    %v6207 = vsel %vm4782, %v6206, %v6205
    %v6208 = vrot.slane %v5549, 4
    %v6209 = vsel %vm4785, %v6208, %v6207
    %v6210 = vrot.slane %v5555, 3
    %v6211 = vsel %vm4788, %v6210, %v6209
    %v6212 = vrot.slane %v5561, 2
    %v6213 = vsel %vm4791, %v6212, %v6211
    %v6214 = vrot.slane %v5567, 1
    %v6215 = vsel %vm4794, %v6214, %v6213
    %v6216 = vrot.slane %v5574, 7
    %v6217 = vsel %vm4776, %v6216, %v5568
    %v6218 = vrot.slane %v5580, 6
    %v6219 = vsel %vm4779, %v6218, %v6217
    %v6220 = vrot.slane %v5586, 5
    %v6221 = vsel %vm4782, %v6220, %v6219
    %v6222 = vrot.slane %v5592, 4
    %v6223 = vsel %vm4785, %v6222, %v6221
    %v6224 = vrot.slane %v5598, 3
    %v6225 = vsel %vm4788, %v6224, %v6223
    %v6226 = vrot.slane %v5604, 2
    %v6227 = vsel %vm4791, %v6226, %v6225
    %v6228 = vrot.slane %v5610, 1
    %v6229 = vsel %vm4794, %v6228, %v6227
    %v6230 = vrot.slane %v5575, 7
    %v6231 = vsel %vm4776, %v6230, %v5569
    %v6232 = vrot.slane %v5581, 6
    %v6233 = vsel %vm4779, %v6232, %v6231
    %v6234 = vrot.slane %v5587, 5
    %v6235 = vsel %vm4782, %v6234, %v6233
    %v6236 = vrot.slane %v5593, 4
    %v6237 = vsel %vm4785, %v6236, %v6235
    %v6238 = vrot.slane %v5599, 3
    %v6239 = vsel %vm4788, %v6238, %v6237
    %v6240 = vrot.slane %v5605, 2
    %v6241 = vsel %vm4791, %v6240, %v6239
    %v6242 = vrot.slane %v5611, 1
    %v6243 = vsel %vm4794, %v6242, %v6241
    %v6244 = vrot.slane %v5576, 7
    %v6245 = vsel %vm4776, %v6244, %v5570
    %v6246 = vrot.slane %v5582, 6
    %v6247 = vsel %vm4779, %v6246, %v6245
    %v6248 = vrot.slane %v5588, 5
    %v6249 = vsel %vm4782, %v6248, %v6247
    %v6250 = vrot.slane %v5594, 4
    %v6251 = vsel %vm4785, %v6250, %v6249
    %v6252 = vrot.slane %v5600, 3
    %v6253 = vsel %vm4788, %v6252, %v6251
    %v6254 = vrot.slane %v5606, 2
    %v6255 = vsel %vm4791, %v6254, %v6253
    %v6256 = vrot.slane %v5612, 1
    %v6257 = vsel %vm4794, %v6256, %v6255
    %v6258 = vrot.slane %v5577, 7
    %v6259 = vsel %vm4776, %v6258, %v5571
    %v6260 = vrot.slane %v5583, 6
    %v6261 = vsel %vm4779, %v6260, %v6259
    %v6262 = vrot.slane %v5589, 5
    %v6263 = vsel %vm4782, %v6262, %v6261
    %v6264 = vrot.slane %v5595, 4
    %v6265 = vsel %vm4785, %v6264, %v6263
    %v6266 = vrot.slane %v5601, 3
    %v6267 = vsel %vm4788, %v6266, %v6265
    %v6268 = vrot.slane %v5607, 2
    %v6269 = vsel %vm4791, %v6268, %v6267
    %v6270 = vrot.slane %v5613, 1
    %v6271 = vsel %vm4794, %v6270, %v6269
    %v6272 = vrot.slane %v5578, 7
    %v6273 = vsel %vm4776, %v6272, %v5572
    %v6274 = vrot.slane %v5584, 6
    %v6275 = vsel %vm4779, %v6274, %v6273
    %v6276 = vrot.slane %v5590, 5
    %v6277 = vsel %vm4782, %v6276, %v6275
    %v6278 = vrot.slane %v5596, 4
    %v6279 = vsel %vm4785, %v6278, %v6277
    %v6280 = vrot.slane %v5602, 3
    %v6281 = vsel %vm4788, %v6280, %v6279
    %v6282 = vrot.slane %v5608, 2
    %v6283 = vsel %vm4791, %v6282, %v6281
    %v6284 = vrot.slane %v5614, 1
    %v6285 = vsel %vm4794, %v6284, %v6283
    %v6286 = vrot.slane %v5579, 7
    %v6287 = vsel %vm4776, %v6286, %v5573
    %v6288 = vrot.slane %v5585, 6
    %v6289 = vsel %vm4779, %v6288, %v6287
    %v6290 = vrot.slane %v5591, 5
    %v6291 = vsel %vm4782, %v6290, %v6289
    %v6292 = vrot.slane %v5597, 4
    %v6293 = vsel %vm4785, %v6292, %v6291
    %v6294 = vrot.slane %v5603, 3
    %v6295 = vsel %vm4788, %v6294, %v6293
    %v6296 = vrot.slane %v5609, 2
    %v6297 = vsel %vm4791, %v6296, %v6295
    %v6298 = vrot.slane %v5615, 1
    %v6299 = vsel %vm4794, %v6298, %v6297
    %v6300 = vrot.slane %v5622, 7
    %v6301 = vsel %vm4776, %v6300, %v5616
    %v6302 = vrot.slane %v5628, 6
    %v6303 = vsel %vm4779, %v6302, %v6301
    %v6304 = vrot.slane %v5634, 5
    %v6305 = vsel %vm4782, %v6304, %v6303
    %v6306 = vrot.slane %v5640, 4
    %v6307 = vsel %vm4785, %v6306, %v6305
    %v6308 = vrot.slane %v5646, 3
    %v6309 = vsel %vm4788, %v6308, %v6307
    %v6310 = vrot.slane %v5652, 2
    %v6311 = vsel %vm4791, %v6310, %v6309
    %v6312 = vrot.slane %v5658, 1
    %v6313 = vsel %vm4794, %v6312, %v6311
    %v6314 = vrot.slane %v5623, 7
    %v6315 = vsel %vm4776, %v6314, %v5617
    %v6316 = vrot.slane %v5629, 6
    %v6317 = vsel %vm4779, %v6316, %v6315
    %v6318 = vrot.slane %v5635, 5
    %v6319 = vsel %vm4782, %v6318, %v6317
    %v6320 = vrot.slane %v5641, 4
    %v6321 = vsel %vm4785, %v6320, %v6319
    %v6322 = vrot.slane %v5647, 3
    %v6323 = vsel %vm4788, %v6322, %v6321
    %v6324 = vrot.slane %v5653, 2
    %v6325 = vsel %vm4791, %v6324, %v6323
    %v6326 = vrot.slane %v5659, 1
    %v6327 = vsel %vm4794, %v6326, %v6325
    %v6328 = vrot.slane %v5624, 7
    %v6329 = vsel %vm4776, %v6328, %v5618
    %v6330 = vrot.slane %v5630, 6
    %v6331 = vsel %vm4779, %v6330, %v6329
    %v6332 = vrot.slane %v5636, 5
    %v6333 = vsel %vm4782, %v6332, %v6331
    %v6334 = vrot.slane %v5642, 4
    %v6335 = vsel %vm4785, %v6334, %v6333
    %v6336 = vrot.slane %v5648, 3
    %v6337 = vsel %vm4788, %v6336, %v6335
    %v6338 = vrot.slane %v5654, 2
    %v6339 = vsel %vm4791, %v6338, %v6337
    %v6340 = vrot.slane %v5660, 1
    %v6341 = vsel %vm4794, %v6340, %v6339
    %v6342 = vrot.slane %v5625, 7
    %v6343 = vsel %vm4776, %v6342, %v5619
    %v6344 = vrot.slane %v5631, 6
    %v6345 = vsel %vm4779, %v6344, %v6343
    %v6346 = vrot.slane %v5637, 5
    %v6347 = vsel %vm4782, %v6346, %v6345
    %v6348 = vrot.slane %v5643, 4
    %v6349 = vsel %vm4785, %v6348, %v6347
    %v6350 = vrot.slane %v5649, 3
    %v6351 = vsel %vm4788, %v6350, %v6349
    %v6352 = vrot.slane %v5655, 2
    %v6353 = vsel %vm4791, %v6352, %v6351
    %v6354 = vrot.slane %v5661, 1
    %v6355 = vsel %vm4794, %v6354, %v6353
    %v6356 = vrot.slane %v5626, 7
    %v6357 = vsel %vm4776, %v6356, %v5620
    %v6358 = vrot.slane %v5632, 6
    %v6359 = vsel %vm4779, %v6358, %v6357
    %v6360 = vrot.slane %v5638, 5
    %v6361 = vsel %vm4782, %v6360, %v6359
    %v6362 = vrot.slane %v5644, 4
    %v6363 = vsel %vm4785, %v6362, %v6361
    %v6364 = vrot.slane %v5650, 3
    %v6365 = vsel %vm4788, %v6364, %v6363
    %v6366 = vrot.slane %v5656, 2
    %v6367 = vsel %vm4791, %v6366, %v6365
    %v6368 = vrot.slane %v5662, 1
    %v6369 = vsel %vm4794, %v6368, %v6367
    %v6370 = vrot.slane %v5627, 7
    %v6371 = vsel %vm4776, %v6370, %v5621
    %v6372 = vrot.slane %v5633, 6
    %v6373 = vsel %vm4779, %v6372, %v6371
    %v6374 = vrot.slane %v5639, 5
    %v6375 = vsel %vm4782, %v6374, %v6373
    %v6376 = vrot.slane %v5645, 4
    %v6377 = vsel %vm4785, %v6376, %v6375
    %v6378 = vrot.slane %v5651, 3
    %v6379 = vsel %vm4788, %v6378, %v6377
    %v6380 = vrot.slane %v5657, 2
    %v6381 = vsel %vm4791, %v6380, %v6379
    %v6382 = vrot.slane %v5663, 1
    %v6383 = vsel %vm4794, %v6382, %v6381
    %v6384 = vrot.slane %v5670, 7
    %v6385 = vsel %vm4776, %v6384, %v5664
    %v6386 = vrot.slane %v5676, 6
    %v6387 = vsel %vm4779, %v6386, %v6385
    %v6388 = vrot.slane %v5682, 5
    %v6389 = vsel %vm4782, %v6388, %v6387
    %v6390 = vrot.slane %v5688, 4
    %v6391 = vsel %vm4785, %v6390, %v6389
    %v6392 = vrot.slane %v5694, 3
    %v6393 = vsel %vm4788, %v6392, %v6391
    %v6394 = vrot.slane %v5700, 2
    %v6395 = vsel %vm4791, %v6394, %v6393
    %v6396 = vrot.slane %v5706, 1
    %v6397 = vsel %vm4794, %v6396, %v6395
    %v6398 = vrot.slane %v5671, 7
    %v6399 = vsel %vm4776, %v6398, %v5665
    %v6400 = vrot.slane %v5677, 6
    %v6401 = vsel %vm4779, %v6400, %v6399
    %v6402 = vrot.slane %v5683, 5
    %v6403 = vsel %vm4782, %v6402, %v6401
    %v6404 = vrot.slane %v5689, 4
    %v6405 = vsel %vm4785, %v6404, %v6403
    %v6406 = vrot.slane %v5695, 3
    %v6407 = vsel %vm4788, %v6406, %v6405
    %v6408 = vrot.slane %v5701, 2
    %v6409 = vsel %vm4791, %v6408, %v6407
    %v6410 = vrot.slane %v5707, 1
    %v6411 = vsel %vm4794, %v6410, %v6409
    %v6412 = vrot.slane %v5672, 7
    %v6413 = vsel %vm4776, %v6412, %v5666
    %v6414 = vrot.slane %v5678, 6
    %v6415 = vsel %vm4779, %v6414, %v6413
    %v6416 = vrot.slane %v5684, 5
    %v6417 = vsel %vm4782, %v6416, %v6415
    %v6418 = vrot.slane %v5690, 4
    %v6419 = vsel %vm4785, %v6418, %v6417
    %v6420 = vrot.slane %v5696, 3
    %v6421 = vsel %vm4788, %v6420, %v6419
    %v6422 = vrot.slane %v5702, 2
    %v6423 = vsel %vm4791, %v6422, %v6421
    %v6424 = vrot.slane %v5708, 1
    %v6425 = vsel %vm4794, %v6424, %v6423
    %v6426 = vrot.slane %v5673, 7
    %v6427 = vsel %vm4776, %v6426, %v5667
    %v6428 = vrot.slane %v5679, 6
    %v6429 = vsel %vm4779, %v6428, %v6427
    %v6430 = vrot.slane %v5685, 5
    %v6431 = vsel %vm4782, %v6430, %v6429
    %v6432 = vrot.slane %v5691, 4
    %v6433 = vsel %vm4785, %v6432, %v6431
    %v6434 = vrot.slane %v5697, 3
    %v6435 = vsel %vm4788, %v6434, %v6433
    %v6436 = vrot.slane %v5703, 2
    %v6437 = vsel %vm4791, %v6436, %v6435
    %v6438 = vrot.slane %v5709, 1
    %v6439 = vsel %vm4794, %v6438, %v6437
    %v6440 = vrot.slane %v5674, 7
    %v6441 = vsel %vm4776, %v6440, %v5668
    %v6442 = vrot.slane %v5680, 6
    %v6443 = vsel %vm4779, %v6442, %v6441
    %v6444 = vrot.slane %v5686, 5
    %v6445 = vsel %vm4782, %v6444, %v6443
    %v6446 = vrot.slane %v5692, 4
    %v6447 = vsel %vm4785, %v6446, %v6445
    %v6448 = vrot.slane %v5698, 3
    %v6449 = vsel %vm4788, %v6448, %v6447
    %v6450 = vrot.slane %v5704, 2
    %v6451 = vsel %vm4791, %v6450, %v6449
    %v6452 = vrot.slane %v5710, 1
    %v6453 = vsel %vm4794, %v6452, %v6451
    %v6454 = vrot.slane %v5675, 7
    %v6455 = vsel %vm4776, %v6454, %v5669
    %v6456 = vrot.slane %v5681, 6
    %v6457 = vsel %vm4779, %v6456, %v6455
    %v6458 = vrot.slane %v5687, 5
    %v6459 = vsel %vm4782, %v6458, %v6457
    %v6460 = vrot.slane %v5693, 4
    %v6461 = vsel %vm4785, %v6460, %v6459
    %v6462 = vrot.slane %v5699, 3
    %v6463 = vsel %vm4788, %v6462, %v6461
    %v6464 = vrot.slane %v5705, 2
    %v6465 = vsel %vm4791, %v6464, %v6463
    %v6466 = vrot.slane %v5711, 1
    %v6467 = vsel %vm4794, %v6466, %v6465
    %v6468 = vrot.slane %v5718, 7
    %v6469 = vsel %vm4776, %v6468, %v5712
    %v6470 = vrot.slane %v5724, 6
    %v6471 = vsel %vm4779, %v6470, %v6469
    %v6472 = vrot.slane %v5730, 5
    %v6473 = vsel %vm4782, %v6472, %v6471
    %v6474 = vrot.slane %v5736, 4
    %v6475 = vsel %vm4785, %v6474, %v6473
    %v6476 = vrot.slane %v5742, 3
    %v6477 = vsel %vm4788, %v6476, %v6475
    %v6478 = vrot.slane %v5748, 2
    %v6479 = vsel %vm4791, %v6478, %v6477
    %v6480 = vrot.slane %v5754, 1
    %v6481 = vsel %vm4794, %v6480, %v6479
    %v6482 = vrot.slane %v5719, 7
    %v6483 = vsel %vm4776, %v6482, %v5713
    %v6484 = vrot.slane %v5725, 6
    %v6485 = vsel %vm4779, %v6484, %v6483
    %v6486 = vrot.slane %v5731, 5
    %v6487 = vsel %vm4782, %v6486, %v6485
    %v6488 = vrot.slane %v5737, 4
    %v6489 = vsel %vm4785, %v6488, %v6487
    %v6490 = vrot.slane %v5743, 3
    %v6491 = vsel %vm4788, %v6490, %v6489
    %v6492 = vrot.slane %v5749, 2
    %v6493 = vsel %vm4791, %v6492, %v6491
    %v6494 = vrot.slane %v5755, 1
    %v6495 = vsel %vm4794, %v6494, %v6493
    %v6496 = vrot.slane %v5720, 7
    %v6497 = vsel %vm4776, %v6496, %v5714
    %v6498 = vrot.slane %v5726, 6
    %v6499 = vsel %vm4779, %v6498, %v6497
    %v6500 = vrot.slane %v5732, 5
    %v6501 = vsel %vm4782, %v6500, %v6499
    %v6502 = vrot.slane %v5738, 4
    %v6503 = vsel %vm4785, %v6502, %v6501
    %v6504 = vrot.slane %v5744, 3
    %v6505 = vsel %vm4788, %v6504, %v6503
    %v6506 = vrot.slane %v5750, 2
    %v6507 = vsel %vm4791, %v6506, %v6505
    %v6508 = vrot.slane %v5756, 1
    %v6509 = vsel %vm4794, %v6508, %v6507
    %v6510 = vrot.slane %v5721, 7
    %v6511 = vsel %vm4776, %v6510, %v5715
    %v6512 = vrot.slane %v5727, 6
    %v6513 = vsel %vm4779, %v6512, %v6511
    %v6514 = vrot.slane %v5733, 5
    %v6515 = vsel %vm4782, %v6514, %v6513
    %v6516 = vrot.slane %v5739, 4
    %v6517 = vsel %vm4785, %v6516, %v6515
    %v6518 = vrot.slane %v5745, 3
    %v6519 = vsel %vm4788, %v6518, %v6517
    %v6520 = vrot.slane %v5751, 2
    %v6521 = vsel %vm4791, %v6520, %v6519
    %v6522 = vrot.slane %v5757, 1
    %v6523 = vsel %vm4794, %v6522, %v6521
    %v6524 = vrot.slane %v5722, 7
    %v6525 = vsel %vm4776, %v6524, %v5716
    %v6526 = vrot.slane %v5728, 6
    %v6527 = vsel %vm4779, %v6526, %v6525
    %v6528 = vrot.slane %v5734, 5
    %v6529 = vsel %vm4782, %v6528, %v6527
    %v6530 = vrot.slane %v5740, 4
    %v6531 = vsel %vm4785, %v6530, %v6529
    %v6532 = vrot.slane %v5746, 3
    %v6533 = vsel %vm4788, %v6532, %v6531
    %v6534 = vrot.slane %v5752, 2
    %v6535 = vsel %vm4791, %v6534, %v6533
    %v6536 = vrot.slane %v5758, 1
    %v6537 = vsel %vm4794, %v6536, %v6535
    %v6538 = vrot.slane %v5723, 7
    %v6539 = vsel %vm4776, %v6538, %v5717
    %v6540 = vrot.slane %v5729, 6
    %v6541 = vsel %vm4779, %v6540, %v6539
    %v6542 = vrot.slane %v5735, 5
    %v6543 = vsel %vm4782, %v6542, %v6541
    %v6544 = vrot.slane %v5741, 4
    %v6545 = vsel %vm4785, %v6544, %v6543
    %v6546 = vrot.slane %v5747, 3
    %v6547 = vsel %vm4788, %v6546, %v6545
    %v6548 = vrot.slane %v5753, 2
    %v6549 = vsel %vm4791, %v6548, %v6547
    %v6550 = vrot.slane %v5759, 1
    %v6551 = vsel %vm4794, %v6550, %v6549
    %6588 = vst [vmem:[#allocation7] sm:$0xff] %v6061
    %6589 = vst [vmem:[#allocation7 + $0x8] sm:$0xff] %v6075
    %6590 = vst [vmem:[#allocation7 + $0x10] sm:$0xff] %v6089
    %6591 = vst [vmem:[#allocation7 + $0x18] sm:$0xff] %v6103
    %6592 = vst [vmem:[#allocation7 + $0x20] sm:$0xff] %v6117
    %6593 = vst [vmem:[#allocation7 + $0x28] sm:$0xff] %v6131
    %6594 = vst [vmem:[#allocation7 + $0x30] sm:$0xff] %v6145
    %6595 = vst [vmem:[#allocation7 + $0x38] sm:$0xff] %v6159
    %6596 = vst [vmem:[#allocation7 + $0x40] sm:$0xff] %v6173
    %6597 = vst [vmem:[#allocation7 + $0x48] sm:$0xff] %v6187
    %6598 = vst [vmem:[#allocation7 + $0x50] sm:$0xff] %v6201
    %6599 = vst [vmem:[#allocation7 + $0x58] sm:$0xff] %v6215
    %6600 = vst [vmem:[#allocation7 + $0x60] sm:$0xff] %v6229
    %6601 = vst [vmem:[#allocation7 + $0x68] sm:$0xff] %v6243
    %6602 = vst [vmem:[#allocation7 + $0x70] sm:$0xff] %v6257
    %6603 = vst [vmem:[#allocation7 + $0x78] sm:$0xff] %v6271
    %6604 = vst [vmem:[#allocation7 + $0x80] sm:$0xff] %v6285
    %6605 = vst [vmem:[#allocation7 + $0x88] sm:$0xff] %v6299
    %6606 = vst [vmem:[#allocation7 + $0x90] sm:$0xff] %v6313
    %6607 = vst [vmem:[#allocation7 + $0x98] sm:$0xff] %v6327
    %6608 = vst [vmem:[#allocation7 + $0xa0] sm:$0xff] %v6341
    %6609 = vst [vmem:[#allocation7 + $0xa8] sm:$0xff] %v6355
    %6610 = vst [vmem:[#allocation7 + $0xb0] sm:$0xff] %v6369
    %6611 = vst [vmem:[#allocation7 + $0xb8] sm:$0xff] %v6383
    %6612 = vst [vmem:[#allocation7 + $0xc0] sm:$0xff] %v6397
    %6613 = vst [vmem:[#allocation7 + $0xc8] sm:$0xff] %v6411
    %6614 = vst [vmem:[#allocation7 + $0xd0] sm:$0xff] %v6425
    %6615 = vst [vmem:[#allocation7 + $0xd8] sm:$0xff] %v6439
    %6616 = vst [vmem:[#allocation7 + $0xe0] sm:$0xff] %v6453
    %6617 = vst [vmem:[#allocation7 + $0xe8] sm:$0xff] %v6467
    %6618 = vst [vmem:[#allocation7 + $0xf0] sm:$0xff] %v6481
    %6619 = vst [vmem:[#allocation7 + $0xf8] sm:$0xff] %v6495
    %6620 = vst [vmem:[#allocation7 + $0x100] sm:$0xff] %v6509
    %6621 = vst [vmem:[#allocation7 + $0x108] sm:$0xff] %v6523
    %6622 = vst [vmem:[#allocation7 + $0x110] sm:$0xff] %v6537
    %6623 = vst [vmem:[#allocation7 + $0x118] sm:$0xff] %v6551
    // Predicated region
    $region18: #{tpu_custom_call.1} parent=1 // pred_check
      _
    $region19: #{tpu_custom_call.1} parent=1 // pred_check_branch
      %6625 = sbr.rel (0) target = $region21
    $region20: #{tpu_custom_call.1} parent=1 // pred_region
      %s6627 = ssub.s32 4608, 4608
      %6628 = vsyncadd [#allocation4], %s6627
      %s6629 = sshll.u32 [#allocation7], 4
      %s6630 = int_to_ptr.vmem [resolvable:$true] %s6629
      %6635 = dma.vmem_to_hbm [thread:$0]  %s6630, 4608, %s2, [#allocation4], 768, 768, 48
    $region21: #{tpu_custom_call.1} parent=1 // pred_fallthru
      _
    // Predicated region
    $region22: #{tpu_custom_call.1} parent=1 // pred_check
      _
    $region23: #{tpu_custom_call.1} parent=1 // pred_check_branch
      %6637 = sbr.rel (0) target = $region25
    $region24: #{tpu_custom_call.1} parent=1 // pred_region
      %6638 = dma.done [#allocation4], 4608
    $region25: #{tpu_custom_call.1} parent=1 // pred_fallthru
      _
    %6639 = vsyncpa [#allocation3], 1
    %6640 = vsyncpa [#allocation6], 1
    %6641 = vsyncpa [#allocation4], 1

</llo_original>
